<compile_context>
chip_gen: v7x
topology: tpu7x:2x2x1
jax: 0.10.0
libtpu: 0.0.40
codegen_flags: <defaults>
</compile_context>

<pallas_src>
import jax
import jax.numpy as jnp
from jax import lax
from jax.experimental import pallas as pl
from jax.experimental.pallas import tpu as pltpu


_POS_COEF = 0.1
_GN_GROUPS = 8
_GN_EPS = 1e-5


def _softmax_last(x):
    """Softmax over the last axis; the divide runs on the EUP (approx recip)."""
    m = jnp.max(x, axis=-1, keepdims=True)
    e = jnp.exp(x - m)
    return e * pl.reciprocal(jnp.sum(e, axis=-1, keepdims=True), approx=True)


def _col_renorm(x):
    """x / (1e-9 + x.sum over rows)  — torch `dim=1` of a (B, N, N) tensor."""
    return x * pl.reciprocal(1e-9 + jnp.sum(x, axis=0, keepdims=True), approx=True)


def gma3d_kernel(xc_ref, xm_ref, xyz_ref, xyzT_ref,
                 wqk_ref, wv_ref, bv_ref, wt_ref, bt_ref,
                 gnw_ref, gnb_ref, alpha_ref, prelu_ref,
                 out_ref):
    f32 = jnp.float32
    bf16 = jnp.bfloat16

    Bb, C, N = out_ref.shape
    G = _GN_GROUPS
    cpg = C // G
    inv_cnt = 1.0 / float(cpg * N)

    # Parameters: load / cast once, shared by all Bb batch elements this step.
    wqk16 = wqk_ref[...].astype(bf16)     # (C/4, C)  shared q/k conv weight
    wv16 = wv_ref[...].astype(bf16)       # (C, C)    v_conv weight
    wt16 = wt_ref[...].astype(bf16)       # (C, C)    trans_conv weight
    bv = bv_ref[...]                      # (C, 1)
    bt = bt_ref[...]                      # (C, 1)
    gnw = gnw_ref[...]                    # (C, 1)
    gnb = gnb_ref[...]                    # (C, 1)
    alpha = alpha_ref[0]                  # SMEM scalar
    a_prelu = prelu_ref[0]                # SMEM scalar

    for b in range(Bb):                   # Bb is small (<= 4): static unroll
        xc = xc_ref[b]                    # (C, N) context features
        xm = xm_ref[b]                    # (C, N) motion features

        # ---- positional mask first so dist/pos_am retire before att exists ----
        xyz_b = xyz_ref[b].astype(f32)    # (N, 3): xyz[i, k] along sublanes
        xyzT_b = xyzT_ref[b].astype(f32)  # (3, N): xyz[j, k] lane-dense
        dist = jnp.zeros((N, N), f32)
        for k in range(3):                # exact per-coordinate squared diffs
            diff = xyzT_b[k:k + 1, :] - xyz_b[:, k:k + 1]   # diff[i,j]=xyz[j,k]-xyz[i,k]
            dist = dist + diff * diff
        pos_am = _col_renorm(dist)
        mask = pos_am <= _POS_COEF                           # (N, N) bool

        # ---- shared q/k 1x1 conv (bias=False) + correlation, bf16 on MXU ----
        qk = jnp.dot(wqk16, xc.astype(bf16), preferred_element_type=f32)   # (C/4, N)
        qk16 = qk.astype(bf16)
        # contract axis 0 of both operands: no explicit transpose of qk
        corr = lax.dot_general(qk16, qk16, (((0,), (0,)), ((), ())),
                               preferred_element_type=f32)                 # (N, N)

        att = _col_renorm(_softmax_last(corr))
        local = _col_renorm(_softmax_last(jnp.where(mask, att, 0.0)))
        att = att + local                                                  # (N, N)

        # ---- Gma3D body: v_conv, bmm with attention, trans_conv ----
        xv = jnp.dot(wv16, xm.astype(bf16), preferred_element_type=f32) + bv
        gma = jnp.dot(xv.astype(bf16), att.astype(bf16),
                      preferred_element_type=f32)                          # (C, N)
        gr = jnp.dot(wt16, (xm - gma).astype(bf16),
                     preferred_element_type=f32) + bt                      # (C, N)

        # ---- GroupNorm(8, C): sublane-split reshape, biased var, eps=1e-5 ----
        grg = gr.reshape(G, cpg, N)                        # layout-free split of C
        s1 = jnp.sum(jnp.sum(grg, axis=2, keepdims=True), axis=1, keepdims=True)
        mean = s1 * inv_cnt                                # (G, 1, 1)
        d = grg - mean
        s2 = jnp.sum(jnp.sum(d * d, axis=2, keepdims=True), axis=1, keepdims=True)
        var = s2 * inv_cnt
        normed = (d * lax.rsqrt(var + _GN_EPS)).reshape(C, N)
        gn = normed * gnw + gnb                            # per-channel affine

        # ---- PReLU (single slope) + residual scale-add ----
        y = jnp.where(gn > 0, gn, a_prelu * gn)
        out_ref[b] = (alpha * y + xm).astype(out_ref.dtype)


def _pick_batch_block(B):
    # Amortize grid-step overhead when B is large, but keep >= 2 grid steps so
    # both v7x TensorCores get work; cap at 4 to bound unroll / vreg pressure.
    for cand in (4, 2):
        if B % cand == 0 and B // cand >= 2:
            return cand
    return 1


def gma3d_forward(context_features, motion_features, xyz1, params, batch_block=None):
    B, C, N = context_features.shape
    C4 = C // 4
    wqk, wv, bv, wt, bt, gnw, gnb, alpha, prelu_a = params

    Bb = batch_block if batch_block is not None else _pick_batch_block(B)
    assert B % Bb == 0
    grid = (B // Bb,)

    # Lane-dense coordinate rows (B, 3, N) so the kernel never transposes a
    # 1-lane column; the original (B, N, 3) supplies the sublane-varying side.
    xyzT = jnp.transpose(xyz1, (0, 2, 1))

    def batched(d1, d2):
        return pl.BlockSpec((Bb, d1, d2), lambda i: (i, 0, 0))

    def full(shape):
        return pl.BlockSpec(shape, lambda i: (0,) * len(shape))

    smem = pl.BlockSpec(memory_space=pltpu.MemorySpace.SMEM)

    grid_spec = pltpu.PrefetchScalarGridSpec(
        num_scalar_prefetch=0,
        grid=grid,
        in_specs=[
            batched(C, N),        # context features
            batched(C, N),        # motion features
            batched(N, 3),        # xyz   (sublane-varying coordinates)
            batched(3, N),        # xyz^T (lane-dense coordinates)
            full((C4, C)),        # shared q/k conv weight (bias=False)
            full((C, C)),         # v_conv weight
            full((C, 1)),         # v_conv bias
            full((C, C)),         # trans_conv weight
            full((C, 1)),         # trans_conv bias
            full((C, 1)),         # GroupNorm weight
            full((C, 1)),         # GroupNorm bias
            smem,                 # alpha_gma (scalar in SMEM)
            smem,                 # PReLU slope (scalar in SMEM)
        ],
        out_specs=pl.BlockSpec((Bb, C, N), lambda i: (i, 0, 0)),
    )
    return pl.pallas_call(
        gma3d_kernel,
        out_shape=jax.ShapeDtypeStruct((B, C, N), motion_features.dtype),
        grid_spec=grid_spec,
        compiler_params=pltpu.CompilerParams(
            dimension_semantics=("parallel",)),
    )(context_features, motion_features, xyz1, xyzT,
      wqk, wv, bv, wt, bt, gnw, gnb, alpha, prelu_a)


if __name__ == "__main__":
    key = jax.random.PRNGKey(0)
    ks = jax.random.split(key, 8)
    B, C, N = 4, 64, 128          # module default: 64 context/motion channels
    C4 = C // 4

    ctx = jax.random.normal(ks[0], (B, C, N), jnp.float32)
    mot = jax.random.normal(ks[1], (B, C, N), jnp.float32)
    xyz = jax.random.normal(ks[2], (B, N, 3), jnp.float32)

    # Deterministic synthetic parameters (shapes per the module's __init__).
    wqk = 0.1 * jax.random.normal(ks[3], (C4, C), jnp.float32)   # q_conv weight == k_conv weight
    wv = 0.1 * jax.random.normal(ks[4], (C, C), jnp.float32)
    bv = 0.1 * jax.random.normal(ks[5], (C, 1), jnp.float32)
    wt = 0.1 * jax.random.normal(ks[6], (C, C), jnp.float32)
    bt = 0.1 * jax.random.normal(ks[7], (C, 1), jnp.float32)
    gnw = jnp.ones((C, 1), jnp.float32)                          # GroupNorm affine defaults
    gnb = jnp.zeros((C, 1), jnp.float32)
    # alpha_gma is zero at torch init; use a nonzero value so the whole path
    # contributes to the output. PReLU default slope is 0.25.
    alpha = jnp.full((1,), 0.5, jnp.float32)
    prelu_a = jnp.full((1,), 0.25, jnp.float32)

    params = (wqk, wv, bv, wt, bt, gnw, gnb, alpha, prelu_a)
    out = gma3d_forward(ctx, mot, xyz, params)
    jax.block_until_ready(out)
    assert out.shape == (B, C, N)
    assert bool(jnp.all(jnp.isfinite(out)))
    print("KERNEL_OK")
</pallas_src>

<mosaic_0001>
module attributes {stable_mosaic.version = 11 : i64} {
  func.func @gma3d_kernel(%arg0: i32, %arg1: memref<2x64x128xf32, #tpu.memory_space<vmem>>, %arg2: memref<2x64x128xf32, #tpu.memory_space<vmem>>, %arg3: memref<2x128x3xf32, #tpu.memory_space<vmem>>, %arg4: memref<2x3x128xf32, #tpu.memory_space<vmem>>, %arg5: memref<16x64xf32, #tpu.memory_space<vmem>>, %arg6: memref<64x64xf32, #tpu.memory_space<vmem>>, %arg7: memref<64x1xf32, #tpu.memory_space<vmem>>, %arg8: memref<64x64xf32, #tpu.memory_space<vmem>>, %arg9: memref<64x1xf32, #tpu.memory_space<vmem>>, %arg10: memref<64x1xf32, #tpu.memory_space<vmem>>, %arg11: memref<64x1xf32, #tpu.memory_space<vmem>>, %arg12: memref<1xf32, #tpu.memory_space<smem>>, %arg13: memref<1xf32, #tpu.memory_space<smem>>, %arg14: memref<2x64x128xf32, #tpu.memory_space<vmem>>) attributes {dimension_semantics = [#tpu.dimension_semantics<parallel>], iteration_bounds = array<i64: 2>, scalar_prefetch = 0 : i64, scratch_operands = 0 : i64, tpu.core_type = #tpu.core_type<tc>, window_params = [{transform_indices = @transform_0, window_bounds = array<i64: 2, 64, 128>}, {transform_indices = @transform_1, window_bounds = array<i64: 2, 64, 128>}, {transform_indices = @transform_2, window_bounds = array<i64: 2, 128, 3>}, {transform_indices = @transform_3, window_bounds = array<i64: 2, 3, 128>}, {pipeline_mode = #tpu.pipeline_mode<synchronous>, transform_indices = @transform_4, window_bounds = array<i64: 16, 64>}, {pipeline_mode = #tpu.pipeline_mode<synchronous>, transform_indices = @transform_5, window_bounds = array<i64: 64, 64>}, {pipeline_mode = #tpu.pipeline_mode<synchronous>, transform_indices = @transform_6, window_bounds = array<i64: 64, 1>}, {pipeline_mode = #tpu.pipeline_mode<synchronous>, transform_indices = @transform_7, window_bounds = array<i64: 64, 64>}, {pipeline_mode = #tpu.pipeline_mode<synchronous>, transform_indices = @transform_8, window_bounds = array<i64: 64, 1>}, {pipeline_mode = #tpu.pipeline_mode<synchronous>, transform_indices = @transform_9, window_bounds = array<i64: 64, 1>}, {pipeline_mode = #tpu.pipeline_mode<synchronous>, transform_indices = @transform_10, window_bounds = array<i64: 64, 1>}, {transform_indices = @transform_11, window_bounds = array<i64: 1>}, {transform_indices = @transform_12, window_bounds = array<i64: 1>}, {transform_indices = @transform_13, window_bounds = array<i64: 2, 64, 128>}]} {
    %c0 = arith.constant 0 : index
    %c0_0 = arith.constant 0 : index
    %0 = vector.load %arg5[%c0, %c0_0] : memref<16x64xf32, #tpu.memory_space<vmem>>, vector<16x64xf32>
    %1 = arith.truncf %0 : vector<16x64xf32> to vector<16x64xbf16>
    %c0_1 = arith.constant 0 : index
    %c0_2 = arith.constant 0 : index
    %2 = vector.load %arg6[%c0_1, %c0_2] : memref<64x64xf32, #tpu.memory_space<vmem>>, vector<64x64xf32>
    %3 = arith.truncf %2 : vector<64x64xf32> to vector<64x64xbf16>
    %c0_3 = arith.constant 0 : index
    %c0_4 = arith.constant 0 : index
    %4 = vector.load %arg8[%c0_3, %c0_4] : memref<64x64xf32, #tpu.memory_space<vmem>>, vector<64x64xf32>
    %5 = arith.truncf %4 : vector<64x64xf32> to vector<64x64xbf16>
    %c0_5 = arith.constant 0 : index
    %c0_6 = arith.constant 0 : index
    %6 = vector.load %arg7[%c0_5, %c0_6] : memref<64x1xf32, #tpu.memory_space<vmem>>, vector<64x1xf32>
    %c0_7 = arith.constant 0 : index
    %c0_8 = arith.constant 0 : index
    %7 = vector.load %arg9[%c0_7, %c0_8] : memref<64x1xf32, #tpu.memory_space<vmem>>, vector<64x1xf32>
    %c0_9 = arith.constant 0 : index
    %c0_10 = arith.constant 0 : index
    %8 = vector.load %arg10[%c0_9, %c0_10] : memref<64x1xf32, #tpu.memory_space<vmem>>, vector<64x1xf32>
    %c0_11 = arith.constant 0 : index
    %c0_12 = arith.constant 0 : index
    %9 = vector.load %arg11[%c0_11, %c0_12] : memref<64x1xf32, #tpu.memory_space<vmem>>, vector<64x1xf32>
    %c0_13 = arith.constant 0 : index
    %10 = memref.load %arg12[%c0_13] : memref<1xf32, #tpu.memory_space<smem>>
    %c0_14 = arith.constant 0 : index
    %11 = memref.load %arg13[%c0_14] : memref<1xf32, #tpu.memory_space<smem>>
    %c0_15 = arith.constant 0 : index
    %c0_16 = arith.constant 0 : index
    %c0_17 = arith.constant 0 : index
    %12 = vector.load %arg1[%c0_15, %c0_16, %c0_17] : memref<2x64x128xf32, #tpu.memory_space<vmem>>, vector<1x64x128xf32>
    %13 = vector.shape_cast %12 : vector<1x64x128xf32> to vector<64x128xf32>
    %c0_18 = arith.constant 0 : index
    %c0_19 = arith.constant 0 : index
    %c0_20 = arith.constant 0 : index
    %14 = vector.load %arg2[%c0_18, %c0_19, %c0_20] : memref<2x64x128xf32, #tpu.memory_space<vmem>>, vector<1x64x128xf32>
    %15 = vector.shape_cast %14 : vector<1x64x128xf32> to vector<64x128xf32>
    %c0_21 = arith.constant 0 : index
    %c0_22 = arith.constant 0 : index
    %c0_23 = arith.constant 0 : index
    %16 = vector.load %arg3[%c0_21, %c0_22, %c0_23] : memref<2x128x3xf32, #tpu.memory_space<vmem>>, vector<1x128x3xf32>
    %17 = vector.shape_cast %16 : vector<1x128x3xf32> to vector<128x3xf32>
    %c0_24 = arith.constant 0 : index
    %c0_25 = arith.constant 0 : index
    %c0_26 = arith.constant 0 : index
    %18 = vector.load %arg4[%c0_24, %c0_25, %c0_26] : memref<2x3x128xf32, #tpu.memory_space<vmem>>, vector<1x3x128xf32>
    %19 = vector.shape_cast %18 : vector<1x3x128xf32> to vector<3x128xf32>
    %cst = arith.constant 0.000000e+00 : f32
    %20 = vector.broadcast %cst : f32 to vector<128x128xf32>
    %21 = vector.extract_strided_slice %19 {offsets = [0, 0], sizes = [1, 128], strides = [1, 1]} : vector<3x128xf32> to vector<1x128xf32>
    %22 = vector.extract_strided_slice %17 {offsets = [0, 0], sizes = [128, 1], strides = [1, 1]} : vector<128x3xf32> to vector<128x1xf32>
    %23 = vector.broadcast %21 : vector<1x128xf32> to vector<128x128xf32>
    %24 = vector.broadcast %22 : vector<128x1xf32> to vector<128x128xf32>
    %25 = arith.subf %23, %24 : vector<128x128xf32>
    %26 = arith.mulf %25, %25 : vector<128x128xf32>
    %27 = arith.addf %20, %26 : vector<128x128xf32>
    %28 = vector.extract_strided_slice %19 {offsets = [1, 0], sizes = [1, 128], strides = [1, 1]} : vector<3x128xf32> to vector<1x128xf32>
    %29 = vector.extract_strided_slice %17 {offsets = [0, 1], sizes = [128, 1], strides = [1, 1]} : vector<128x3xf32> to vector<128x1xf32>
    %30 = vector.broadcast %28 : vector<1x128xf32> to vector<128x128xf32>
    %31 = vector.broadcast %29 : vector<128x1xf32> to vector<128x128xf32>
    %32 = arith.subf %30, %31 : vector<128x128xf32>
    %33 = arith.mulf %32, %32 : vector<128x128xf32>
    %34 = arith.addf %27, %33 : vector<128x128xf32>
    %35 = vector.extract_strided_slice %19 {offsets = [2, 0], sizes = [1, 128], strides = [1, 1]} : vector<3x128xf32> to vector<1x128xf32>
    %36 = vector.extract_strided_slice %17 {offsets = [0, 2], sizes = [128, 1], strides = [1, 1]} : vector<128x3xf32> to vector<128x1xf32>
    %37 = vector.broadcast %35 : vector<1x128xf32> to vector<128x128xf32>
    %38 = vector.broadcast %36 : vector<128x1xf32> to vector<128x128xf32>
    %39 = arith.subf %37, %38 : vector<128x128xf32>
    %40 = arith.mulf %39, %39 : vector<128x128xf32>
    %41 = arith.addf %34, %40 : vector<128x128xf32>
    %cst_27 = arith.constant dense<0.000000e+00> : vector<128xf32>
    %42 = vector.multi_reduction <add>, %41, %cst_27 [0] : vector<128x128xf32> to vector<128xf32>
    %43 = vector.shape_cast %42 : vector<128xf32> to vector<1x128xf32>
    %cst_28 = arith.constant 9.99999971E-10 : f32
    %44 = vector.broadcast %cst_28 : f32 to vector<1x128xf32>
    %45 = arith.addf %44, %43 : vector<1x128xf32>
    %46 = tpu.reciprocal %45 {approx = true} : vector<1x128xf32> -> vector<1x128xf32>
    %47 = vector.broadcast %46 : vector<1x128xf32> to vector<128x128xf32>
    %48 = arith.mulf %41, %47 : vector<128x128xf32>
    %cst_29 = arith.constant 1.000000e-01 : f32
    %49 = vector.broadcast %cst_29 : f32 to vector<128x128xf32>
    %50 = arith.cmpf ole, %48, %49 : vector<128x128xf32>
    %51 = arith.truncf %13 : vector<64x128xf32> to vector<64x128xbf16>
    %cst_30 = arith.constant dense<0.000000e+00> : vector<16x128xf32>
    %52 = tpu.matmul %1, %51, %cst_30 {dimension_numbers = #tpu.dot_dimension_numbers<[1], [0], [0], [1], [0, 0, 1, 1], [], []>} : vector<16x64xbf16>, vector<64x128xbf16>, vector<16x128xf32> -> vector<16x128xf32>
    %53 = arith.truncf %52 : vector<16x128xf32> to vector<16x128xbf16>
    %cst_31 = arith.constant dense<0.000000e+00> : vector<128x128xf32>
    %54 = tpu.matmul %53, %53, %cst_31 {dimension_numbers = #tpu.dot_dimension_numbers<[0], [0], [1], [1], [0, 1, 1, 1], [], []>} : vector<16x128xbf16>, vector<16x128xbf16>, vector<128x128xf32> -> vector<128x128xf32>
    %cst_32 = arith.constant dense<0xFF800000> : vector<128xf32>
    %55 = vector.multi_reduction <maximumf>, %54, %cst_32 [1] : vector<128x128xf32> to vector<128xf32>
    %56 = vector.shape_cast %55 : vector<128xf32> to vector<128x1xf32>
    %57 = vector.broadcast %56 : vector<128x1xf32> to vector<128x128xf32>
    %58 = arith.subf %54, %57 : vector<128x128xf32>
    %59 = math.exp %58 : vector<128x128xf32>
    %cst_33 = arith.constant dense<0.000000e+00> : vector<128xf32>
    %60 = vector.multi_reduction <add>, %59, %cst_33 [1] : vector<128x128xf32> to vector<128xf32>
    %61 = vector.shape_cast %60 : vector<128xf32> to vector<128x1xf32>
    %62 = tpu.reciprocal %61 {approx = true} : vector<128x1xf32> -> vector<128x1xf32>
    %63 = vector.broadcast %62 : vector<128x1xf32> to vector<128x128xf32>
    %64 = arith.mulf %59, %63 : vector<128x128xf32>
    %cst_34 = arith.constant dense<0.000000e+00> : vector<128xf32>
    %65 = vector.multi_reduction <add>, %64, %cst_34 [0] : vector<128x128xf32> to vector<128xf32>
    %66 = vector.shape_cast %65 : vector<128xf32> to vector<1x128xf32>
    %cst_35 = arith.constant 9.99999971E-10 : f32
    %67 = vector.broadcast %cst_35 : f32 to vector<1x128xf32>
    %68 = arith.addf %67, %66 : vector<1x128xf32>
    %69 = tpu.reciprocal %68 {approx = true} : vector<1x128xf32> -> vector<1x128xf32>
    %70 = vector.broadcast %69 : vector<1x128xf32> to vector<128x128xf32>
    %71 = arith.mulf %64, %70 : vector<128x128xf32>
    %cst_36 = arith.constant 0.000000e+00 : f32
    %72 = vector.broadcast %cst_36 : f32 to vector<128x128xf32>
    %73 = arith.select %50, %71, %72 : vector<128x128xi1>, vector<128x128xf32>
    %cst_37 = arith.constant dense<0xFF800000> : vector<128xf32>
    %74 = vector.multi_reduction <maximumf>, %73, %cst_37 [1] : vector<128x128xf32> to vector<128xf32>
    %75 = vector.shape_cast %74 : vector<128xf32> to vector<128x1xf32>
    %76 = vector.broadcast %75 : vector<128x1xf32> to vector<128x128xf32>
    %77 = arith.subf %73, %76 : vector<128x128xf32>
    %78 = math.exp %77 : vector<128x128xf32>
    %cst_38 = arith.constant dense<0.000000e+00> : vector<128xf32>
    %79 = vector.multi_reduction <add>, %78, %cst_38 [1] : vector<128x128xf32> to vector<128xf32>
    %80 = vector.shape_cast %79 : vector<128xf32> to vector<128x1xf32>
    %81 = tpu.reciprocal %80 {approx = true} : vector<128x1xf32> -> vector<128x1xf32>
    %82 = vector.broadcast %81 : vector<128x1xf32> to vector<128x128xf32>
    %83 = arith.mulf %78, %82 : vector<128x128xf32>
    %cst_39 = arith.constant dense<0.000000e+00> : vector<128xf32>
    %84 = vector.multi_reduction <add>, %83, %cst_39 [0] : vector<128x128xf32> to vector<128xf32>
    %85 = vector.shape_cast %84 : vector<128xf32> to vector<1x128xf32>
    %cst_40 = arith.constant 9.99999971E-10 : f32
    %86 = vector.broadcast %cst_40 : f32 to vector<1x128xf32>
    %87 = arith.addf %86, %85 : vector<1x128xf32>
    %88 = tpu.reciprocal %87 {approx = true} : vector<1x128xf32> -> vector<1x128xf32>
    %89 = vector.broadcast %88 : vector<1x128xf32> to vector<128x128xf32>
    %90 = arith.mulf %83, %89 : vector<128x128xf32>
    %91 = arith.addf %71, %90 : vector<128x128xf32>
    %92 = arith.truncf %15 : vector<64x128xf32> to vector<64x128xbf16>
    %cst_41 = arith.constant dense<0.000000e+00> : vector<64x128xf32>
    %93 = tpu.matmul %3, %92, %cst_41 {dimension_numbers = #tpu.dot_dimension_numbers<[1], [0], [0], [1], [0, 0, 1, 1], [], []>} : vector<64x64xbf16>, vector<64x128xbf16>, vector<64x128xf32> -> vector<64x128xf32>
    %94 = vector.broadcast %6 : vector<64x1xf32> to vector<64x128xf32>
    %95 = arith.addf %93, %94 : vector<64x128xf32>
    %96 = arith.truncf %95 : vector<64x128xf32> to vector<64x128xbf16>
    %97 = arith.truncf %91 : vector<128x128xf32> to vector<128x128xbf16>
    %cst_42 = arith.constant dense<0.000000e+00> : vector<64x128xf32>
    %98 = tpu.matmul %96, %97, %cst_42 {dimension_numbers = #tpu.dot_dimension_numbers<[1], [0], [0], [1], [0, 0, 1, 1], [], []>} : vector<64x128xbf16>, vector<128x128xbf16>, vector<64x128xf32> -> vector<64x128xf32>
    %99 = arith.subf %15, %98 : vector<64x128xf32>
    %100 = arith.truncf %99 : vector<64x128xf32> to vector<64x128xbf16>
    %cst_43 = arith.constant dense<0.000000e+00> : vector<64x128xf32>
    %101 = tpu.matmul %5, %100, %cst_43 {dimension_numbers = #tpu.dot_dimension_numbers<[1], [0], [0], [1], [0, 0, 1, 1], [], []>} : vector<64x64xbf16>, vector<64x128xbf16>, vector<64x128xf32> -> vector<64x128xf32>
    %102 = vector.broadcast %7 : vector<64x1xf32> to vector<64x128xf32>
    %103 = arith.addf %101, %102 : vector<64x128xf32>
    %104 = vector.shape_cast %103 : vector<64x128xf32> to vector<8x8x128xf32>
    %cst_44 = arith.constant dense<0.000000e+00> : vector<8x8xf32>
    %105 = vector.multi_reduction <add>, %104, %cst_44 [2] : vector<8x8x128xf32> to vector<8x8xf32>
    %106 = vector.shape_cast %105 : vector<8x8xf32> to vector<8x8x1xf32>
    %cst_45 = arith.constant dense<0.000000e+00> : vector<8x1xf32>
    %107 = vector.multi_reduction <add>, %106, %cst_45 [1] : vector<8x8x1xf32> to vector<8x1xf32>
    %108 = vector.shape_cast %107 : vector<8x1xf32> to vector<8x1x1xf32>
    %cst_46 = arith.constant 9.765625E-4 : f32
    %109 = vector.broadcast %cst_46 : f32 to vector<8x1x1xf32>
    %110 = arith.mulf %108, %109 : vector<8x1x1xf32>
    %111 = vector.broadcast %110 : vector<8x1x1xf32> to vector<8x8x128xf32>
    %112 = arith.subf %104, %111 : vector<8x8x128xf32>
    %113 = arith.mulf %112, %112 : vector<8x8x128xf32>
    %cst_47 = arith.constant dense<0.000000e+00> : vector<8x8xf32>
    %114 = vector.multi_reduction <add>, %113, %cst_47 [2] : vector<8x8x128xf32> to vector<8x8xf32>
    %115 = vector.shape_cast %114 : vector<8x8xf32> to vector<8x8x1xf32>
    %cst_48 = arith.constant dense<0.000000e+00> : vector<8x1xf32>
    %116 = vector.multi_reduction <add>, %115, %cst_48 [1] : vector<8x8x1xf32> to vector<8x1xf32>
    %117 = vector.shape_cast %116 : vector<8x1xf32> to vector<8x1x1xf32>
    %cst_49 = arith.constant 9.765625E-4 : f32
    %118 = vector.broadcast %cst_49 : f32 to vector<8x1x1xf32>
    %119 = arith.mulf %117, %118 : vector<8x1x1xf32>
    %cst_50 = arith.constant 9.99999974E-6 : f32
    %120 = vector.broadcast %cst_50 : f32 to vector<8x1x1xf32>
    %121 = arith.addf %119, %120 : vector<8x1x1xf32>
    %122 = math.rsqrt %121 : vector<8x1x1xf32>
    %123 = vector.broadcast %122 : vector<8x1x1xf32> to vector<8x8x128xf32>
    %124 = arith.mulf %112, %123 : vector<8x8x128xf32>
    %125 = vector.shape_cast %124 : vector<8x8x128xf32> to vector<64x128xf32>
    %126 = vector.broadcast %8 : vector<64x1xf32> to vector<64x128xf32>
    %127 = arith.mulf %125, %126 : vector<64x128xf32>
    %128 = vector.broadcast %9 : vector<64x1xf32> to vector<64x128xf32>
    %129 = arith.addf %127, %128 : vector<64x128xf32>
    %cst_51 = arith.constant 0.000000e+00 : f32
    %130 = vector.broadcast %cst_51 : f32 to vector<64x128xf32>
    %131 = arith.cmpf ogt, %129, %130 : vector<64x128xf32>
    %132 = vector.broadcast %11 : f32 to vector<64x128xf32>
    %133 = arith.mulf %132, %129 : vector<64x128xf32>
    %134 = arith.select %131, %129, %133 : vector<64x128xi1>, vector<64x128xf32>
    %135 = vector.broadcast %10 : f32 to vector<64x128xf32>
    %136 = arith.mulf %135, %134 : vector<64x128xf32>
    %137 = arith.addf %136, %15 : vector<64x128xf32>
    %c0_52 = arith.constant 0 : index
    %c0_53 = arith.constant 0 : index
    %c0_54 = arith.constant 0 : index
    %138 = vector.load %arg14[%c0_52, %c0_53, %c0_54] : memref<2x64x128xf32, #tpu.memory_space<vmem>>, vector<1x64x128xf32>
    %139 = vector.shape_cast %138 : vector<1x64x128xf32> to vector<64x128xf32>
    %140 = vector.shape_cast %137 : vector<64x128xf32> to vector<1x64x128xf32>
    tpu.vector_store %arg14[%c0_52, %c0_53, %c0_54], %140 {strides = array<i32>} : memref<2x64x128xf32, #tpu.memory_space<vmem>>, vector<1x64x128xf32>,
    %c1 = arith.constant 1 : index
    %c0_55 = arith.constant 0 : index
    %c0_56 = arith.constant 0 : index
    %141 = vector.load %arg1[%c1, %c0_55, %c0_56] : memref<2x64x128xf32, #tpu.memory_space<vmem>>, vector<1x64x128xf32>
    %142 = vector.shape_cast %141 : vector<1x64x128xf32> to vector<64x128xf32>
    %c1_57 = arith.constant 1 : index
    %c0_58 = arith.constant 0 : index
    %c0_59 = arith.constant 0 : index
    %143 = vector.load %arg2[%c1_57, %c0_58, %c0_59] : memref<2x64x128xf32, #tpu.memory_space<vmem>>, vector<1x64x128xf32>
    %144 = vector.shape_cast %143 : vector<1x64x128xf32> to vector<64x128xf32>
    %c1_60 = arith.constant 1 : index
    %c0_61 = arith.constant 0 : index
    %c0_62 = arith.constant 0 : index
    %145 = vector.load %arg3[%c1_60, %c0_61, %c0_62] : memref<2x128x3xf32, #tpu.memory_space<vmem>>, vector<1x128x3xf32>
    %146 = vector.shape_cast %145 : vector<1x128x3xf32> to vector<128x3xf32>
    %c1_63 = arith.constant 1 : index
    %c0_64 = arith.constant 0 : index
    %c0_65 = arith.constant 0 : index
    %147 = vector.load %arg4[%c1_63, %c0_64, %c0_65] : memref<2x3x128xf32, #tpu.memory_space<vmem>>, vector<1x3x128xf32>
    %148 = vector.shape_cast %147 : vector<1x3x128xf32> to vector<3x128xf32>
    %cst_66 = arith.constant 0.000000e+00 : f32
    %149 = vector.broadcast %cst_66 : f32 to vector<128x128xf32>
    %150 = vector.extract_strided_slice %148 {offsets = [0, 0], sizes = [1, 128], strides = [1, 1]} : vector<3x128xf32> to vector<1x128xf32>
    %151 = vector.extract_strided_slice %146 {offsets = [0, 0], sizes = [128, 1], strides = [1, 1]} : vector<128x3xf32> to vector<128x1xf32>
    %152 = vector.broadcast %150 : vector<1x128xf32> to vector<128x128xf32>
    %153 = vector.broadcast %151 : vector<128x1xf32> to vector<128x128xf32>
    %154 = arith.subf %152, %153 : vector<128x128xf32>
    %155 = arith.mulf %154, %154 : vector<128x128xf32>
    %156 = arith.addf %149, %155 : vector<128x128xf32>
    %157 = vector.extract_strided_slice %148 {offsets = [1, 0], sizes = [1, 128], strides = [1, 1]} : vector<3x128xf32> to vector<1x128xf32>
    %158 = vector.extract_strided_slice %146 {offsets = [0, 1], sizes = [128, 1], strides = [1, 1]} : vector<128x3xf32> to vector<128x1xf32>
    %159 = vector.broadcast %157 : vector<1x128xf32> to vector<128x128xf32>
    %160 = vector.broadcast %158 : vector<128x1xf32> to vector<128x128xf32>
    %161 = arith.subf %159, %160 : vector<128x128xf32>
    %162 = arith.mulf %161, %161 : vector<128x128xf32>
    %163 = arith.addf %156, %162 : vector<128x128xf32>
    %164 = vector.extract_strided_slice %148 {offsets = [2, 0], sizes = [1, 128], strides = [1, 1]} : vector<3x128xf32> to vector<1x128xf32>
    %165 = vector.extract_strided_slice %146 {offsets = [0, 2], sizes = [128, 1], strides = [1, 1]} : vector<128x3xf32> to vector<128x1xf32>
    %166 = vector.broadcast %164 : vector<1x128xf32> to vector<128x128xf32>
    %167 = vector.broadcast %165 : vector<128x1xf32> to vector<128x128xf32>
    %168 = arith.subf %166, %167 : vector<128x128xf32>
    %169 = arith.mulf %168, %168 : vector<128x128xf32>
    %170 = arith.addf %163, %169 : vector<128x128xf32>
    %cst_67 = arith.constant dense<0.000000e+00> : vector<128xf32>
    %171 = vector.multi_reduction <add>, %170, %cst_67 [0] : vector<128x128xf32> to vector<128xf32>
    %172 = vector.shape_cast %171 : vector<128xf32> to vector<1x128xf32>
    %cst_68 = arith.constant 9.99999971E-10 : f32
    %173 = vector.broadcast %cst_68 : f32 to vector<1x128xf32>
    %174 = arith.addf %173, %172 : vector<1x128xf32>
    %175 = tpu.reciprocal %174 {approx = true} : vector<1x128xf32> -> vector<1x128xf32>
    %176 = vector.broadcast %175 : vector<1x128xf32> to vector<128x128xf32>
    %177 = arith.mulf %170, %176 : vector<128x128xf32>
    %cst_69 = arith.constant 1.000000e-01 : f32
    %178 = vector.broadcast %cst_69 : f32 to vector<128x128xf32>
    %179 = arith.cmpf ole, %177, %178 : vector<128x128xf32>
    %180 = arith.truncf %142 : vector<64x128xf32> to vector<64x128xbf16>
    %cst_70 = arith.constant dense<0.000000e+00> : vector<16x128xf32>
    %181 = tpu.matmul %1, %180, %cst_70 {dimension_numbers = #tpu.dot_dimension_numbers<[1], [0], [0], [1], [0, 0, 1, 1], [], []>} : vector<16x64xbf16>, vector<64x128xbf16>, vector<16x128xf32> -> vector<16x128xf32>
    %182 = arith.truncf %181 : vector<16x128xf32> to vector<16x128xbf16>
    %cst_71 = arith.constant dense<0.000000e+00> : vector<128x128xf32>
    %183 = tpu.matmul %182, %182, %cst_71 {dimension_numbers = #tpu.dot_dimension_numbers<[0], [0], [1], [1], [0, 1, 1, 1], [], []>} : vector<16x128xbf16>, vector<16x128xbf16>, vector<128x128xf32> -> vector<128x128xf32>
    %cst_72 = arith.constant dense<0xFF800000> : vector<128xf32>
    %184 = vector.multi_reduction <maximumf>, %183, %cst_72 [1] : vector<128x128xf32> to vector<128xf32>
    %185 = vector.shape_cast %184 : vector<128xf32> to vector<128x1xf32>
    %186 = vector.broadcast %185 : vector<128x1xf32> to vector<128x128xf32>
    %187 = arith.subf %183, %186 : vector<128x128xf32>
    %188 = math.exp %187 : vector<128x128xf32>
    %cst_73 = arith.constant dense<0.000000e+00> : vector<128xf32>
    %189 = vector.multi_reduction <add>, %188, %cst_73 [1] : vector<128x128xf32> to vector<128xf32>
    %190 = vector.shape_cast %189 : vector<128xf32> to vector<128x1xf32>
    %191 = tpu.reciprocal %190 {approx = true} : vector<128x1xf32> -> vector<128x1xf32>
    %192 = vector.broadcast %191 : vector<128x1xf32> to vector<128x128xf32>
    %193 = arith.mulf %188, %192 : vector<128x128xf32>
    %cst_74 = arith.constant dense<0.000000e+00> : vector<128xf32>
    %194 = vector.multi_reduction <add>, %193, %cst_74 [0] : vector<128x128xf32> to vector<128xf32>
    %195 = vector.shape_cast %194 : vector<128xf32> to vector<1x128xf32>
    %cst_75 = arith.constant 9.99999971E-10 : f32
    %196 = vector.broadcast %cst_75 : f32 to vector<1x128xf32>
    %197 = arith.addf %196, %195 : vector<1x128xf32>
    %198 = tpu.reciprocal %197 {approx = true} : vector<1x128xf32> -> vector<1x128xf32>
    %199 = vector.broadcast %198 : vector<1x128xf32> to vector<128x128xf32>
    %200 = arith.mulf %193, %199 : vector<128x128xf32>
    %cst_76 = arith.constant 0.000000e+00 : f32
    %201 = vector.broadcast %cst_76 : f32 to vector<128x128xf32>
    %202 = arith.select %179, %200, %201 : vector<128x128xi1>, vector<128x128xf32>
    %cst_77 = arith.constant dense<0xFF800000> : vector<128xf32>
    %203 = vector.multi_reduction <maximumf>, %202, %cst_77 [1] : vector<128x128xf32> to vector<128xf32>
    %204 = vector.shape_cast %203 : vector<128xf32> to vector<128x1xf32>
    %205 = vector.broadcast %204 : vector<128x1xf32> to vector<128x128xf32>
    %206 = arith.subf %202, %205 : vector<128x128xf32>
    %207 = math.exp %206 : vector<128x128xf32>
    %cst_78 = arith.constant dense<0.000000e+00> : vector<128xf32>
    %208 = vector.multi_reduction <add>, %207, %cst_78 [1] : vector<128x128xf32> to vector<128xf32>
    %209 = vector.shape_cast %208 : vector<128xf32> to vector<128x1xf32>
    %210 = tpu.reciprocal %209 {approx = true} : vector<128x1xf32> -> vector<128x1xf32>
    %211 = vector.broadcast %210 : vector<128x1xf32> to vector<128x128xf32>
    %212 = arith.mulf %207, %211 : vector<128x128xf32>
    %cst_79 = arith.constant dense<0.000000e+00> : vector<128xf32>
    %213 = vector.multi_reduction <add>, %212, %cst_79 [0] : vector<128x128xf32> to vector<128xf32>
    %214 = vector.shape_cast %213 : vector<128xf32> to vector<1x128xf32>
    %cst_80 = arith.constant 9.99999971E-10 : f32
    %215 = vector.broadcast %cst_80 : f32 to vector<1x128xf32>
    %216 = arith.addf %215, %214 : vector<1x128xf32>
    %217 = tpu.reciprocal %216 {approx = true} : vector<1x128xf32> -> vector<1x128xf32>
    %218 = vector.broadcast %217 : vector<1x128xf32> to vector<128x128xf32>
    %219 = arith.mulf %212, %218 : vector<128x128xf32>
    %220 = arith.addf %200, %219 : vector<128x128xf32>
    %221 = arith.truncf %144 : vector<64x128xf32> to vector<64x128xbf16>
    %cst_81 = arith.constant dense<0.000000e+00> : vector<64x128xf32>
    %222 = tpu.matmul %3, %221, %cst_81 {dimension_numbers = #tpu.dot_dimension_numbers<[1], [0], [0], [1], [0, 0, 1, 1], [], []>} : vector<64x64xbf16>, vector<64x128xbf16>, vector<64x128xf32> -> vector<64x128xf32>
    %223 = vector.broadcast %6 : vector<64x1xf32> to vector<64x128xf32>
    %224 = arith.addf %222, %223 : vector<64x128xf32>
    %225 = arith.truncf %224 : vector<64x128xf32> to vector<64x128xbf16>
    %226 = arith.truncf %220 : vector<128x128xf32> to vector<128x128xbf16>
    %cst_82 = arith.constant dense<0.000000e+00> : vector<64x128xf32>
    %227 = tpu.matmul %225, %226, %cst_82 {dimension_numbers = #tpu.dot_dimension_numbers<[1], [0], [0], [1], [0, 0, 1, 1], [], []>} : vector<64x128xbf16>, vector<128x128xbf16>, vector<64x128xf32> -> vector<64x128xf32>
    %228 = arith.subf %144, %227 : vector<64x128xf32>
    %229 = arith.truncf %228 : vector<64x128xf32> to vector<64x128xbf16>
    %cst_83 = arith.constant dense<0.000000e+00> : vector<64x128xf32>
    %230 = tpu.matmul %5, %229, %cst_83 {dimension_numbers = #tpu.dot_dimension_numbers<[1], [0], [0], [1], [0, 0, 1, 1], [], []>} : vector<64x64xbf16>, vector<64x128xbf16>, vector<64x128xf32> -> vector<64x128xf32>
    %231 = vector.broadcast %7 : vector<64x1xf32> to vector<64x128xf32>
    %232 = arith.addf %230, %231 : vector<64x128xf32>
    %233 = vector.shape_cast %232 : vector<64x128xf32> to vector<8x8x128xf32>
    %cst_84 = arith.constant dense<0.000000e+00> : vector<8x8xf32>
    %234 = vector.multi_reduction <add>, %233, %cst_84 [2] : vector<8x8x128xf32> to vector<8x8xf32>
    %235 = vector.shape_cast %234 : vector<8x8xf32> to vector<8x8x1xf32>
    %cst_85 = arith.constant dense<0.000000e+00> : vector<8x1xf32>
    %236 = vector.multi_reduction <add>, %235, %cst_85 [1] : vector<8x8x1xf32> to vector<8x1xf32>
    %237 = vector.shape_cast %236 : vector<8x1xf32> to vector<8x1x1xf32>
    %cst_86 = arith.constant 9.765625E-4 : f32
    %238 = vector.broadcast %cst_86 : f32 to vector<8x1x1xf32>
    %239 = arith.mulf %237, %238 : vector<8x1x1xf32>
    %240 = vector.broadcast %239 : vector<8x1x1xf32> to vector<8x8x128xf32>
    %241 = arith.subf %233, %240 : vector<8x8x128xf32>
    %242 = arith.mulf %241, %241 : vector<8x8x128xf32>
    %cst_87 = arith.constant dense<0.000000e+00> : vector<8x8xf32>
    %243 = vector.multi_reduction <add>, %242, %cst_87 [2] : vector<8x8x128xf32> to vector<8x8xf32>
    %244 = vector.shape_cast %243 : vector<8x8xf32> to vector<8x8x1xf32>
    %cst_88 = arith.constant dense<0.000000e+00> : vector<8x1xf32>
    %245 = vector.multi_reduction <add>, %244, %cst_88 [1] : vector<8x8x1xf32> to vector<8x1xf32>
    %246 = vector.shape_cast %245 : vector<8x1xf32> to vector<8x1x1xf32>
    %cst_89 = arith.constant 9.765625E-4 : f32
    %247 = vector.broadcast %cst_89 : f32 to vector<8x1x1xf32>
    %248 = arith.mulf %246, %247 : vector<8x1x1xf32>
    %cst_90 = arith.constant 9.99999974E-6 : f32
    %249 = vector.broadcast %cst_90 : f32 to vector<8x1x1xf32>
    %250 = arith.addf %248, %249 : vector<8x1x1xf32>
    %251 = math.rsqrt %250 : vector<8x1x1xf32>
    %252 = vector.broadcast %251 : vector<8x1x1xf32> to vector<8x8x128xf32>
    %253 = arith.mulf %241, %252 : vector<8x8x128xf32>
    %254 = vector.shape_cast %253 : vector<8x8x128xf32> to vector<64x128xf32>
    %255 = vector.broadcast %8 : vector<64x1xf32> to vector<64x128xf32>
    %256 = arith.mulf %254, %255 : vector<64x128xf32>
    %257 = vector.broadcast %9 : vector<64x1xf32> to vector<64x128xf32>
    %258 = arith.addf %256, %257 : vector<64x128xf32>
    %cst_91 = arith.constant 0.000000e+00 : f32
    %259 = vector.broadcast %cst_91 : f32 to vector<64x128xf32>
    %260 = arith.cmpf ogt, %258, %259 : vector<64x128xf32>
    %261 = vector.broadcast %11 : f32 to vector<64x128xf32>
    %262 = arith.mulf %261, %258 : vector<64x128xf32>
    %263 = arith.select %260, %258, %262 : vector<64x128xi1>, vector<64x128xf32>
    %264 = vector.broadcast %10 : f32 to vector<64x128xf32>
    %265 = arith.mulf %264, %263 : vector<64x128xf32>
    %266 = arith.addf %265, %144 : vector<64x128xf32>
    %c1_92 = arith.constant 1 : index
    %c0_93 = arith.constant 0 : index
    %c0_94 = arith.constant 0 : index
    %267 = vector.load %arg14[%c1_92, %c0_93, %c0_94] : memref<2x64x128xf32, #tpu.memory_space<vmem>>, vector<1x64x128xf32>
    %268 = vector.shape_cast %267 : vector<1x64x128xf32> to vector<64x128xf32>
    %269 = vector.shape_cast %266 : vector<64x128xf32> to vector<1x64x128xf32>
    tpu.vector_store %arg14[%c1_92, %c0_93, %c0_94], %269 {strides = array<i32>} : memref<2x64x128xf32, #tpu.memory_space<vmem>>, vector<1x64x128xf32>,
    return
  }
  func.func @transform_0(%arg0: i32) -> (i32, i32, i32) {
    %c0_i32 = arith.constant 0 : i32
    %c0_i32_0 = arith.constant 0 : i32
    %c0_i32_1 = arith.constant 0 : i32
    return %arg0, %c0_i32, %c0_i32_0 : i32, i32, i32
  }
  func.func @transform_1(%arg0: i32) -> (i32, i32, i32) {
    %c0_i32 = arith.constant 0 : i32
    %c0_i32_0 = arith.constant 0 : i32
    %c0_i32_1 = arith.constant 0 : i32
    return %arg0, %c0_i32, %c0_i32_0 : i32, i32, i32
  }
  func.func @transform_2(%arg0: i32) -> (i32, i32, i32) {
    %c0_i32 = arith.constant 0 : i32
    %c0_i32_0 = arith.constant 0 : i32
    %c0_i32_1 = arith.constant 0 : i32
    return %arg0, %c0_i32, %c0_i32_0 : i32, i32, i32
  }
  func.func @transform_3(%arg0: i32) -> (i32, i32, i32) {
    %c0_i32 = arith.constant 0 : i32
    %c0_i32_0 = arith.constant 0 : i32
    %c0_i32_1 = arith.constant 0 : i32
    return %arg0, %c0_i32, %c0_i32_0 : i32, i32, i32
  }
  func.func @transform_4(%arg0: i32) -> (i32, i32) {
    %c0_i32 = arith.constant 0 : i32
    %c0_i32_0 = arith.constant 0 : i32
    %c0_i32_1 = arith.constant 0 : i32
    return %c0_i32, %c0_i32_0 : i32, i32
  }
  func.func @transform_5(%arg0: i32) -> (i32, i32) {
    %c0_i32 = arith.constant 0 : i32
    %c0_i32_0 = arith.constant 0 : i32
    %c0_i32_1 = arith.constant 0 : i32
    return %c0_i32, %c0_i32_0 : i32, i32
  }
  func.func @transform_6(%arg0: i32) -> (i32, i32) {
    %c0_i32 = arith.constant 0 : i32
    %c0_i32_0 = arith.constant 0 : i32
    %c0_i32_1 = arith.constant 0 : i32
    return %c0_i32, %c0_i32_0 : i32, i32
  }
  func.func @transform_7(%arg0: i32) -> (i32, i32) {
    %c0_i32 = arith.constant 0 : i32
    %c0_i32_0 = arith.constant 0 : i32
    %c0_i32_1 = arith.constant 0 : i32
    return %c0_i32, %c0_i32_0 : i32, i32
  }
  func.func @transform_8(%arg0: i32) -> (i32, i32) {
    %c0_i32 = arith.constant 0 : i32
    %c0_i32_0 = arith.constant 0 : i32
    %c0_i32_1 = arith.constant 0 : i32
    return %c0_i32, %c0_i32_0 : i32, i32
  }
  func.func @transform_9(%arg0: i32) -> (i32, i32) {
    %c0_i32 = arith.constant 0 : i32
    %c0_i32_0 = arith.constant 0 : i32
    %c0_i32_1 = arith.constant 0 : i32
    return %c0_i32, %c0_i32_0 : i32, i32
  }
  func.func @transform_10(%arg0: i32) -> (i32, i32) {
    %c0_i32 = arith.constant 0 : i32
    %c0_i32_0 = arith.constant 0 : i32
    %c0_i32_1 = arith.constant 0 : i32
    return %c0_i32, %c0_i32_0 : i32, i32
  }
  func.func @transform_11(%arg0: i32) -> i32 {
    %c0_i32 = arith.constant 0 : i32
    %c0_i32_0 = arith.constant 0 : i32
    return %c0_i32 : i32
  }
  func.func @transform_12(%arg0: i32) -> i32 {
    %c0_i32 = arith.constant 0 : i32
    %c0_i32_0 = arith.constant 0 : i32
    return %c0_i32 : i32
  }
  func.func @transform_13(%arg0: i32) -> (i32, i32, i32) {
    %c0_i32 = arith.constant 0 : i32
    %c0_i32_0 = arith.constant 0 : i32
    %c0_i32_1 = arith.constant 0 : i32
    return %arg0, %c0_i32, %c0_i32_0 : i32, i32, i32
  }
}

</mosaic_0001>

<llo_original>
// kernel: tpu_custom_call.1
$region0: #{tpu_custom_call.1}
  #allocation0 [shape = 'u32[]', space=smem, size = 0x4, offset = 0x4, fixed_abs, tag = 'smem constant byte address 0x4 - core index']
  #allocation1 [shape = 'u32[144,128]{1,0:T(1,128)}', space=vmem, size = 0x12000, scoped, tag = 'internal scratch']
  #allocation2 [shape = 'f32[1]{0:T(128)S(6)}', space=smem, size = 0x200, scoped, tag = 'scoped memory for tpu_custom_call.1']
  #allocation3 [shape = 'f32[1]{0:T(128)S(6)}', space=smem, size = 0x200, scoped, tag = 'scoped memory for tpu_custom_call.1']
  %s0 = inlined_call_operand.vmem [shape: f32[4,64,128], index: 0, kind: input, shape index: {}]
  %s1 = inlined_call_operand.vmem [shape: f32[4,64,128], index: 1, kind: input, shape index: {}]
  %s2 = inlined_call_operand.vmem [shape: f32[4,128,3], index: 2, kind: input, shape index: {}]
  %s3 = inlined_call_operand.vmem [shape: f32[4,3,128], index: 3, kind: input, shape index: {}]
  %s4 = inlined_call_operand.vmem [shape: f32[16,64], index: 4, kind: input, shape index: {}]
  %s5 = inlined_call_operand.vmem [shape: f32[64,64], index: 5, kind: input, shape index: {}]
  %s6 = inlined_call_operand.vmem [shape: f32[64,1], index: 6, kind: input, shape index: {}]
  %s7 = inlined_call_operand.vmem [shape: f32[64,64], index: 7, kind: input, shape index: {}]
  %s8 = inlined_call_operand.vmem [shape: f32[64,1], index: 8, kind: input, shape index: {}]
  %s9 = inlined_call_operand.vmem [shape: f32[64,1], index: 9, kind: input, shape index: {}]
  %s10 = inlined_call_operand.vmem [shape: f32[64,1], index: 10, kind: input, shape index: {}]
  %s11 = inlined_call_operand.<no memory space> [shape: f32[1], index: 11, kind: input, shape index: {}]
  %s12 = inlined_call_operand.<no memory space> [shape: f32[1], index: 12, kind: input, shape index: {}]
  %s13 = inlined_call_operand.hbm [shape: f32[4,64,128], index: 13, kind: output, shape index: {}]
  %s14 = sld [smem:[#allocation0]]
  $region85: #{tpu_custom_call.1} parent=0
    _
  %s16 = ssub.s32 1, %s14
  %s17 = scalar_select 0, %s16, %s14
  %18 = sst [smem:[#allocation2]] %s11
  %19 = sst [smem:[#allocation3]] %s12
  $region1: #{tpu_custom_call.1} parent=0
    #allocation4 [shape = 'u8[131072]{0}', space=vmem, size = 0x20000, scoped, tag = 'output window, operand 0']
    #allocation5 [shape = 's32[2]{0}', space=sflag, size = 0x8, scoped, tag = 'scoped memory for tpu_custom_call.1']
    %20 = vsyncpa [#allocation5], 0
    %s21 = scalar_lea.sflag [#allocation5], 1
    %22 = vsyncpa %s21, 0
    loop: start=0, step=1, limit=4
    $region2: #{tpu_custom_call.1} parent=1 // loop_pre_header
      _
    $region3: #{tpu_custom_call.1} parent=1 // loop_header
      %s24 = sphi 0, %s28
      %p25 = scmp.ge.s32.totalorder %s24, 4
      %s34 = sphi 0, %s36
      %s37 = sphi 0, %s34
      %s38 = sphi 0, %s37
      %s54 = sphi 0, %s38
      %s60 = sphi 0, %s62
      %s63 = sphi 0, %s60
      %s64 = sphi 0, %s63
      %s80 = sphi 0, %s64
      %s86 = sphi 0, %s88
      %s89 = sphi 0, %s86
      %s90 = sphi 0, %s89
      %s106 = sphi 0, %s90
      %s112 = sphi 0, %s114
      %s115 = sphi 0, %s112
      %s116 = sphi 0, %s115
      %s132 = sphi 0, %s116
      %s136 = sphi 0, %s136
      %s138 = sphi 0, %s136
      %s139 = sphi 0, %s138
      %s153 = sphi 0, %s139
      %s157 = sphi 0, %s157
      %s159 = sphi 0, %s157
      %s160 = sphi 0, %s159
      %s174 = sphi 0, %s160
      %s178 = sphi 0, %s178
      %s180 = sphi 0, %s178
      %s181 = sphi 0, %s180
      %s195 = sphi 0, %s181
      %s199 = sphi 0, %s199
      %s201 = sphi 0, %s199
      %s202 = sphi 0, %s201
      %s216 = sphi 0, %s202
      %s220 = sphi 0, %s220
      %s222 = sphi 0, %s220
      %s223 = sphi 0, %s222
      %s237 = sphi 0, %s223
      %s241 = sphi 0, %s241
      %s243 = sphi 0, %s241
      %s244 = sphi 0, %s243
      %s258 = sphi 0, %s244
      %s262 = sphi 0, %s262
      %s264 = sphi 0, %s262
      %s265 = sphi 0, %s264
      %s279 = sphi 0, %s265
      %s283 = sphi 0, %s283
      %s285 = sphi 0, %s283
      %s286 = sphi 0, %s285
      %s300 = sphi 0, %s286
      %s304 = sphi 0, %s304
      %s306 = sphi 0, %s304
      %s307 = sphi 0, %s306
      %s321 = sphi 0, %s307
      %s327 = sphi 0, %s329
      %s330 = sphi 0, %s327
      %s331 = sphi 0, %s330
      %s347 = sphi 0, %s331
    $region4: #{tpu_custom_call.1} parent=1 // loop_header_branch
      %27 = sbr.rel (%p25) target = $region8
    $region5: #{tpu_custom_call.1} parent=1 // loop_body
      %s29 = ssub.s32 %s24, 1
      %s30 = ssub.s32 %s24, 2
      %s31 = sadd.s32 %s24, 1
      %s32 = ssub.s32 %s24, %s31
      %p33 = scmp.eq.s32.totalorder %s32, 0
      %s35 = sadd.s32 %s34, 1
      %s36 = scalar_select %p33, %s34, %s35
      %p39 = pneg %p33
      %p40 = scmp.eq.s32.totalorder %s24, 1
      %p41 = por %p39, %p40
      %p42 = scmp.ne.s32.totalorder %s34, %s37
      %p43 = scmp.eq.s32.totalorder %s24, 0
      %p44 = por %p42, %p43
      %p45 = scmp.ne.s32.totalorder %s34, %s37
      %p46 = scmp.eq.s32.totalorder %s29, 1
      %p47 = por %p45, %p46
      %p48 = scmp.ne.s32.totalorder %s37, %s38
      %p49 = scmp.eq.s32.totalorder %s29, 0
      %p50 = por %p48, %p49
      %p51 = scmp.ne.s32.totalorder %s37, %s38
      %p52 = scmp.eq.s32.totalorder %s30, 1
      %p53 = por %p51, %p52
      %p55 = scmp.ne.s32.totalorder %s38, %s54
      %p56 = scmp.eq.s32.totalorder %s30, 0
      %p57 = por %p55, %p56
      %s58 = ssub.s32 %s24, %s31
      %p59 = scmp.eq.s32.totalorder %s58, 0
      %s61 = sadd.s32 %s60, 1
      %s62 = scalar_select %p59, %s60, %s61
      %p65 = pneg %p59
      %p66 = scmp.eq.s32.totalorder %s24, 1
      %p67 = por %p65, %p66
      %p68 = scmp.ne.s32.totalorder %s60, %s63
      %p69 = scmp.eq.s32.totalorder %s24, 0
      %p70 = por %p68, %p69
      %p71 = scmp.ne.s32.totalorder %s60, %s63
      %p72 = scmp.eq.s32.totalorder %s29, 1
      %p73 = por %p71, %p72
      %p74 = scmp.ne.s32.totalorder %s63, %s64
      %p75 = scmp.eq.s32.totalorder %s29, 0
      %p76 = por %p74, %p75
      %p77 = scmp.ne.s32.totalorder %s63, %s64
      %p78 = scmp.eq.s32.totalorder %s30, 1
      %p79 = por %p77, %p78
      %p81 = scmp.ne.s32.totalorder %s64, %s80
      %p82 = scmp.eq.s32.totalorder %s30, 0
      %p83 = por %p81, %p82
      %s84 = ssub.s32 %s24, %s31
      %p85 = scmp.eq.s32.totalorder %s84, 0
      %s87 = sadd.s32 %s86, 1
      %s88 = scalar_select %p85, %s86, %s87
      %p91 = pneg %p85
      %p92 = scmp.eq.s32.totalorder %s24, 1
      %p93 = por %p91, %p92
      %p94 = scmp.ne.s32.totalorder %s86, %s89
      %p95 = scmp.eq.s32.totalorder %s24, 0
      %p96 = por %p94, %p95
      %p97 = scmp.ne.s32.totalorder %s86, %s89
      %p98 = scmp.eq.s32.totalorder %s29, 1
      %p99 = por %p97, %p98
      %p100 = scmp.ne.s32.totalorder %s89, %s90
      %p101 = scmp.eq.s32.totalorder %s29, 0
      %p102 = por %p100, %p101
      %p103 = scmp.ne.s32.totalorder %s89, %s90
      %p104 = scmp.eq.s32.totalorder %s30, 1
      %p105 = por %p103, %p104
      %p107 = scmp.ne.s32.totalorder %s90, %s106
      %p108 = scmp.eq.s32.totalorder %s30, 0
      %p109 = por %p107, %p108
      %s110 = ssub.s32 %s24, %s31
      %p111 = scmp.eq.s32.totalorder %s110, 0
      %s113 = sadd.s32 %s112, 1
      %s114 = scalar_select %p111, %s112, %s113
      %p117 = pneg %p111
      %p118 = scmp.eq.s32.totalorder %s24, 1
      %p119 = por %p117, %p118
      %p120 = scmp.ne.s32.totalorder %s112, %s115
      %p121 = scmp.eq.s32.totalorder %s24, 0
      %p122 = por %p120, %p121
      %p123 = scmp.ne.s32.totalorder %s112, %s115
      %p124 = scmp.eq.s32.totalorder %s29, 1
      %p125 = por %p123, %p124
      %p126 = scmp.ne.s32.totalorder %s115, %s116
      %p127 = scmp.eq.s32.totalorder %s29, 0
      %p128 = por %p126, %p127
      %p129 = scmp.ne.s32.totalorder %s115, %s116
      %p130 = scmp.eq.s32.totalorder %s30, 1
      %p131 = por %p129, %p130
      %p133 = scmp.ne.s32.totalorder %s116, %s132
      %p134 = scmp.eq.s32.totalorder %s30, 0
      %p135 = por %p133, %p134
      %s137 = sadd.s32 %s136, 1
      %p140 = scmp.eq.s32.totalorder %s24, 1
      %p141 = scmp.ne.s32.totalorder %s136, %s138
      %p142 = scmp.eq.s32.totalorder %s24, 0
      %p143 = por %p141, %p142
      %p144 = scmp.ne.s32.totalorder %s136, %s138
      %p145 = scmp.eq.s32.totalorder %s29, 1
      %p146 = por %p144, %p145
      %p147 = scmp.ne.s32.totalorder %s138, %s139
      %p148 = scmp.eq.s32.totalorder %s29, 0
      %p149 = por %p147, %p148
      %p150 = scmp.ne.s32.totalorder %s138, %s139
      %p151 = scmp.eq.s32.totalorder %s30, 1
      %p152 = por %p150, %p151
      %p154 = scmp.ne.s32.totalorder %s139, %s153
      %p155 = scmp.eq.s32.totalorder %s30, 0
      %p156 = por %p154, %p155
      %s158 = sadd.s32 %s157, 1
      %p161 = scmp.eq.s32.totalorder %s24, 1
      %p162 = scmp.ne.s32.totalorder %s157, %s159
      %p163 = scmp.eq.s32.totalorder %s24, 0
      %p164 = por %p162, %p163
      %p165 = scmp.ne.s32.totalorder %s157, %s159
      %p166 = scmp.eq.s32.totalorder %s29, 1
      %p167 = por %p165, %p166
      %p168 = scmp.ne.s32.totalorder %s159, %s160
      %p169 = scmp.eq.s32.totalorder %s29, 0
      %p170 = por %p168, %p169
      %p171 = scmp.ne.s32.totalorder %s159, %s160
      %p172 = scmp.eq.s32.totalorder %s30, 1
      %p173 = por %p171, %p172
      %p175 = scmp.ne.s32.totalorder %s160, %s174
      %p176 = scmp.eq.s32.totalorder %s30, 0
      %p177 = por %p175, %p176
      %s179 = sadd.s32 %s178, 1
      %p182 = scmp.eq.s32.totalorder %s24, 1
      %p183 = scmp.ne.s32.totalorder %s178, %s180
      %p184 = scmp.eq.s32.totalorder %s24, 0
      %p185 = por %p183, %p184
      %p186 = scmp.ne.s32.totalorder %s178, %s180
      %p187 = scmp.eq.s32.totalorder %s29, 1
      %p188 = por %p186, %p187
      %p189 = scmp.ne.s32.totalorder %s180, %s181
      %p190 = scmp.eq.s32.totalorder %s29, 0
      %p191 = por %p189, %p190
      %p192 = scmp.ne.s32.totalorder %s180, %s181
      %p193 = scmp.eq.s32.totalorder %s30, 1
      %p194 = por %p192, %p193
      %p196 = scmp.ne.s32.totalorder %s181, %s195
      %p197 = scmp.eq.s32.totalorder %s30, 0
      %p198 = por %p196, %p197
      %s200 = sadd.s32 %s199, 1
      %p203 = scmp.eq.s32.totalorder %s24, 1
      %p204 = scmp.ne.s32.totalorder %s199, %s201
      %p205 = scmp.eq.s32.totalorder %s24, 0
      %p206 = por %p204, %p205
      %p207 = scmp.ne.s32.totalorder %s199, %s201
      %p208 = scmp.eq.s32.totalorder %s29, 1
      %p209 = por %p207, %p208
      %p210 = scmp.ne.s32.totalorder %s201, %s202
      %p211 = scmp.eq.s32.totalorder %s29, 0
      %p212 = por %p210, %p211
      %p213 = scmp.ne.s32.totalorder %s201, %s202
      %p214 = scmp.eq.s32.totalorder %s30, 1
      %p215 = por %p213, %p214
      %p217 = scmp.ne.s32.totalorder %s202, %s216
      %p218 = scmp.eq.s32.totalorder %s30, 0
      %p219 = por %p217, %p218
      %s221 = sadd.s32 %s220, 1
      %p224 = scmp.eq.s32.totalorder %s24, 1
      %p225 = scmp.ne.s32.totalorder %s220, %s222
      %p226 = scmp.eq.s32.totalorder %s24, 0
      %p227 = por %p225, %p226
      %p228 = scmp.ne.s32.totalorder %s220, %s222
      %p229 = scmp.eq.s32.totalorder %s29, 1
      %p230 = por %p228, %p229
      %p231 = scmp.ne.s32.totalorder %s222, %s223
      %p232 = scmp.eq.s32.totalorder %s29, 0
      %p233 = por %p231, %p232
      %p234 = scmp.ne.s32.totalorder %s222, %s223
      %p235 = scmp.eq.s32.totalorder %s30, 1
      %p236 = por %p234, %p235
      %p238 = scmp.ne.s32.totalorder %s223, %s237
      %p239 = scmp.eq.s32.totalorder %s30, 0
      %p240 = por %p238, %p239
      %s242 = sadd.s32 %s241, 1
      %p245 = scmp.eq.s32.totalorder %s24, 1
      %p246 = scmp.ne.s32.totalorder %s241, %s243
      %p247 = scmp.eq.s32.totalorder %s24, 0
      %p248 = por %p246, %p247
      %p249 = scmp.ne.s32.totalorder %s241, %s243
      %p250 = scmp.eq.s32.totalorder %s29, 1
      %p251 = por %p249, %p250
      %p252 = scmp.ne.s32.totalorder %s243, %s244
      %p253 = scmp.eq.s32.totalorder %s29, 0
      %p254 = por %p252, %p253
      %p255 = scmp.ne.s32.totalorder %s243, %s244
      %p256 = scmp.eq.s32.totalorder %s30, 1
      %p257 = por %p255, %p256
      %p259 = scmp.ne.s32.totalorder %s244, %s258
      %p260 = scmp.eq.s32.totalorder %s30, 0
      %p261 = por %p259, %p260
      %s263 = sadd.s32 %s262, 1
      %p266 = scmp.eq.s32.totalorder %s24, 1
      %p267 = scmp.ne.s32.totalorder %s262, %s264
      %p268 = scmp.eq.s32.totalorder %s24, 0
      %p269 = por %p267, %p268
      %p270 = scmp.ne.s32.totalorder %s262, %s264
      %p271 = scmp.eq.s32.totalorder %s29, 1
      %p272 = por %p270, %p271
      %p273 = scmp.ne.s32.totalorder %s264, %s265
      %p274 = scmp.eq.s32.totalorder %s29, 0
      %p275 = por %p273, %p274
      %p276 = scmp.ne.s32.totalorder %s264, %s265
      %p277 = scmp.eq.s32.totalorder %s30, 1
      %p278 = por %p276, %p277
      %p280 = scmp.ne.s32.totalorder %s265, %s279
      %p281 = scmp.eq.s32.totalorder %s30, 0
      %p282 = por %p280, %p281
      %s284 = sadd.s32 %s283, 1
      %p287 = scmp.eq.s32.totalorder %s24, 1
      %p288 = scmp.ne.s32.totalorder %s283, %s285
      %p289 = scmp.eq.s32.totalorder %s24, 0
      %p290 = por %p288, %p289
      %p291 = scmp.ne.s32.totalorder %s283, %s285
      %p292 = scmp.eq.s32.totalorder %s29, 1
      %p293 = por %p291, %p292
      %p294 = scmp.ne.s32.totalorder %s285, %s286
      %p295 = scmp.eq.s32.totalorder %s29, 0
      %p296 = por %p294, %p295
      %p297 = scmp.ne.s32.totalorder %s285, %s286
      %p298 = scmp.eq.s32.totalorder %s30, 1
      %p299 = por %p297, %p298
      %p301 = scmp.ne.s32.totalorder %s286, %s300
      %p302 = scmp.eq.s32.totalorder %s30, 0
      %p303 = por %p301, %p302
      %s305 = sadd.s32 %s304, 1
      %p308 = scmp.eq.s32.totalorder %s24, 1
      %p309 = scmp.ne.s32.totalorder %s304, %s306
      %p310 = scmp.eq.s32.totalorder %s24, 0
      %p311 = por %p309, %p310
      %p312 = scmp.ne.s32.totalorder %s304, %s306
      %p313 = scmp.eq.s32.totalorder %s29, 1
      %p314 = por %p312, %p313
      %p315 = scmp.ne.s32.totalorder %s306, %s307
      %p316 = scmp.eq.s32.totalorder %s29, 0
      %p317 = por %p315, %p316
      %p318 = scmp.ne.s32.totalorder %s306, %s307
      %p319 = scmp.eq.s32.totalorder %s30, 1
      %p320 = por %p318, %p319
      %p322 = scmp.ne.s32.totalorder %s307, %s321
      %p323 = scmp.eq.s32.totalorder %s30, 0
      %p324 = por %p322, %p323
      %s325 = ssub.s32 %s24, %s31
      %p326 = scmp.eq.s32.totalorder %s325, 0
      %s328 = sadd.s32 %s327, 1
      %s329 = scalar_select %p326, %s327, %s328
      %p332 = pneg %p326
      %p333 = scmp.eq.s32.totalorder %s24, 1
      %p334 = por %p332, %p333
      %p335 = scmp.ne.s32.totalorder %s327, %s330
      %p336 = scmp.eq.s32.totalorder %s24, 0
      %p337 = por %p335, %p336
      %p338 = scmp.ne.s32.totalorder %s327, %s330
      %p339 = scmp.eq.s32.totalorder %s29, 1
      %p340 = por %p338, %p339
      %p341 = scmp.ne.s32.totalorder %s330, %s331
      %p342 = scmp.eq.s32.totalorder %s29, 0
      %p343 = por %p341, %p342
      %p344 = scmp.ne.s32.totalorder %s330, %s331
      %p345 = scmp.eq.s32.totalorder %s30, 1
      %p346 = por %p344, %p345
      %p348 = scmp.ne.s32.totalorder %s331, %s347
      %p349 = scmp.eq.s32.totalorder %s30, 0
      %p350 = por %p348, %p349
      %p351 = scmp.le.s32.totalorder 1, %s24
      %p352 = scmp.lt.s32.totalorder %s24, 3
      %p353 = pnand %p351, %p352
      %p354 = pneg %p353
      // Predicated region
      $region9: #{tpu_custom_call.1} parent=5 // pred_check
        _
      $region10: #{tpu_custom_call.1} parent=5 // pred_check_branch
        %356 = sbr.rel (%p353) target = $region12
      $region11: #{tpu_custom_call.1} parent=5 // pred_region
        %s357 = ssub.s32 %s24, 1
        // Predicated region
        $region13: #{tpu_custom_call.1} parent=11 // pred_check
          %p358 = pneg %p149
        $region14: #{tpu_custom_call.1} parent=11 // pred_check_branch
          %360 = sbr.rel (%p358) target = $region16
        $region15: #{tpu_custom_call.1} parent=11 // pred_region
          _
        $region16: #{tpu_custom_call.1} parent=11 // pred_fallthru
          _
        // Predicated region
        $region17: #{tpu_custom_call.1} parent=11 // pred_check
          %p361 = pneg %p170
        $region18: #{tpu_custom_call.1} parent=11 // pred_check_branch
          %363 = sbr.rel (%p361) target = $region20
        $region19: #{tpu_custom_call.1} parent=11 // pred_region
          _
        $region20: #{tpu_custom_call.1} parent=11 // pred_fallthru
          _
        // Predicated region
        $region21: #{tpu_custom_call.1} parent=11 // pred_check
          %p364 = pneg %p191
        $region22: #{tpu_custom_call.1} parent=11 // pred_check_branch
          %366 = sbr.rel (%p364) target = $region24
        $region23: #{tpu_custom_call.1} parent=11 // pred_region
          _
        $region24: #{tpu_custom_call.1} parent=11 // pred_fallthru
          _
        // Predicated region
        $region25: #{tpu_custom_call.1} parent=11 // pred_check
          %p367 = pneg %p212
        $region26: #{tpu_custom_call.1} parent=11 // pred_check_branch
          %369 = sbr.rel (%p367) target = $region28
        $region27: #{tpu_custom_call.1} parent=11 // pred_region
          _
        $region28: #{tpu_custom_call.1} parent=11 // pred_fallthru
          _
        // Predicated region
        $region29: #{tpu_custom_call.1} parent=11 // pred_check
          %p370 = pneg %p233
        $region30: #{tpu_custom_call.1} parent=11 // pred_check_branch
          %372 = sbr.rel (%p370) target = $region32
        $region31: #{tpu_custom_call.1} parent=11 // pred_region
          _
        $region32: #{tpu_custom_call.1} parent=11 // pred_fallthru
          _
        // Predicated region
        $region33: #{tpu_custom_call.1} parent=11 // pred_check
          %p373 = pneg %p254
        $region34: #{tpu_custom_call.1} parent=11 // pred_check_branch
          %375 = sbr.rel (%p373) target = $region36
        $region35: #{tpu_custom_call.1} parent=11 // pred_region
          _
        $region36: #{tpu_custom_call.1} parent=11 // pred_fallthru
          _
        // Predicated region
        $region37: #{tpu_custom_call.1} parent=11 // pred_check
          %p376 = pneg %p275
        $region38: #{tpu_custom_call.1} parent=11 // pred_check_branch
          %378 = sbr.rel (%p376) target = $region40
        $region39: #{tpu_custom_call.1} parent=11 // pred_region
          _
        $region40: #{tpu_custom_call.1} parent=11 // pred_fallthru
          _
        // Predicated region
        $region41: #{tpu_custom_call.1} parent=11 // pred_check
          %p379 = pneg %p296
        $region42: #{tpu_custom_call.1} parent=11 // pred_check_branch
          %381 = sbr.rel (%p379) target = $region44
        $region43: #{tpu_custom_call.1} parent=11 // pred_region
          _
        $region44: #{tpu_custom_call.1} parent=11 // pred_fallthru
          _
        // Predicated region
        $region45: #{tpu_custom_call.1} parent=11 // pred_check
          %p382 = pneg %p317
        $region46: #{tpu_custom_call.1} parent=11 // pred_check_branch
          %384 = sbr.rel (%p382) target = $region48
        $region47: #{tpu_custom_call.1} parent=11 // pred_region
          _
        $region48: #{tpu_custom_call.1} parent=11 // pred_fallthru
          _
      $region12: #{tpu_custom_call.1} parent=5 // pred_fallthru
        _
      %p385 = scmp.lt.s32.totalorder %s24, 2
      // Predicated region
      $region49: #{tpu_custom_call.1} parent=5 // pred_check
        %p386 = pneg %p385
      $region50: #{tpu_custom_call.1} parent=5 // pred_check_branch
        %388 = sbr.rel (%p386) target = $region52
      $region51: #{tpu_custom_call.1} parent=5 // pred_region
        // Predicated region
        $region53: #{tpu_custom_call.1} parent=51 // pred_check
          %p389 = pneg %p44
        $region54: #{tpu_custom_call.1} parent=51 // pred_check_branch
          %391 = sbr.rel (%p389) target = $region56
        $region55: #{tpu_custom_call.1} parent=51 // pred_region
          %s392 = smul.u32 2, %s24
          %p393 = scmp.lt.s32.totalorder %s392, 3
          %s394 = scalar_select %p393, %s392, 3
          %s395 = smul.addr %s394, 8
          %s396 = smul.addr %s395, 8
          %s397 = scalar_lea.vmem %s0, %s396
          %s398 = smul.u32 2, %s24
        $region56: #{tpu_custom_call.1} parent=51 // pred_fallthru
          _
        // Predicated region
        $region57: #{tpu_custom_call.1} parent=51 // pred_check
          %p399 = pneg %p70
        $region58: #{tpu_custom_call.1} parent=51 // pred_check_branch
          %401 = sbr.rel (%p399) target = $region60
        $region59: #{tpu_custom_call.1} parent=51 // pred_region
          %s402 = smul.u32 2, %s24
          %p403 = scmp.lt.s32.totalorder %s402, 3
          %s404 = scalar_select %p403, %s402, 3
          %s405 = smul.addr %s404, 8
          %s406 = smul.addr %s405, 8
          %s407 = scalar_lea.vmem %s1, %s406
          %s408 = smul.u32 2, %s24
        $region60: #{tpu_custom_call.1} parent=51 // pred_fallthru
          _
        // Predicated region
        $region61: #{tpu_custom_call.1} parent=51 // pred_check
          %p409 = pneg %p96
        $region62: #{tpu_custom_call.1} parent=51 // pred_check_branch
          %411 = sbr.rel (%p409) target = $region64
        $region63: #{tpu_custom_call.1} parent=51 // pred_region
          %s412 = smul.u32 2, %s24
          %p413 = scmp.lt.s32.totalorder %s412, 3
          %s414 = scalar_select %p413, %s412, 3
          %s415 = smul.addr %s414, 16
          %s416 = smul.addr %s415, 8
          %s417 = scalar_lea.vmem %s2, %s416
          %s418 = smul.u32 2, %s24
        $region64: #{tpu_custom_call.1} parent=51 // pred_fallthru
          _
        // Predicated region
        $region65: #{tpu_custom_call.1} parent=51 // pred_check
          %p419 = pneg %p122
        $region66: #{tpu_custom_call.1} parent=51 // pred_check_branch
          %421 = sbr.rel (%p419) target = $region68
        $region67: #{tpu_custom_call.1} parent=51 // pred_region
          %s422 = smul.u32 2, %s24
          %p423 = scmp.lt.s32.totalorder %s422, 3
          %s424 = scalar_select %p423, %s422, 3
          %s425 = smul.addr %s424, 4
          %s426 = scalar_lea.vmem %s3, %s425
          %s427 = smul.u32 2, %s24
        $region68: #{tpu_custom_call.1} parent=51 // pred_fallthru
          _
      $region52: #{tpu_custom_call.1} parent=5 // pred_fallthru
        _
      %p428 = scmp.le.s32.totalorder 1, %s24
      %p429 = scmp.lt.s32.totalorder %s24, 3
      %p430 = pnand %p428, %p429
      %p431 = pneg %p430
      // Predicated region
      $region69: #{tpu_custom_call.1} parent=5 // pred_check
        _
      $region70: #{tpu_custom_call.1} parent=5 // pred_check_branch
        %433 = sbr.rel (%p430) target = $region72
      $region71: #{tpu_custom_call.1} parent=5 // pred_region
        %s434 = ssub.s32 %s24, 1
        %s435 = smul.u32 2, %s29
        %p436 = scmp.lt.s32.totalorder %s435, 3
        %s437 = scalar_select %p436, %s435, 3
        %s438 = smul.addr %s437, 8
        %s439 = smul.addr %s438, 8
        %s440 = scalar_lea.vmem %s0, %s439
        %p441 = pneg %p50
        %p442 = pneg %p47
        %s443 = smul.u32 2, %s29
        %p444 = scmp.lt.s32.totalorder %s443, 3
        %s445 = scalar_select %p444, %s443, 3
        %s446 = smul.addr %s445, 8
        %s447 = smul.addr %s446, 8
        %s448 = scalar_lea.vmem %s1, %s447
        %p449 = pneg %p76
        %p450 = pneg %p73
        %s451 = smul.u32 2, %s29
        %p452 = scmp.lt.s32.totalorder %s451, 3
        %s453 = scalar_select %p452, %s451, 3
        %s454 = smul.addr %s453, 16
        %s455 = smul.addr %s454, 8
        %s456 = scalar_lea.vmem %s2, %s455
        %p457 = pneg %p102
        %p458 = pneg %p99
        %s459 = smul.u32 2, %s29
        %p460 = scmp.lt.s32.totalorder %s459, 3
        %s461 = scalar_select %p460, %s459, 3
        %s462 = smul.addr %s461, 4
        %s463 = scalar_lea.vmem %s3, %s462
        %p464 = pneg %p128
        %p465 = pneg %p125
        %p466 = pneg %p149
        %p467 = pneg %p146
        %p468 = pneg %p170
        %p469 = pneg %p167
        %p470 = pneg %p191
        %p471 = pneg %p188
        %p472 = pneg %p212
        %p473 = pneg %p209
        %p474 = pneg %p233
        %p475 = pneg %p230
        %p476 = pneg %p254
        %p477 = pneg %p251
        %p478 = pneg %p275
        %p479 = pneg %p272
        %p480 = pneg %p296
        %p481 = pneg %p293
        %p482 = pneg %p317
        %p483 = pneg %p314
        %p484 = pneg %p343
        %p485 = pneg %p340
        %s486 = sand.u32 %s330, 1
        %s487 = scalar_lea.sflag [#allocation5], %s486
        %s488 = sand.u32 %s330, 1
        %s489 = smul.addr %s488, 128
        %s490 = scalar_lea.vmem [#allocation4], %s489
        %s491 = smul.u32 2, %s29
        %p492 = scmp.lt.s32.totalorder %s491, 3
        %s493 = scalar_select %p492, %s491, 3
        %s494 = smul.addr %s493, 8
        %s495 = smul.addr %s494, 8
        %s496 = scalar_lea.vmem %s0, %s495
        %s497 = smul.u32 2, %s29
        %s498 = smul.u32 2, %s29
        %p499 = scmp.lt.s32.totalorder %s498, 3
        %s500 = scalar_select %p499, %s498, 3
        %s501 = smul.addr %s500, 8
        %s502 = smul.addr %s501, 8
        %s503 = scalar_lea.vmem %s1, %s502
        %s504 = smul.u32 2, %s29
        %s505 = smul.u32 2, %s29
        %p506 = scmp.lt.s32.totalorder %s505, 3
        %s507 = scalar_select %p506, %s505, 3
        %s508 = smul.addr %s507, 16
        %s509 = smul.addr %s508, 8
        %s510 = scalar_lea.vmem %s2, %s509
        %s511 = smul.u32 2, %s29
        %s512 = smul.u32 2, %s29
        %p513 = scmp.lt.s32.totalorder %s512, 3
        %s514 = scalar_select %p513, %s512, 3
        %s515 = smul.addr %s514, 4
        %s516 = scalar_lea.vmem %s3, %s515
        %s517 = smul.u32 2, %s29
        %s518 = smul.u32 2, %s29
        %v520 = vld [vmem:[%s4] sm:$0xff]
        %v521 = vld [vmem:[%s4 + $0x8] sm:$0xff]
        %v522 = vpack.c.bf16 %v521, %v520
        %v523 = vld [vmem:[%s5] sm:$0xff]
        %v524 = vld [vmem:[%s5 + $0x8] sm:$0xff]
        %v525 = vld [vmem:[%s5 + $0x10] sm:$0xff]
        %v526 = vld [vmem:[%s5 + $0x18] sm:$0xff]
        %v527 = vld [vmem:[%s5 + $0x20] sm:$0xff]
        %v528 = vld [vmem:[%s5 + $0x28] sm:$0xff]
        %v529 = vld [vmem:[%s5 + $0x30] sm:$0xff]
        %v530 = vld [vmem:[%s5 + $0x38] sm:$0xff]
        %v531 = vpack.c.bf16 %v524, %v523
        %v532 = vpack.c.bf16 %v526, %v525
        %v533 = vpack.c.bf16 %v528, %v527
        %v534 = vpack.c.bf16 %v530, %v529
        %v535 = vld [vmem:[%s7] sm:$0xff]
        %v536 = vld [vmem:[%s7 + $0x8] sm:$0xff]
        %v537 = vld [vmem:[%s7 + $0x10] sm:$0xff]
        %v538 = vld [vmem:[%s7 + $0x18] sm:$0xff]
        %v539 = vld [vmem:[%s7 + $0x20] sm:$0xff]
        %v540 = vld [vmem:[%s7 + $0x28] sm:$0xff]
        %v541 = vld [vmem:[%s7 + $0x30] sm:$0xff]
        %v542 = vld [vmem:[%s7 + $0x38] sm:$0xff]
        %v543 = vpack.c.bf16 %v536, %v535
        %v544 = vpack.c.bf16 %v538, %v537
        %v545 = vpack.c.bf16 %v540, %v539
        %v546 = vpack.c.bf16 %v542, %v541
        %v547 = vld [vmem:[%s6] sm:$0xff]
        %v548 = vld [vmem:[%s6 + $0x8] sm:$0xff]
        %v549 = vld [vmem:[%s6 + $0x10] sm:$0xff]
        %v550 = vld [vmem:[%s6 + $0x18] sm:$0xff]
        %v551 = vld [vmem:[%s6 + $0x20] sm:$0xff]
        %v552 = vld [vmem:[%s6 + $0x28] sm:$0xff]
        %v553 = vld [vmem:[%s6 + $0x30] sm:$0xff]
        %v554 = vld [vmem:[%s6 + $0x38] sm:$0xff]
        %v555 = vld [vmem:[%s8] sm:$0xff]
        %v556 = vld [vmem:[%s8 + $0x8] sm:$0xff]
        %v557 = vld [vmem:[%s8 + $0x10] sm:$0xff]
        %v558 = vld [vmem:[%s8 + $0x18] sm:$0xff]
        %v559 = vld [vmem:[%s8 + $0x20] sm:$0xff]
        %v560 = vld [vmem:[%s8 + $0x28] sm:$0xff]
        %v561 = vld [vmem:[%s8 + $0x30] sm:$0xff]
        %v562 = vld [vmem:[%s8 + $0x38] sm:$0xff]
        %v563 = vld [vmem:[%s9] sm:$0xff]
        %v564 = vld [vmem:[%s9 + $0x8] sm:$0xff]
        %v565 = vld [vmem:[%s9 + $0x10] sm:$0xff]
        %v566 = vld [vmem:[%s9 + $0x18] sm:$0xff]
        %v567 = vld [vmem:[%s9 + $0x20] sm:$0xff]
        %v568 = vld [vmem:[%s9 + $0x28] sm:$0xff]
        %v569 = vld [vmem:[%s9 + $0x30] sm:$0xff]
        %v570 = vld [vmem:[%s9 + $0x38] sm:$0xff]
        %v571 = vld [vmem:[%s10] sm:$0xff]
        %v572 = vld [vmem:[%s10 + $0x8] sm:$0xff]
        %v573 = vld [vmem:[%s10 + $0x10] sm:$0xff]
        %v574 = vld [vmem:[%s10 + $0x18] sm:$0xff]
        %v575 = vld [vmem:[%s10 + $0x20] sm:$0xff]
        %v576 = vld [vmem:[%s10 + $0x28] sm:$0xff]
        %v577 = vld [vmem:[%s10 + $0x30] sm:$0xff]
        %v578 = vld [vmem:[%s10 + $0x38] sm:$0xff]
        %s579 = sld [smem:[#allocation2]]
        %s580 = sld [smem:[#allocation3]]
        %v581 = vld [vmem:[%s496] sm:$0xff]
        %v582 = vld [vmem:[%s496 + $0x8] sm:$0xff]
        %v583 = vld [vmem:[%s496 + $0x10] sm:$0xff]
        %v584 = vld [vmem:[%s496 + $0x18] sm:$0xff]
        %v585 = vld [vmem:[%s496 + $0x20] sm:$0xff]
        %v586 = vld [vmem:[%s496 + $0x28] sm:$0xff]
        %v587 = vld [vmem:[%s496 + $0x30] sm:$0xff]
        %v588 = vld [vmem:[%s496 + $0x38] sm:$0xff]
        %v589 = vld [vmem:[%s503] sm:$0xff]
        %v590 = vld [vmem:[%s503 + $0x8] sm:$0xff]
        %v591 = vld [vmem:[%s503 + $0x10] sm:$0xff]
        %v592 = vld [vmem:[%s503 + $0x18] sm:$0xff]
        %v593 = vld [vmem:[%s503 + $0x20] sm:$0xff]
        %v594 = vld [vmem:[%s503 + $0x28] sm:$0xff]
        %v595 = vld [vmem:[%s503 + $0x30] sm:$0xff]
        %v596 = vld [vmem:[%s503 + $0x38] sm:$0xff]
        %v597 = vld [vmem:[%s510] sm:$0xff]
        %v598 = vld [vmem:[%s510 + $0x8] sm:$0xff]
        %v599 = vld [vmem:[%s510 + $0x10] sm:$0xff]
        %v600 = vld [vmem:[%s510 + $0x18] sm:$0xff]
        %v601 = vld [vmem:[%s510 + $0x20] sm:$0xff]
        %v602 = vld [vmem:[%s510 + $0x28] sm:$0xff]
        %v603 = vld [vmem:[%s510 + $0x30] sm:$0xff]
        %v604 = vld [vmem:[%s510 + $0x38] sm:$0xff]
        %v605 = vld [vmem:[%s510 + $0x40] sm:$0xff]
        %v606 = vld [vmem:[%s510 + $0x48] sm:$0xff]
        %v607 = vld [vmem:[%s510 + $0x50] sm:$0xff]
        %v608 = vld [vmem:[%s510 + $0x58] sm:$0xff]
        %v609 = vld [vmem:[%s510 + $0x60] sm:$0xff]
        %v610 = vld [vmem:[%s510 + $0x68] sm:$0xff]
        %v611 = vld [vmem:[%s510 + $0x70] sm:$0xff]
        %v612 = vld [vmem:[%s510 + $0x78] sm:$0xff]
        %v613 = vld [vmem:[%s516] sm:$0x7]
        %v614 = vlaneseq
        %v615 = vshrl.u32 %v614, 7
        %v616 = vsub.s32 0, %v615
        %v617 = vrot.slane %v613, %v616
        %619 = vset.pattern.permute.xlu0 0
        %620 = vperm.xlu0 %619, %v597
        %v621 = vpop.permute.xlu0 %620
        %624 = vset.pattern.permute.xlu0 0
        %625 = vperm.xlu0 %624, %v598
        %v626 = vpop.permute.xlu0 %625
        %629 = vset.pattern.permute.xlu0 0
        %630 = vperm.xlu0 %629, %v599
        %v631 = vpop.permute.xlu0 %630
        %634 = vset.pattern.permute.xlu0 0
        %635 = vperm.xlu0 %634, %v600
        %v636 = vpop.permute.xlu0 %635
        %639 = vset.pattern.permute.xlu0 0
        %640 = vperm.xlu0 %639, %v601
        %v641 = vpop.permute.xlu0 %640
        %644 = vset.pattern.permute.xlu0 0
        %645 = vperm.xlu0 %644, %v602
        %v646 = vpop.permute.xlu0 %645
        %649 = vset.pattern.permute.xlu0 0
        %650 = vperm.xlu0 %649, %v603
        %v651 = vpop.permute.xlu0 %650
        %654 = vset.pattern.permute.xlu0 0
        %655 = vperm.xlu0 %654, %v604
        %v656 = vpop.permute.xlu0 %655
        %659 = vset.pattern.permute.xlu0 0
        %660 = vperm.xlu0 %659, %v605
        %v661 = vpop.permute.xlu0 %660
        %664 = vset.pattern.permute.xlu0 0
        %665 = vperm.xlu0 %664, %v606
        %v666 = vpop.permute.xlu0 %665
        %669 = vset.pattern.permute.xlu0 0
        %670 = vperm.xlu0 %669, %v607
        %v671 = vpop.permute.xlu0 %670
        %674 = vset.pattern.permute.xlu0 0
        %675 = vperm.xlu0 %674, %v608
        %v676 = vpop.permute.xlu0 %675
        %679 = vset.pattern.permute.xlu0 0
        %680 = vperm.xlu0 %679, %v609
        %v681 = vpop.permute.xlu0 %680
        %684 = vset.pattern.permute.xlu0 0
        %685 = vperm.xlu0 %684, %v610
        %v686 = vpop.permute.xlu0 %685
        %689 = vset.pattern.permute.xlu0 0
        %690 = vperm.xlu0 %689, %v611
        %v691 = vpop.permute.xlu0 %690
        %694 = vset.pattern.permute.xlu0 0
        %695 = vperm.xlu0 %694, %v612
        %v696 = vpop.permute.xlu0 %695
        %v698 = vsub.f32 %v617, %v621
        %v699 = vsub.f32 %v617, %v626
        %v700 = vsub.f32 %v617, %v631
        %v701 = vsub.f32 %v617, %v636
        %v702 = vsub.f32 %v617, %v641
        %v703 = vsub.f32 %v617, %v646
        %v704 = vsub.f32 %v617, %v651
        %v705 = vsub.f32 %v617, %v656
        %v706 = vsub.f32 %v617, %v661
        %v707 = vsub.f32 %v617, %v666
        %v708 = vsub.f32 %v617, %v671
        %v709 = vsub.f32 %v617, %v676
        %v710 = vsub.f32 %v617, %v681
        %v711 = vsub.f32 %v617, %v686
        %v712 = vsub.f32 %v617, %v691
        %v713 = vsub.f32 %v617, %v696
        %v714 = vmul.f32 %v698, %v698
        %v715 = vmul.f32 %v699, %v699
        %v716 = vmul.f32 %v700, %v700
        %v717 = vmul.f32 %v701, %v701
        %v718 = vmul.f32 %v702, %v702
        %v719 = vmul.f32 %v703, %v703
        %v720 = vmul.f32 %v704, %v704
        %v721 = vmul.f32 %v705, %v705
        %v722 = vmul.f32 %v706, %v706
        %v723 = vmul.f32 %v707, %v707
        %v724 = vmul.f32 %v708, %v708
        %v725 = vmul.f32 %v709, %v709
        %v726 = vmul.f32 %v710, %v710
        %v727 = vmul.f32 %v711, %v711
        %v728 = vmul.f32 %v712, %v712
        %v729 = vmul.f32 %v713, %v713
        %v730 = vadd.f32 %v714, 0.0
        %v731 = vadd.f32 %v715, 0.0
        %v732 = vadd.f32 %v716, 0.0
        %v733 = vadd.f32 %v717, 0.0
        %v734 = vadd.f32 %v718, 0.0
        %v735 = vadd.f32 %v719, 0.0
        %v736 = vadd.f32 %v720, 0.0
        %v737 = vadd.f32 %v721, 0.0
        %v738 = vadd.f32 %v722, 0.0
        %v739 = vadd.f32 %v723, 0.0
        %v740 = vadd.f32 %v724, 0.0
        %v741 = vadd.f32 %v725, 0.0
        %v742 = vadd.f32 %v726, 0.0
        %v743 = vadd.f32 %v727, 0.0
        %v744 = vadd.f32 %v728, 0.0
        %v745 = vadd.f32 %v729, 0.0
        %v746 = vlaneseq
        %v747 = vshrl.u32 %v746, 7
        %v748 = vsub.s32 1, %v747
        %v749 = vrot.slane %v613, %v748
        %750 = vset.pattern.permute.xlu0 1
        %751 = vperm.xlu0 %750, %v597
        %v752 = vpop.permute.xlu0 %751
        %754 = vset.pattern.permute.xlu0 1
        %755 = vperm.xlu0 %754, %v598
        %v756 = vpop.permute.xlu0 %755
        %758 = vset.pattern.permute.xlu0 1
        %759 = vperm.xlu0 %758, %v599
        %v760 = vpop.permute.xlu0 %759
        %762 = vset.pattern.permute.xlu0 1
        %763 = vperm.xlu0 %762, %v600
        %v764 = vpop.permute.xlu0 %763
        %766 = vset.pattern.permute.xlu0 1
        %767 = vperm.xlu0 %766, %v601
        %v768 = vpop.permute.xlu0 %767
        %770 = vset.pattern.permute.xlu0 1
        %771 = vperm.xlu0 %770, %v602
        %v772 = vpop.permute.xlu0 %771
        %774 = vset.pattern.permute.xlu0 1
        %775 = vperm.xlu0 %774, %v603
        %v776 = vpop.permute.xlu0 %775
        %778 = vset.pattern.permute.xlu0 1
        %779 = vperm.xlu0 %778, %v604
        %v780 = vpop.permute.xlu0 %779
        %782 = vset.pattern.permute.xlu0 1
        %783 = vperm.xlu0 %782, %v605
        %v784 = vpop.permute.xlu0 %783
        %786 = vset.pattern.permute.xlu0 1
        %787 = vperm.xlu0 %786, %v606
        %v788 = vpop.permute.xlu0 %787
        %790 = vset.pattern.permute.xlu0 1
        %791 = vperm.xlu0 %790, %v607
        %v792 = vpop.permute.xlu0 %791
        %794 = vset.pattern.permute.xlu0 1
        %795 = vperm.xlu0 %794, %v608
        %v796 = vpop.permute.xlu0 %795
        %798 = vset.pattern.permute.xlu0 1
        %799 = vperm.xlu0 %798, %v609
        %v800 = vpop.permute.xlu0 %799
        %802 = vset.pattern.permute.xlu0 1
        %803 = vperm.xlu0 %802, %v610
        %v804 = vpop.permute.xlu0 %803
        %806 = vset.pattern.permute.xlu0 1
        %807 = vperm.xlu0 %806, %v611
        %v808 = vpop.permute.xlu0 %807
        %810 = vset.pattern.permute.xlu0 1
        %811 = vperm.xlu0 %810, %v612
        %v812 = vpop.permute.xlu0 %811
        %v814 = vsub.f32 %v749, %v752
        %v815 = vsub.f32 %v749, %v756
        %v816 = vsub.f32 %v749, %v760
        %v817 = vsub.f32 %v749, %v764
        %v818 = vsub.f32 %v749, %v768
        %v819 = vsub.f32 %v749, %v772
        %v820 = vsub.f32 %v749, %v776
        %v821 = vsub.f32 %v749, %v780
        %v822 = vsub.f32 %v749, %v784
        %v823 = vsub.f32 %v749, %v788
        %v824 = vsub.f32 %v749, %v792
        %v825 = vsub.f32 %v749, %v796
        %v826 = vsub.f32 %v749, %v800
        %v827 = vsub.f32 %v749, %v804
        %v828 = vsub.f32 %v749, %v808
        %v829 = vsub.f32 %v749, %v812
        %v830 = vmul.f32 %v814, %v814
        %v831 = vmul.f32 %v815, %v815
        %v832 = vmul.f32 %v816, %v816
        %v833 = vmul.f32 %v817, %v817
        %v834 = vmul.f32 %v818, %v818
        %v835 = vmul.f32 %v819, %v819
        %v836 = vmul.f32 %v820, %v820
        %v837 = vmul.f32 %v821, %v821
        %v838 = vmul.f32 %v822, %v822
        %v839 = vmul.f32 %v823, %v823
        %v840 = vmul.f32 %v824, %v824
        %v841 = vmul.f32 %v825, %v825
        %v842 = vmul.f32 %v826, %v826
        %v843 = vmul.f32 %v827, %v827
        %v844 = vmul.f32 %v828, %v828
        %v845 = vmul.f32 %v829, %v829
        %v846 = vadd.f32 %v730, %v830
        %v847 = vadd.f32 %v731, %v831
        %v848 = vadd.f32 %v732, %v832
        %v849 = vadd.f32 %v733, %v833
        %v850 = vadd.f32 %v734, %v834
        %v851 = vadd.f32 %v735, %v835
        %v852 = vadd.f32 %v736, %v836
        %v853 = vadd.f32 %v737, %v837
        %v854 = vadd.f32 %v738, %v838
        %v855 = vadd.f32 %v739, %v839
        %v856 = vadd.f32 %v740, %v840
        %v857 = vadd.f32 %v741, %v841
        %v858 = vadd.f32 %v742, %v842
        %v859 = vadd.f32 %v743, %v843
        %v860 = vadd.f32 %v744, %v844
        %v861 = vadd.f32 %v745, %v845
        %v862 = vlaneseq
        %v863 = vshrl.u32 %v862, 7
        %v864 = vsub.s32 2, %v863
        %v865 = vrot.slane %v613, %v864
        %866 = vset.pattern.permute.xlu0 2
        %867 = vperm.xlu0 %866, %v597
        %v868 = vpop.permute.xlu0 %867
        %870 = vset.pattern.permute.xlu0 2
        %871 = vperm.xlu0 %870, %v598
        %v872 = vpop.permute.xlu0 %871
        %874 = vset.pattern.permute.xlu0 2
        %875 = vperm.xlu0 %874, %v599
        %v876 = vpop.permute.xlu0 %875
        %878 = vset.pattern.permute.xlu0 2
        %879 = vperm.xlu0 %878, %v600
        %v880 = vpop.permute.xlu0 %879
        %882 = vset.pattern.permute.xlu0 2
        %883 = vperm.xlu0 %882, %v601
        %v884 = vpop.permute.xlu0 %883
        %886 = vset.pattern.permute.xlu0 2
        %887 = vperm.xlu0 %886, %v602
        %v888 = vpop.permute.xlu0 %887
        %890 = vset.pattern.permute.xlu0 2
        %891 = vperm.xlu0 %890, %v603
        %v892 = vpop.permute.xlu0 %891
        %894 = vset.pattern.permute.xlu0 2
        %895 = vperm.xlu0 %894, %v604
        %v896 = vpop.permute.xlu0 %895
        %898 = vset.pattern.permute.xlu0 2
        %899 = vperm.xlu0 %898, %v605
        %v900 = vpop.permute.xlu0 %899
        %902 = vset.pattern.permute.xlu0 2
        %903 = vperm.xlu0 %902, %v606
        %v904 = vpop.permute.xlu0 %903
        %906 = vset.pattern.permute.xlu0 2
        %907 = vperm.xlu0 %906, %v607
        %v908 = vpop.permute.xlu0 %907
        %910 = vset.pattern.permute.xlu0 2
        %911 = vperm.xlu0 %910, %v608
        %v912 = vpop.permute.xlu0 %911
        %914 = vset.pattern.permute.xlu0 2
        %915 = vperm.xlu0 %914, %v609
        %v916 = vpop.permute.xlu0 %915
        %918 = vset.pattern.permute.xlu0 2
        %919 = vperm.xlu0 %918, %v610
        %v920 = vpop.permute.xlu0 %919
        %922 = vset.pattern.permute.xlu0 2
        %923 = vperm.xlu0 %922, %v611
        %v924 = vpop.permute.xlu0 %923
        %926 = vset.pattern.permute.xlu0 2
        %927 = vperm.xlu0 %926, %v612
        %v928 = vpop.permute.xlu0 %927
        %v930 = vsub.f32 %v865, %v868
        %v931 = vsub.f32 %v865, %v872
        %v932 = vsub.f32 %v865, %v876
        %v933 = vsub.f32 %v865, %v880
        %v934 = vsub.f32 %v865, %v884
        %v935 = vsub.f32 %v865, %v888
        %v936 = vsub.f32 %v865, %v892
        %v937 = vsub.f32 %v865, %v896
        %v938 = vsub.f32 %v865, %v900
        %v939 = vsub.f32 %v865, %v904
        %v940 = vsub.f32 %v865, %v908
        %v941 = vsub.f32 %v865, %v912
        %v942 = vsub.f32 %v865, %v916
        %v943 = vsub.f32 %v865, %v920
        %v944 = vsub.f32 %v865, %v924
        %v945 = vsub.f32 %v865, %v928
        %v946 = vmul.f32 %v930, %v930
        %v947 = vmul.f32 %v931, %v931
        %v948 = vmul.f32 %v932, %v932
        %v949 = vmul.f32 %v933, %v933
        %v950 = vmul.f32 %v934, %v934
        %v951 = vmul.f32 %v935, %v935
        %v952 = vmul.f32 %v936, %v936
        %v953 = vmul.f32 %v937, %v937
        %v954 = vmul.f32 %v938, %v938
        %v955 = vmul.f32 %v939, %v939
        %v956 = vmul.f32 %v940, %v940
        %v957 = vmul.f32 %v941, %v941
        %v958 = vmul.f32 %v942, %v942
        %v959 = vmul.f32 %v943, %v943
        %v960 = vmul.f32 %v944, %v944
        %v961 = vmul.f32 %v945, %v945
        %v962 = vadd.f32 %v846, %v946
        %v963 = vadd.f32 %v847, %v947
        %v964 = vadd.f32 %v848, %v948
        %v965 = vadd.f32 %v849, %v949
        %v966 = vadd.f32 %v850, %v950
        %v967 = vadd.f32 %v851, %v951
        %v968 = vadd.f32 %v852, %v952
        %v969 = vadd.f32 %v853, %v953
        %v970 = vadd.f32 %v854, %v954
        %v971 = vadd.f32 %v855, %v955
        %v972 = vadd.f32 %v856, %v956
        %v973 = vadd.f32 %v857, %v957
        %v974 = vadd.f32 %v858, %v958
        %v975 = vadd.f32 %v859, %v959
        %v976 = vadd.f32 %v860, %v960
        %v977 = vadd.f32 %v861, %v961
        %v978 = vadd.f32 %v962, %v963
        %v979 = vadd.f32 %v978, %v964
        %v980 = vadd.f32 %v979, %v965
        %v981 = vadd.f32 %v980, %v966
        %v982 = vadd.f32 %v981, %v967
        %v983 = vadd.f32 %v982, %v968
        %v984 = vadd.f32 %v983, %v969
        %v985 = vadd.f32 %v984, %v970
        %v986 = vadd.f32 %v985, %v971
        %v987 = vadd.f32 %v986, %v972
        %v988 = vadd.f32 %v987, %v973
        %v989 = vadd.f32 %v988, %v974
        %v990 = vadd.f32 %v989, %v975
        %v991 = vadd.f32 %v990, %v976
        %v992 = vadd.f32 %v991, %v977
        %v993 = vrot.slane %v992, 4
        %v994 = vadd.f32 %v992, %v993
        %v995 = vrot.slane %v994, 2
        %v996 = vadd.f32 %v994, %v995
        %v997 = vrot.slane %v996, 1
        %v998 = vadd.f32 %v996, %v997
        %v999 = vadd.f32 %v998, 1e-09
        %v1000 = vrcp.pop %v999
        %v1001 = vmul.f32 %v962, %v1000
        %v1002 = vmul.f32 %v963, %v1000
        %v1003 = vmul.f32 %v964, %v1000
        %v1004 = vmul.f32 %v965, %v1000
        %v1005 = vmul.f32 %v966, %v1000
        %v1006 = vmul.f32 %v967, %v1000
        %v1007 = vmul.f32 %v968, %v1000
        %v1008 = vmul.f32 %v969, %v1000
        %v1009 = vmul.f32 %v970, %v1000
        %v1010 = vmul.f32 %v971, %v1000
        %v1011 = vmul.f32 %v972, %v1000
        %v1012 = vmul.f32 %v973, %v1000
        %v1013 = vmul.f32 %v974, %v1000
        %v1014 = vmul.f32 %v975, %v1000
        %v1015 = vmul.f32 %v976, %v1000
        %v1016 = vmul.f32 %v977, %v1000
        %vm1017 = vcmp.le.f32.partialorder %v1001, 0.1
        %vm1018 = vcmp.le.f32.partialorder %v1002, 0.1
        %vm1019 = vcmp.le.f32.partialorder %v1003, 0.1
        %vm1020 = vcmp.le.f32.partialorder %v1004, 0.1
        %vm1021 = vcmp.le.f32.partialorder %v1005, 0.1
        %vm1022 = vcmp.le.f32.partialorder %v1006, 0.1
        %vm1023 = vcmp.le.f32.partialorder %v1007, 0.1
        %vm1024 = vcmp.le.f32.partialorder %v1008, 0.1
        %vm1025 = vcmp.le.f32.partialorder %v1009, 0.1
        %vm1026 = vcmp.le.f32.partialorder %v1010, 0.1
        %vm1027 = vcmp.le.f32.partialorder %v1011, 0.1
        %vm1028 = vcmp.le.f32.partialorder %v1012, 0.1
        %vm1029 = vcmp.le.f32.partialorder %v1013, 0.1
        %vm1030 = vcmp.le.f32.partialorder %v1014, 0.1
        %vm1031 = vcmp.le.f32.partialorder %v1015, 0.1
        %vm1032 = vcmp.le.f32.partialorder %v1016, 0.1
        %v1033 = vpack.c.bf16 %v582, %v581
        %v1034 = vpack.c.bf16 %v584, %v583
        %v1035 = vpack.c.bf16 %v586, %v585
        %v1036 = vpack.c.bf16 %v588, %v587
        %vm1037 = vcmask 523264
        %v1039 = vsel %vm1037, %v522, 0
        %1041 = vmatprep.subr.bf16.mxu0 0
        %1042 = vmatpush1.bf16.msra.mxu0 %v1033
        %1043 = vmatprep.subr.bf16.mxu0 0
        %1044 = vmatpush1.bf16.msra.mxu0 %v1034
        %1045 = vmatprep.subr.bf16.mxu0 0
        %1046 = vmatpush1.bf16.msra.mxu0 %v1035
        %1047 = vmatprep.subr.bf16.mxu0 0
        %1048 = vmatpush1.bf16.msra.mxu0 %v1036
        %1049 = vmatprep.subr.bf16.mxu0 0
        %1050 = vmatpush1.bf16.msra.mxu0 0
        %1051 = vmatprep.subr.bf16.mxu0 0
        %1052 = vmatpush1.bf16.msra.mxu0 0
        %1053 = vmatprep.subr.bf16.mxu0 0
        %1054 = vmatpush1.bf16.msra.mxu0 0
        %1055 = vmatprep.subr.bf16.mxu0 0
        %1056 = vmatpush1.bf16.msra.mxu0 0
        %1057 = vmatprep.subr.bf16.mxu0 0
        %1058 = vmatpush1.bf16.msra.mxu0 0
        %1059 = vmatprep.subr.bf16.mxu0 0
        %1060 = vmatpush1.bf16.msra.mxu0 0
        %1061 = vmatprep.subr.bf16.mxu0 0
        %1062 = vmatpush1.bf16.msra.mxu0 0
        %1063 = vmatprep.subr.bf16.mxu0 0
        %1064 = vmatpush1.bf16.msra.mxu0 0
        %1065 = vmatprep.subr.bf16.mxu0 0
        %1066 = vmatpush1.bf16.msra.mxu0 0
        %1067 = vmatprep.subr.bf16.mxu0 0
        %1068 = vmatpush1.bf16.msra.mxu0 0
        %1069 = vmatprep.subr.bf16.mxu0 0
        %1070 = vmatpush1.bf16.msra.mxu0 0
        %1071 = vmatprep.subr.bf16.mxu0 0
        %1072 = vmatpush1.bf16.msra.mxu0 0
        %1073 = vmatprep.mubr.bf16.mxu0 0
        %1074 = vmatmul.mubr.bf16.gmra.mrb[0].mxu0 %v1039
        %v1075 = vpop.f32.mrb[0].mxu0
        %v1076 = vadd.f32 0.0, %v1075
        %v1077 = vpop.f32.mrb[0].mxu0
        %v1078 = vpop.f32.mrb[0].mxu0
        %v1079 = vadd.f32 0.0, %v1078
        %v1080 = vpop.f32.mrb[0].mxu0
        %1081 = vdwg.mxu0
        %v1082 = vpack.c.bf16 %v1079, %v1076
        %1083 = vxpose.xlu0.c.b16.start [1/8] %v1082, 128
        %1084 = vxpose.xlu0.c.b16.cont [2/8] 0, 128
        %1085 = vxpose.xlu0.c.b16.cont [3/8] 0, 128
        %1086 = vxpose.xlu0.c.b16.cont [4/8] 0, 128
        %1087 = vxpose.xlu0.c.b16.cont [5/8] 0, 128
        %1088 = vxpose.xlu0.c.b16.cont [6/8] 0, 128
        %1089 = vxpose.xlu0.c.b16.cont [7/8] 0, 128
        %1090 = vxpose.xlu0.c.b16.end [8/8] 0, 128
        %v1091 = vpop.trf.xlu0
        %v1092 = vpop.trf.xlu0
        %v1093 = vpop.trf.xlu0
        %v1094 = vpop.trf.xlu0
        %v1095 = vpop.trf.xlu0
        %v1096 = vpop.trf.xlu0
        %v1097 = vpop.trf.xlu0
        %v1098 = vpop.trf.xlu0
        %vm1099 = vcmask 130048
        %v1101 = vsel %vm1099, %v1091, 0
        %v1104 = vsel %vm1099, %v1092, 0
        %v1107 = vsel %vm1099, %v1093, 0
        %v1110 = vsel %vm1099, %v1094, 0
        %v1113 = vsel %vm1099, %v1095, 0
        %v1116 = vsel %vm1099, %v1096, 0
        %v1119 = vsel %vm1099, %v1097, 0
        %v1122 = vsel %vm1099, %v1098, 0
        %1124 = vmatprep.subr.bf16.mxu0 0
        %1125 = vmatpush1.bf16.msra.mxu0 %v1082
        %1126 = vmatprep.subr.bf16.mxu0 0
        %1127 = vmatpush1.bf16.msra.mxu0 0
        %1128 = vmatprep.subr.bf16.mxu0 0
        %1129 = vmatpush1.bf16.msra.mxu0 0
        %1130 = vmatprep.subr.bf16.mxu0 0
        %1131 = vmatpush1.bf16.msra.mxu0 0
        %1132 = vmatprep.subr.bf16.mxu0 0
        %1133 = vmatpush1.bf16.msra.mxu0 0
        %1134 = vmatprep.subr.bf16.mxu0 0
        %1135 = vmatpush1.bf16.msra.mxu0 0
        %1136 = vmatprep.subr.bf16.mxu0 0
        %1137 = vmatpush1.bf16.msra.mxu0 0
        %1138 = vmatprep.subr.bf16.mxu0 0
        %1139 = vmatpush1.bf16.msra.mxu0 0
        %1140 = vmatprep.subr.bf16.mxu0 0
        %1141 = vmatpush1.bf16.msra.mxu0 0
        %1142 = vmatprep.subr.bf16.mxu0 0
        %1143 = vmatpush1.bf16.msra.mxu0 0
        %1144 = vmatprep.subr.bf16.mxu0 0
        %1145 = vmatpush1.bf16.msra.mxu0 0
        %1146 = vmatprep.subr.bf16.mxu0 0
        %1147 = vmatpush1.bf16.msra.mxu0 0
        %1148 = vmatprep.subr.bf16.mxu0 0
        %1149 = vmatpush1.bf16.msra.mxu0 0
        %1150 = vmatprep.subr.bf16.mxu0 0
        %1151 = vmatpush1.bf16.msra.mxu0 0
        %1152 = vmatprep.subr.bf16.mxu0 0
        %1153 = vmatpush1.bf16.msra.mxu0 0
        %1154 = vmatprep.subr.bf16.mxu0 0
        %1155 = vmatpush1.bf16.msra.mxu0 0
        %1156 = vmatprep.mubr.bf16.mxu0 0
        %1157 = vmatmul.mubr.bf16.gmra.mrb[0].mxu0 %v1101
        %v1158 = vpop.f32.mrb[0].mxu0
        %v1159 = vadd.f32 0.0, %v1158
        %v1160 = vpop.f32.mrb[0].mxu0
        %v1161 = vpop.f32.mrb[0].mxu0
        %v1162 = vadd.f32 0.0, %v1161
        %v1163 = vpop.f32.mrb[0].mxu0
        %1164 = vmatprep.mubr.bf16.mxu0 0
        %1165 = vmatmul.mubr.bf16.gmra.mrb[0].mxu0 %v1104
        %v1166 = vpop.f32.mrb[0].mxu0
        %v1167 = vadd.f32 0.0, %v1166
        %v1168 = vpop.f32.mrb[0].mxu0
        %v1169 = vpop.f32.mrb[0].mxu0
        %v1170 = vadd.f32 0.0, %v1169
        %v1171 = vpop.f32.mrb[0].mxu0
        %1172 = vmatprep.mubr.bf16.mxu0 0
        %1173 = vmatmul.mubr.bf16.gmra.mrb[0].mxu0 %v1107
        %v1174 = vpop.f32.mrb[0].mxu0
        %v1175 = vadd.f32 0.0, %v1174
        %v1176 = vpop.f32.mrb[0].mxu0
        %v1177 = vpop.f32.mrb[0].mxu0
        %v1178 = vadd.f32 0.0, %v1177
        %v1179 = vpop.f32.mrb[0].mxu0
        %1180 = vmatprep.mubr.bf16.mxu0 0
        %1181 = vmatmul.mubr.bf16.gmra.mrb[0].mxu0 %v1110
        %v1182 = vpop.f32.mrb[0].mxu0
        %v1183 = vadd.f32 0.0, %v1182
        %v1184 = vpop.f32.mrb[0].mxu0
        %v1185 = vpop.f32.mrb[0].mxu0
        %v1186 = vadd.f32 0.0, %v1185
        %v1187 = vpop.f32.mrb[0].mxu0
        %1188 = vmatprep.mubr.bf16.mxu0 0
        %1189 = vmatmul.mubr.bf16.gmra.mrb[0].mxu0 %v1113
        %v1190 = vpop.f32.mrb[0].mxu0
        %v1191 = vadd.f32 0.0, %v1190
        %v1192 = vpop.f32.mrb[0].mxu0
        %v1193 = vpop.f32.mrb[0].mxu0
        %v1194 = vadd.f32 0.0, %v1193
        %v1195 = vpop.f32.mrb[0].mxu0
        %1196 = vmatprep.mubr.bf16.mxu0 0
        %1197 = vmatmul.mubr.bf16.gmra.mrb[0].mxu0 %v1116
        %v1198 = vpop.f32.mrb[0].mxu0
        %v1199 = vadd.f32 0.0, %v1198
        %v1200 = vpop.f32.mrb[0].mxu0
        %v1201 = vpop.f32.mrb[0].mxu0
        %v1202 = vadd.f32 0.0, %v1201
        %v1203 = vpop.f32.mrb[0].mxu0
        %1204 = vmatprep.mubr.bf16.mxu0 0
        %1205 = vmatmul.mubr.bf16.gmra.mrb[0].mxu0 %v1119
        %v1206 = vpop.f32.mrb[0].mxu0
        %v1207 = vadd.f32 0.0, %v1206
        %v1208 = vpop.f32.mrb[0].mxu0
        %v1209 = vpop.f32.mrb[0].mxu0
        %v1210 = vadd.f32 0.0, %v1209
        %v1211 = vpop.f32.mrb[0].mxu0
        %1212 = vmatprep.mubr.bf16.mxu0 0
        %1213 = vmatmul.mubr.bf16.gmra.mrb[0].mxu0 %v1122
        %v1214 = vpop.f32.mrb[0].mxu0
        %v1215 = vadd.f32 0.0, %v1214
        %v1216 = vpop.f32.mrb[0].mxu0
        %v1217 = vpop.f32.mrb[0].mxu0
        %v1218 = vadd.f32 0.0, %v1217
        %v1219 = vpop.f32.mrb[0].mxu0
        %1220 = vdwg.mxu0
        %1221 = vmax.xlane.f32.xlu0 %v1159
        %v1222 = vpop.xlane.xlu0 %1221
        %1223 = vmax.xlane.f32.xlu0 %v1162
        %v1224 = vpop.xlane.xlu0 %1223
        %1225 = vmax.xlane.f32.xlu0 %v1167
        %v1226 = vpop.xlane.xlu0 %1225
        %1227 = vmax.xlane.f32.xlu0 %v1170
        %v1228 = vpop.xlane.xlu0 %1227
        %1229 = vmax.xlane.f32.xlu0 %v1175
        %v1230 = vpop.xlane.xlu0 %1229
        %1231 = vmax.xlane.f32.xlu0 %v1178
        %v1232 = vpop.xlane.xlu0 %1231
        %1233 = vmax.xlane.f32.xlu0 %v1183
        %v1234 = vpop.xlane.xlu0 %1233
        %1235 = vmax.xlane.f32.xlu0 %v1186
        %v1236 = vpop.xlane.xlu0 %1235
        %1237 = vmax.xlane.f32.xlu0 %v1191
        %v1238 = vpop.xlane.xlu0 %1237
        %1239 = vmax.xlane.f32.xlu0 %v1194
        %v1240 = vpop.xlane.xlu0 %1239
        %1241 = vmax.xlane.f32.xlu0 %v1199
        %v1242 = vpop.xlane.xlu0 %1241
        %1243 = vmax.xlane.f32.xlu0 %v1202
        %v1244 = vpop.xlane.xlu0 %1243
        %1245 = vmax.xlane.f32.xlu0 %v1207
        %v1246 = vpop.xlane.xlu0 %1245
        %1247 = vmax.xlane.f32.xlu0 %v1210
        %v1248 = vpop.xlane.xlu0 %1247
        %1249 = vmax.xlane.f32.xlu0 %v1215
        %v1250 = vpop.xlane.xlu0 %1249
        %1251 = vmax.xlane.f32.xlu0 %v1218
        %v1252 = vpop.xlane.xlu0 %1251
        %v1253 = vsub.f32 %v1159, %v1222
        %v1254 = vsub.f32 %v1162, %v1224
        %v1255 = vsub.f32 %v1167, %v1226
        %v1256 = vsub.f32 %v1170, %v1228
        %v1257 = vsub.f32 %v1175, %v1230
        %v1258 = vsub.f32 %v1178, %v1232
        %v1259 = vsub.f32 %v1183, %v1234
        %v1260 = vsub.f32 %v1186, %v1236
        %v1261 = vsub.f32 %v1191, %v1238
        %v1262 = vsub.f32 %v1194, %v1240
        %v1263 = vsub.f32 %v1199, %v1242
        %v1264 = vsub.f32 %v1202, %v1244
        %v1265 = vsub.f32 %v1207, %v1246
        %v1266 = vsub.f32 %v1210, %v1248
        %v1267 = vsub.f32 %v1215, %v1250
        %v1268 = vsub.f32 %v1218, %v1252
        %v1269 = vmul.f32 %v1253, 1.442695
        %v1270 = vpow.pop %v1269
        %v1271 = vmul.f32 %v1254, 1.442695
        %v1272 = vpow.pop %v1271
        %v1273 = vmul.f32 %v1255, 1.442695
        %v1274 = vpow.pop %v1273
        %v1275 = vmul.f32 %v1256, 1.442695
        %v1276 = vpow.pop %v1275
        %v1277 = vmul.f32 %v1257, 1.442695
        %v1278 = vpow.pop %v1277
        %v1279 = vmul.f32 %v1258, 1.442695
        %v1280 = vpow.pop %v1279
        %v1281 = vmul.f32 %v1259, 1.442695
        %v1282 = vpow.pop %v1281
        %v1283 = vmul.f32 %v1260, 1.442695
        %v1284 = vpow.pop %v1283
        %v1285 = vmul.f32 %v1261, 1.442695
        %v1286 = vpow.pop %v1285
        %v1287 = vmul.f32 %v1262, 1.442695
        %v1288 = vpow.pop %v1287
        %v1289 = vmul.f32 %v1263, 1.442695
        %v1290 = vpow.pop %v1289
        %v1291 = vmul.f32 %v1264, 1.442695
        %v1292 = vpow.pop %v1291
        %v1293 = vmul.f32 %v1265, 1.442695
        %v1294 = vpow.pop %v1293
        %v1295 = vmul.f32 %v1266, 1.442695
        %v1296 = vpow.pop %v1295
        %v1297 = vmul.f32 %v1267, 1.442695
        %v1298 = vpow.pop %v1297
        %v1299 = vmul.f32 %v1268, 1.442695
        %v1300 = vpow.pop %v1299
        %1301 = vadd.xlane.f32.xlu0 %v1270
        %v1302 = vpop.xlane.xlu0 %1301
        %1303 = vadd.xlane.f32.xlu0 %v1272
        %v1304 = vpop.xlane.xlu0 %1303
        %1305 = vadd.xlane.f32.xlu0 %v1274
        %v1306 = vpop.xlane.xlu0 %1305
        %1307 = vadd.xlane.f32.xlu0 %v1276
        %v1308 = vpop.xlane.xlu0 %1307
        %1309 = vadd.xlane.f32.xlu0 %v1278
        %v1310 = vpop.xlane.xlu0 %1309
        %1311 = vadd.xlane.f32.xlu0 %v1280
        %v1312 = vpop.xlane.xlu0 %1311
        %1313 = vadd.xlane.f32.xlu0 %v1282
        %v1314 = vpop.xlane.xlu0 %1313
        %1315 = vadd.xlane.f32.xlu0 %v1284
        %v1316 = vpop.xlane.xlu0 %1315
        %1317 = vadd.xlane.f32.xlu0 %v1286
        %v1318 = vpop.xlane.xlu0 %1317
        %1319 = vadd.xlane.f32.xlu0 %v1288
        %v1320 = vpop.xlane.xlu0 %1319
        %1321 = vadd.xlane.f32.xlu0 %v1290
        %v1322 = vpop.xlane.xlu0 %1321
        %1323 = vadd.xlane.f32.xlu0 %v1292
        %v1324 = vpop.xlane.xlu0 %1323
        %1325 = vadd.xlane.f32.xlu0 %v1294
        %v1326 = vpop.xlane.xlu0 %1325
        %1327 = vadd.xlane.f32.xlu0 %v1296
        %v1328 = vpop.xlane.xlu0 %1327
        %1329 = vadd.xlane.f32.xlu0 %v1298
        %v1330 = vpop.xlane.xlu0 %1329
        %1331 = vadd.xlane.f32.xlu0 %v1300
        %v1332 = vpop.xlane.xlu0 %1331
        %v1333 = vrcp.pop %v1302
        %v1334 = vrcp.pop %v1304
        %v1335 = vrcp.pop %v1306
        %v1336 = vrcp.pop %v1308
        %v1337 = vrcp.pop %v1310
        %v1338 = vrcp.pop %v1312
        %v1339 = vrcp.pop %v1314
        %v1340 = vrcp.pop %v1316
        %v1341 = vrcp.pop %v1318
        %v1342 = vrcp.pop %v1320
        %v1343 = vrcp.pop %v1322
        %v1344 = vrcp.pop %v1324
        %v1345 = vrcp.pop %v1326
        %v1346 = vrcp.pop %v1328
        %v1347 = vrcp.pop %v1330
        %v1348 = vrcp.pop %v1332
        %v1349 = vmul.f32 %v1270, %v1333
        %v1350 = vmul.f32 %v1272, %v1334
        %v1351 = vmul.f32 %v1274, %v1335
        %v1352 = vmul.f32 %v1276, %v1336
        %v1353 = vmul.f32 %v1278, %v1337
        %v1354 = vmul.f32 %v1280, %v1338
        %v1355 = vmul.f32 %v1282, %v1339
        %v1356 = vmul.f32 %v1284, %v1340
        %v1357 = vmul.f32 %v1286, %v1341
        %v1358 = vmul.f32 %v1288, %v1342
        %v1359 = vmul.f32 %v1290, %v1343
        %v1360 = vmul.f32 %v1292, %v1344
        %v1361 = vmul.f32 %v1294, %v1345
        %v1362 = vmul.f32 %v1296, %v1346
        %v1363 = vmul.f32 %v1298, %v1347
        %v1364 = vmul.f32 %v1300, %v1348
        %v1365 = vadd.f32 %v1349, %v1350
        %v1366 = vadd.f32 %v1365, %v1351
        %v1367 = vadd.f32 %v1366, %v1352
        %v1368 = vadd.f32 %v1367, %v1353
        %v1369 = vadd.f32 %v1368, %v1354
        %v1370 = vadd.f32 %v1369, %v1355
        %v1371 = vadd.f32 %v1370, %v1356
        %v1372 = vadd.f32 %v1371, %v1357
        %v1373 = vadd.f32 %v1372, %v1358
        %v1374 = vadd.f32 %v1373, %v1359
        %v1375 = vadd.f32 %v1374, %v1360
        %v1376 = vadd.f32 %v1375, %v1361
        %v1377 = vadd.f32 %v1376, %v1362
        %v1378 = vadd.f32 %v1377, %v1363
        %v1379 = vadd.f32 %v1378, %v1364
        %v1380 = vrot.slane %v1379, 4
        %v1381 = vadd.f32 %v1379, %v1380
        %v1382 = vrot.slane %v1381, 2
        %v1383 = vadd.f32 %v1381, %v1382
        %v1384 = vrot.slane %v1383, 1
        %v1385 = vadd.f32 %v1383, %v1384
        %v1386 = vadd.f32 %v1385, 1e-09
        %v1387 = vrcp.pop %v1386
        %v1388 = vmul.f32 %v1349, %v1387
        %v1389 = vmul.f32 %v1350, %v1387
        %v1390 = vmul.f32 %v1351, %v1387
        %v1391 = vmul.f32 %v1352, %v1387
        %v1392 = vmul.f32 %v1353, %v1387
        %v1393 = vmul.f32 %v1354, %v1387
        %v1394 = vmul.f32 %v1355, %v1387
        %v1395 = vmul.f32 %v1356, %v1387
        %v1396 = vmul.f32 %v1357, %v1387
        %v1397 = vmul.f32 %v1358, %v1387
        %v1398 = vmul.f32 %v1359, %v1387
        %v1399 = vmul.f32 %v1360, %v1387
        %v1400 = vmul.f32 %v1361, %v1387
        %v1401 = vmul.f32 %v1362, %v1387
        %v1402 = vmul.f32 %v1363, %v1387
        %v1403 = vmul.f32 %v1364, %v1387
        %v1404 = vsel %vm1017, %v1388, 0.0
        %v1405 = vsel %vm1018, %v1389, 0.0
        %v1406 = vsel %vm1019, %v1390, 0.0
        %v1407 = vsel %vm1020, %v1391, 0.0
        %v1408 = vsel %vm1021, %v1392, 0.0
        %v1409 = vsel %vm1022, %v1393, 0.0
        %v1410 = vsel %vm1023, %v1394, 0.0
        %v1411 = vsel %vm1024, %v1395, 0.0
        %v1412 = vsel %vm1025, %v1396, 0.0
        %v1413 = vsel %vm1026, %v1397, 0.0
        %v1414 = vsel %vm1027, %v1398, 0.0
        %v1415 = vsel %vm1028, %v1399, 0.0
        %v1416 = vsel %vm1029, %v1400, 0.0
        %v1417 = vsel %vm1030, %v1401, 0.0
        %v1418 = vsel %vm1031, %v1402, 0.0
        %v1419 = vsel %vm1032, %v1403, 0.0
        %1420 = vmax.xlane.f32.xlu0 %v1404
        %v1421 = vpop.xlane.xlu0 %1420
        %1422 = vmax.xlane.f32.xlu0 %v1405
        %v1423 = vpop.xlane.xlu0 %1422
        %1424 = vmax.xlane.f32.xlu0 %v1406
        %v1425 = vpop.xlane.xlu0 %1424
        %1426 = vmax.xlane.f32.xlu0 %v1407
        %v1427 = vpop.xlane.xlu0 %1426
        %1428 = vmax.xlane.f32.xlu0 %v1408
        %v1429 = vpop.xlane.xlu0 %1428
        %1430 = vmax.xlane.f32.xlu0 %v1409
        %v1431 = vpop.xlane.xlu0 %1430
        %1432 = vmax.xlane.f32.xlu0 %v1410
        %v1433 = vpop.xlane.xlu0 %1432
        %1434 = vmax.xlane.f32.xlu0 %v1411
        %v1435 = vpop.xlane.xlu0 %1434
        %1436 = vmax.xlane.f32.xlu0 %v1412
        %v1437 = vpop.xlane.xlu0 %1436
        %1438 = vmax.xlane.f32.xlu0 %v1413
        %v1439 = vpop.xlane.xlu0 %1438
        %1440 = vmax.xlane.f32.xlu0 %v1414
        %v1441 = vpop.xlane.xlu0 %1440
        %1442 = vmax.xlane.f32.xlu0 %v1415
        %v1443 = vpop.xlane.xlu0 %1442
        %1444 = vmax.xlane.f32.xlu0 %v1416
        %v1445 = vpop.xlane.xlu0 %1444
        %1446 = vmax.xlane.f32.xlu0 %v1417
        %v1447 = vpop.xlane.xlu0 %1446
        %1448 = vmax.xlane.f32.xlu0 %v1418
        %v1449 = vpop.xlane.xlu0 %1448
        %1450 = vmax.xlane.f32.xlu0 %v1419
        %v1451 = vpop.xlane.xlu0 %1450
        %v1452 = vsub.f32 %v1404, %v1421
        %v1453 = vsub.f32 %v1405, %v1423
        %v1454 = vsub.f32 %v1406, %v1425
        %v1455 = vsub.f32 %v1407, %v1427
        %v1456 = vsub.f32 %v1408, %v1429
        %v1457 = vsub.f32 %v1409, %v1431
        %v1458 = vsub.f32 %v1410, %v1433
        %v1459 = vsub.f32 %v1411, %v1435
        %v1460 = vsub.f32 %v1412, %v1437
        %v1461 = vsub.f32 %v1413, %v1439
        %v1462 = vsub.f32 %v1414, %v1441
        %v1463 = vsub.f32 %v1415, %v1443
        %v1464 = vsub.f32 %v1416, %v1445
        %v1465 = vsub.f32 %v1417, %v1447
        %v1466 = vsub.f32 %v1418, %v1449
        %v1467 = vsub.f32 %v1419, %v1451
        %v1468 = vmul.f32 %v1452, 1.442695
        %v1469 = vpow.pop %v1468
        %v1470 = vmul.f32 %v1453, 1.442695
        %v1471 = vpow.pop %v1470
        %v1472 = vmul.f32 %v1454, 1.442695
        %v1473 = vpow.pop %v1472
        %v1474 = vmul.f32 %v1455, 1.442695
        %v1475 = vpow.pop %v1474
        %v1476 = vmul.f32 %v1456, 1.442695
        %v1477 = vpow.pop %v1476
        %v1478 = vmul.f32 %v1457, 1.442695
        %v1479 = vpow.pop %v1478
        %v1480 = vmul.f32 %v1458, 1.442695
        %v1481 = vpow.pop %v1480
        %v1482 = vmul.f32 %v1459, 1.442695
        %v1483 = vpow.pop %v1482
        %v1484 = vmul.f32 %v1460, 1.442695
        %v1485 = vpow.pop %v1484
        %v1486 = vmul.f32 %v1461, 1.442695
        %v1487 = vpow.pop %v1486
        %v1488 = vmul.f32 %v1462, 1.442695
        %v1489 = vpow.pop %v1488
        %v1490 = vmul.f32 %v1463, 1.442695
        %v1491 = vpow.pop %v1490
        %v1492 = vmul.f32 %v1464, 1.442695
        %v1493 = vpow.pop %v1492
        %v1494 = vmul.f32 %v1465, 1.442695
        %v1495 = vpow.pop %v1494
        %v1496 = vmul.f32 %v1466, 1.442695
        %v1497 = vpow.pop %v1496
        %v1498 = vmul.f32 %v1467, 1.442695
        %v1499 = vpow.pop %v1498
        %1500 = vadd.xlane.f32.xlu0 %v1469
        %v1501 = vpop.xlane.xlu0 %1500
        %1502 = vadd.xlane.f32.xlu0 %v1471
        %v1503 = vpop.xlane.xlu0 %1502
        %1504 = vadd.xlane.f32.xlu0 %v1473
        %v1505 = vpop.xlane.xlu0 %1504
        %1506 = vadd.xlane.f32.xlu0 %v1475
        %v1507 = vpop.xlane.xlu0 %1506
        %1508 = vadd.xlane.f32.xlu0 %v1477
        %v1509 = vpop.xlane.xlu0 %1508
        %1510 = vadd.xlane.f32.xlu0 %v1479
        %v1511 = vpop.xlane.xlu0 %1510
        %1512 = vadd.xlane.f32.xlu0 %v1481
        %v1513 = vpop.xlane.xlu0 %1512
        %1514 = vadd.xlane.f32.xlu0 %v1483
        %v1515 = vpop.xlane.xlu0 %1514
        %1516 = vadd.xlane.f32.xlu0 %v1485
        %v1517 = vpop.xlane.xlu0 %1516
        %1518 = vadd.xlane.f32.xlu0 %v1487
        %v1519 = vpop.xlane.xlu0 %1518
        %1520 = vadd.xlane.f32.xlu0 %v1489
        %v1521 = vpop.xlane.xlu0 %1520
        %1522 = vadd.xlane.f32.xlu0 %v1491
        %v1523 = vpop.xlane.xlu0 %1522
        %1524 = vadd.xlane.f32.xlu0 %v1493
        %v1525 = vpop.xlane.xlu0 %1524
        %1526 = vadd.xlane.f32.xlu0 %v1495
        %v1527 = vpop.xlane.xlu0 %1526
        %1528 = vadd.xlane.f32.xlu0 %v1497
        %v1529 = vpop.xlane.xlu0 %1528
        %1530 = vadd.xlane.f32.xlu0 %v1499
        %v1531 = vpop.xlane.xlu0 %1530
        %v1532 = vrcp.pop %v1501
        %v1533 = vrcp.pop %v1503
        %v1534 = vrcp.pop %v1505
        %v1535 = vrcp.pop %v1507
        %v1536 = vrcp.pop %v1509
        %v1537 = vrcp.pop %v1511
        %v1538 = vrcp.pop %v1513
        %v1539 = vrcp.pop %v1515
        %v1540 = vrcp.pop %v1517
        %v1541 = vrcp.pop %v1519
        %v1542 = vrcp.pop %v1521
        %v1543 = vrcp.pop %v1523
        %v1544 = vrcp.pop %v1525
        %v1545 = vrcp.pop %v1527
        %v1546 = vrcp.pop %v1529
        %v1547 = vrcp.pop %v1531
        %v1548 = vmul.f32 %v1469, %v1532
        %v1549 = vmul.f32 %v1471, %v1533
        %v1550 = vmul.f32 %v1473, %v1534
        %v1551 = vmul.f32 %v1475, %v1535
        %v1552 = vmul.f32 %v1477, %v1536
        %v1553 = vmul.f32 %v1479, %v1537
        %v1554 = vmul.f32 %v1481, %v1538
        %v1555 = vmul.f32 %v1483, %v1539
        %v1556 = vmul.f32 %v1485, %v1540
        %v1557 = vmul.f32 %v1487, %v1541
        %v1558 = vmul.f32 %v1489, %v1542
        %v1559 = vmul.f32 %v1491, %v1543
        %v1560 = vmul.f32 %v1493, %v1544
        %v1561 = vmul.f32 %v1495, %v1545
        %v1562 = vmul.f32 %v1497, %v1546
        %v1563 = vmul.f32 %v1499, %v1547
        %v1564 = vadd.f32 %v1548, %v1549
        %v1565 = vadd.f32 %v1564, %v1550
        %v1566 = vadd.f32 %v1565, %v1551
        %v1567 = vadd.f32 %v1566, %v1552
        %v1568 = vadd.f32 %v1567, %v1553
        %v1569 = vadd.f32 %v1568, %v1554
        %v1570 = vadd.f32 %v1569, %v1555
        %v1571 = vadd.f32 %v1570, %v1556
        %v1572 = vadd.f32 %v1571, %v1557
        %v1573 = vadd.f32 %v1572, %v1558
        %v1574 = vadd.f32 %v1573, %v1559
        %v1575 = vadd.f32 %v1574, %v1560
        %v1576 = vadd.f32 %v1575, %v1561
        %v1577 = vadd.f32 %v1576, %v1562
        %v1578 = vadd.f32 %v1577, %v1563
        %v1579 = vrot.slane %v1578, 4
        %v1580 = vadd.f32 %v1578, %v1579
        %v1581 = vrot.slane %v1580, 2
        %v1582 = vadd.f32 %v1580, %v1581
        %v1583 = vrot.slane %v1582, 1
        %v1584 = vadd.f32 %v1582, %v1583
        %v1585 = vadd.f32 %v1584, 1e-09
        %v1586 = vrcp.pop %v1585
        %v1587 = vmul.f32 %v1548, %v1586
        %v1588 = vmul.f32 %v1549, %v1586
        %v1589 = vmul.f32 %v1550, %v1586
        %v1590 = vmul.f32 %v1551, %v1586
        %v1591 = vmul.f32 %v1552, %v1586
        %v1592 = vmul.f32 %v1553, %v1586
        %v1593 = vmul.f32 %v1554, %v1586
        %v1594 = vmul.f32 %v1555, %v1586
        %v1595 = vmul.f32 %v1556, %v1586
        %v1596 = vmul.f32 %v1557, %v1586
        %v1597 = vmul.f32 %v1558, %v1586
        %v1598 = vmul.f32 %v1559, %v1586
        %v1599 = vmul.f32 %v1560, %v1586
        %v1600 = vmul.f32 %v1561, %v1586
        %v1601 = vmul.f32 %v1562, %v1586
        %v1602 = vmul.f32 %v1563, %v1586
        %v1603 = vadd.f32 %v1388, %v1587
        %v1604 = vadd.f32 %v1389, %v1588
        %v1605 = vadd.f32 %v1390, %v1589
        %v1606 = vadd.f32 %v1391, %v1590
        %v1607 = vadd.f32 %v1392, %v1591
        %v1608 = vadd.f32 %v1393, %v1592
        %v1609 = vadd.f32 %v1394, %v1593
        %v1610 = vadd.f32 %v1395, %v1594
        %v1611 = vadd.f32 %v1396, %v1595
        %v1612 = vadd.f32 %v1397, %v1596
        %v1613 = vadd.f32 %v1398, %v1597
        %v1614 = vadd.f32 %v1399, %v1598
        %v1615 = vadd.f32 %v1400, %v1599
        %v1616 = vadd.f32 %v1401, %v1600
        %v1617 = vadd.f32 %v1402, %v1601
        %v1618 = vadd.f32 %v1403, %v1602
        %v1619 = vpack.c.bf16 %v590, %v589
        %v1620 = vpack.c.bf16 %v592, %v591
        %v1621 = vpack.c.bf16 %v594, %v593
        %v1622 = vpack.c.bf16 %v596, %v595
        %1624 = vset.pattern.permute.xlu0 0
        %1625 = vperm.xlu0 %1624, %v547
        %v1626 = vpop.permute.xlu0 %1625
        %1629 = vset.pattern.permute.xlu0 0
        %1630 = vperm.xlu0 %1629, %v548
        %v1631 = vpop.permute.xlu0 %1630
        %1634 = vset.pattern.permute.xlu0 0
        %1635 = vperm.xlu0 %1634, %v549
        %v1636 = vpop.permute.xlu0 %1635
        %1639 = vset.pattern.permute.xlu0 0
        %1640 = vperm.xlu0 %1639, %v550
        %v1641 = vpop.permute.xlu0 %1640
        %1644 = vset.pattern.permute.xlu0 0
        %1645 = vperm.xlu0 %1644, %v551
        %v1646 = vpop.permute.xlu0 %1645
        %1649 = vset.pattern.permute.xlu0 0
        %1650 = vperm.xlu0 %1649, %v552
        %v1651 = vpop.permute.xlu0 %1650
        %1654 = vset.pattern.permute.xlu0 0
        %1655 = vperm.xlu0 %1654, %v553
        %v1656 = vpop.permute.xlu0 %1655
        %1659 = vset.pattern.permute.xlu0 0
        %1660 = vperm.xlu0 %1659, %v554
        %v1661 = vpop.permute.xlu0 %1660
        %v1664 = vsel %vm1037, %v531, 0
        %v1667 = vsel %vm1037, %v532, 0
        %v1670 = vsel %vm1037, %v533, 0
        %v1673 = vsel %vm1037, %v534, 0
        %1675 = vmatprep.subr.bf16.mxu0 0
        %1676 = vmatpush1.bf16.msra.mxu0 %v1619
        %1677 = vmatprep.subr.bf16.mxu0 0
        %1678 = vmatpush1.bf16.msra.mxu0 %v1620
        %1679 = vmatprep.subr.bf16.mxu0 0
        %1680 = vmatpush1.bf16.msra.mxu0 %v1621
        %1681 = vmatprep.subr.bf16.mxu0 0
        %1682 = vmatpush1.bf16.msra.mxu0 %v1622
        %1683 = vmatprep.subr.bf16.mxu0 0
        %1684 = vmatpush1.bf16.msra.mxu0 0
        %1685 = vmatprep.subr.bf16.mxu0 0
        %1686 = vmatpush1.bf16.msra.mxu0 0
        %1687 = vmatprep.subr.bf16.mxu0 0
        %1688 = vmatpush1.bf16.msra.mxu0 0
        %1689 = vmatprep.subr.bf16.mxu0 0
        %1690 = vmatpush1.bf16.msra.mxu0 0
        %1691 = vmatprep.subr.bf16.mxu0 0
        %1692 = vmatpush1.bf16.msra.mxu0 0
        %1693 = vmatprep.subr.bf16.mxu0 0
        %1694 = vmatpush1.bf16.msra.mxu0 0
        %1695 = vmatprep.subr.bf16.mxu0 0
        %1696 = vmatpush1.bf16.msra.mxu0 0
        %1697 = vmatprep.subr.bf16.mxu0 0
        %1698 = vmatpush1.bf16.msra.mxu0 0
        %1699 = vmatprep.subr.bf16.mxu0 0
        %1700 = vmatpush1.bf16.msra.mxu0 0
        %1701 = vmatprep.subr.bf16.mxu0 0
        %1702 = vmatpush1.bf16.msra.mxu0 0
        %1703 = vmatprep.subr.bf16.mxu0 0
        %1704 = vmatpush1.bf16.msra.mxu0 0
        %1705 = vmatprep.subr.bf16.mxu0 0
        %1706 = vmatpush1.bf16.msra.mxu0 0
        %1707 = vmatprep.mubr.bf16.mxu0 0
        %1708 = vmatmul.mubr.bf16.gmra.mrb[0].mxu0 %v1664
        %v1709 = vpop.f32.mrb[0].mxu0
        %v1710 = vadd.f32 %v1626, %v1709
        %v1711 = vpop.f32.mrb[0].mxu0
        %v1712 = vpop.f32.mrb[0].mxu0
        %v1713 = vadd.f32 %v1631, %v1712
        %v1714 = vpop.f32.mrb[0].mxu0
        %1715 = vmatprep.mubr.bf16.mxu0 0
        %1716 = vmatmul.mubr.bf16.gmra.mrb[0].mxu0 %v1667
        %v1717 = vpop.f32.mrb[0].mxu0
        %v1718 = vadd.f32 %v1636, %v1717
        %v1719 = vpop.f32.mrb[0].mxu0
        %v1720 = vpop.f32.mrb[0].mxu0
        %v1721 = vadd.f32 %v1641, %v1720
        %v1722 = vpop.f32.mrb[0].mxu0
        %1723 = vmatprep.mubr.bf16.mxu0 0
        %1724 = vmatmul.mubr.bf16.gmra.mrb[0].mxu0 %v1670
        %v1725 = vpop.f32.mrb[0].mxu0
        %v1726 = vadd.f32 %v1646, %v1725
        %v1727 = vpop.f32.mrb[0].mxu0
        %v1728 = vpop.f32.mrb[0].mxu0
        %v1729 = vadd.f32 %v1651, %v1728
        %v1730 = vpop.f32.mrb[0].mxu0
        %1731 = vmatprep.mubr.bf16.mxu0 0
        %1732 = vmatmul.mubr.bf16.gmra.mrb[0].mxu0 %v1673
        %v1733 = vpop.f32.mrb[0].mxu0
        %v1734 = vadd.f32 %v1656, %v1733
        %v1735 = vpop.f32.mrb[0].mxu0
        %v1736 = vpop.f32.mrb[0].mxu0
        %v1737 = vadd.f32 %v1661, %v1736
        %v1738 = vpop.f32.mrb[0].mxu0
        %1739 = vdwg.mxu0
        %v1740 = vpack.c.bf16 %v1713, %v1710
        %v1741 = vpack.c.bf16 %v1721, %v1718
        %v1742 = vpack.c.bf16 %v1729, %v1726
        %v1743 = vpack.c.bf16 %v1737, %v1734
        %v1744 = vpack.c.bf16 %v1604, %v1603
        %v1745 = vpack.c.bf16 %v1606, %v1605
        %v1746 = vpack.c.bf16 %v1608, %v1607
        %v1747 = vpack.c.bf16 %v1610, %v1609
        %v1748 = vpack.c.bf16 %v1612, %v1611
        %v1749 = vpack.c.bf16 %v1614, %v1613
        %v1750 = vpack.c.bf16 %v1616, %v1615
        %v1751 = vpack.c.bf16 %v1618, %v1617
        %1752 = vmatprep.subr.bf16.mxu0 0
        %1753 = vmatpush1.bf16.msra.mxu0 %v1744
        %1754 = vmatprep.subr.bf16.mxu0 0
        %1755 = vmatpush1.bf16.msra.mxu0 %v1745
        %1756 = vmatprep.subr.bf16.mxu0 0
        %1757 = vmatpush1.bf16.msra.mxu0 %v1746
        %1758 = vmatprep.subr.bf16.mxu0 0
        %1759 = vmatpush1.bf16.msra.mxu0 %v1747
        %1760 = vmatprep.subr.bf16.mxu0 0
        %1761 = vmatpush1.bf16.msra.mxu0 %v1748
        %1762 = vmatprep.subr.bf16.mxu0 0
        %1763 = vmatpush1.bf16.msra.mxu0 %v1749
        %1764 = vmatprep.subr.bf16.mxu0 0
        %1765 = vmatpush1.bf16.msra.mxu0 %v1750
        %1766 = vmatprep.subr.bf16.mxu0 0
        %1767 = vmatpush1.bf16.msra.mxu0 %v1751
        %1768 = vmatprep.subr.bf16.mxu0 0
        %1769 = vmatpush1.bf16.msra.mxu0 0
        %1770 = vmatprep.subr.bf16.mxu0 0
        %1771 = vmatpush1.bf16.msra.mxu0 0
        %1772 = vmatprep.subr.bf16.mxu0 0
        %1773 = vmatpush1.bf16.msra.mxu0 0
        %1774 = vmatprep.subr.bf16.mxu0 0
        %1775 = vmatpush1.bf16.msra.mxu0 0
        %1776 = vmatprep.subr.bf16.mxu0 0
        %1777 = vmatpush1.bf16.msra.mxu0 0
        %1778 = vmatprep.subr.bf16.mxu0 0
        %1779 = vmatpush1.bf16.msra.mxu0 0
        %1780 = vmatprep.subr.bf16.mxu0 0
        %1781 = vmatpush1.bf16.msra.mxu0 0
        %1782 = vmatprep.subr.bf16.mxu0 0
        %1783 = vmatpush1.bf16.msra.mxu0 0
        %1784 = vmatprep.mubr.bf16.mxu0 0
        %1785 = vmatmul.mubr.bf16.gmra.mrb[0].mxu0 %v1740
        %v1786 = vpop.f32.mrb[0].mxu0
        %v1787 = vadd.f32 0.0, %v1786
        %v1788 = vpop.f32.mrb[0].mxu0
        %v1789 = vpop.f32.mrb[0].mxu0
        %v1790 = vadd.f32 0.0, %v1789
        %v1791 = vpop.f32.mrb[0].mxu0
        %1792 = vmatprep.mubr.bf16.mxu0 0
        %1793 = vmatmul.mubr.bf16.gmra.mrb[0].mxu0 %v1741
        %v1794 = vpop.f32.mrb[0].mxu0
        %v1795 = vadd.f32 0.0, %v1794
        %v1796 = vpop.f32.mrb[0].mxu0
        %v1797 = vpop.f32.mrb[0].mxu0
        %v1798 = vadd.f32 0.0, %v1797
        %v1799 = vpop.f32.mrb[0].mxu0
        %1800 = vmatprep.mubr.bf16.mxu0 0
        %1801 = vmatmul.mubr.bf16.gmra.mrb[0].mxu0 %v1742
        %v1802 = vpop.f32.mrb[0].mxu0
        %v1803 = vadd.f32 0.0, %v1802
        %v1804 = vpop.f32.mrb[0].mxu0
        %v1805 = vpop.f32.mrb[0].mxu0
        %v1806 = vadd.f32 0.0, %v1805
        %v1807 = vpop.f32.mrb[0].mxu0
        %1808 = vmatprep.mubr.bf16.mxu0 0
        %1809 = vmatmul.mubr.bf16.gmra.mrb[0].mxu0 %v1743
        %v1810 = vpop.f32.mrb[0].mxu0
        %v1811 = vadd.f32 0.0, %v1810
        %v1812 = vpop.f32.mrb[0].mxu0
        %v1813 = vpop.f32.mrb[0].mxu0
        %v1814 = vadd.f32 0.0, %v1813
        %v1815 = vpop.f32.mrb[0].mxu0
        %1816 = vdwg.mxu0
        %v1817 = vsub.f32 %v589, %v1787
        %v1818 = vsub.f32 %v590, %v1790
        %v1819 = vsub.f32 %v591, %v1795
        %v1820 = vsub.f32 %v592, %v1798
        %v1821 = vsub.f32 %v593, %v1803
        %v1822 = vsub.f32 %v594, %v1806
        %v1823 = vsub.f32 %v595, %v1811
        %v1824 = vsub.f32 %v596, %v1814
        %v1825 = vpack.c.bf16 %v1818, %v1817
        %v1826 = vpack.c.bf16 %v1820, %v1819
        %v1827 = vpack.c.bf16 %v1822, %v1821
        %v1828 = vpack.c.bf16 %v1824, %v1823
        %1830 = vset.pattern.permute.xlu0 0
        %1831 = vperm.xlu0 %1830, %v555
        %v1832 = vpop.permute.xlu0 %1831
        %1835 = vset.pattern.permute.xlu0 0
        %1836 = vperm.xlu0 %1835, %v556
        %v1837 = vpop.permute.xlu0 %1836
        %1840 = vset.pattern.permute.xlu0 0
        %1841 = vperm.xlu0 %1840, %v557
        %v1842 = vpop.permute.xlu0 %1841
        %1845 = vset.pattern.permute.xlu0 0
        %1846 = vperm.xlu0 %1845, %v558
        %v1847 = vpop.permute.xlu0 %1846
        %1850 = vset.pattern.permute.xlu0 0
        %1851 = vperm.xlu0 %1850, %v559
        %v1852 = vpop.permute.xlu0 %1851
        %1855 = vset.pattern.permute.xlu0 0
        %1856 = vperm.xlu0 %1855, %v560
        %v1857 = vpop.permute.xlu0 %1856
        %1860 = vset.pattern.permute.xlu0 0
        %1861 = vperm.xlu0 %1860, %v561
        %v1862 = vpop.permute.xlu0 %1861
        %1865 = vset.pattern.permute.xlu0 0
        %1866 = vperm.xlu0 %1865, %v562
        %v1867 = vpop.permute.xlu0 %1866
        %v1870 = vsel %vm1037, %v543, 0
        %v1873 = vsel %vm1037, %v544, 0
        %v1876 = vsel %vm1037, %v545, 0
        %v1879 = vsel %vm1037, %v546, 0
        %1881 = vmatprep.subr.bf16.mxu0 0
        %1882 = vmatpush1.bf16.msra.mxu0 %v1825
        %1883 = vmatprep.subr.bf16.mxu0 0
        %1884 = vmatpush1.bf16.msra.mxu0 %v1826
        %1885 = vmatprep.subr.bf16.mxu0 0
        %1886 = vmatpush1.bf16.msra.mxu0 %v1827
        %1887 = vmatprep.subr.bf16.mxu0 0
        %1888 = vmatpush1.bf16.msra.mxu0 %v1828
        %1889 = vmatprep.subr.bf16.mxu0 0
        %1890 = vmatpush1.bf16.msra.mxu0 0
        %1891 = vmatprep.subr.bf16.mxu0 0
        %1892 = vmatpush1.bf16.msra.mxu0 0
        %1893 = vmatprep.subr.bf16.mxu0 0
        %1894 = vmatpush1.bf16.msra.mxu0 0
        %1895 = vmatprep.subr.bf16.mxu0 0
        %1896 = vmatpush1.bf16.msra.mxu0 0
        %1897 = vmatprep.subr.bf16.mxu0 0
        %1898 = vmatpush1.bf16.msra.mxu0 0
        %1899 = vmatprep.subr.bf16.mxu0 0
        %1900 = vmatpush1.bf16.msra.mxu0 0
        %1901 = vmatprep.subr.bf16.mxu0 0
        %1902 = vmatpush1.bf16.msra.mxu0 0
        %1903 = vmatprep.subr.bf16.mxu0 0
        %1904 = vmatpush1.bf16.msra.mxu0 0
        %1905 = vmatprep.subr.bf16.mxu0 0
        %1906 = vmatpush1.bf16.msra.mxu0 0
        %1907 = vmatprep.subr.bf16.mxu0 0
        %1908 = vmatpush1.bf16.msra.mxu0 0
        %1909 = vmatprep.subr.bf16.mxu0 0
        %1910 = vmatpush1.bf16.msra.mxu0 0
        %1911 = vmatprep.subr.bf16.mxu0 0
        %1912 = vmatpush1.bf16.msra.mxu0 0
        %1913 = vmatprep.mubr.bf16.mxu0 0
        %1914 = vmatmul.mubr.bf16.gmra.mrb[0].mxu0 %v1870
        %v1915 = vpop.f32.mrb[0].mxu0
        %v1916 = vadd.f32 %v1832, %v1915
        %v1917 = vpop.f32.mrb[0].mxu0
        %v1918 = vpop.f32.mrb[0].mxu0
        %v1919 = vadd.f32 %v1837, %v1918
        %v1920 = vpop.f32.mrb[0].mxu0
        %1921 = vmatprep.mubr.bf16.mxu0 0
        %1922 = vmatmul.mubr.bf16.gmra.mrb[0].mxu0 %v1873
        %v1923 = vpop.f32.mrb[0].mxu0
        %v1924 = vadd.f32 %v1842, %v1923
        %v1925 = vpop.f32.mrb[0].mxu0
        %v1926 = vpop.f32.mrb[0].mxu0
        %v1927 = vadd.f32 %v1847, %v1926
        %v1928 = vpop.f32.mrb[0].mxu0
        %1929 = vmatprep.mubr.bf16.mxu0 0
        %1930 = vmatmul.mubr.bf16.gmra.mrb[0].mxu0 %v1876
        %v1931 = vpop.f32.mrb[0].mxu0
        %v1932 = vadd.f32 %v1852, %v1931
        %v1933 = vpop.f32.mrb[0].mxu0
        %v1934 = vpop.f32.mrb[0].mxu0
        %v1935 = vadd.f32 %v1857, %v1934
        %v1936 = vpop.f32.mrb[0].mxu0
        %1937 = vmatprep.mubr.bf16.mxu0 0
        %1938 = vmatmul.mubr.bf16.gmra.mrb[0].mxu0 %v1879
        %v1939 = vpop.f32.mrb[0].mxu0
        %v1940 = vadd.f32 %v1862, %v1939
        %v1941 = vpop.f32.mrb[0].mxu0
        %v1942 = vpop.f32.mrb[0].mxu0
        %v1943 = vadd.f32 %v1867, %v1942
        %v1944 = vpop.f32.mrb[0].mxu0
        %1945 = vdwg.mxu0
        %1946 = vadd.xlane.f32.xlu0 %v1916
        %v1947 = vpop.xlane.xlu0 %1946
        %1948 = vadd.xlane.f32.xlu0 %v1919
        %v1949 = vpop.xlane.xlu0 %1948
        %1950 = vadd.xlane.f32.xlu0 %v1924
        %v1951 = vpop.xlane.xlu0 %1950
        %1952 = vadd.xlane.f32.xlu0 %v1927
        %v1953 = vpop.xlane.xlu0 %1952
        %1954 = vadd.xlane.f32.xlu0 %v1932
        %v1955 = vpop.xlane.xlu0 %1954
        %1956 = vadd.xlane.f32.xlu0 %v1935
        %v1957 = vpop.xlane.xlu0 %1956
        %1958 = vadd.xlane.f32.xlu0 %v1940
        %v1959 = vpop.xlane.xlu0 %1958
        %1960 = vadd.xlane.f32.xlu0 %v1943
        %v1961 = vpop.xlane.xlu0 %1960
        %v1962 = vrot.slane %v1947, 4
        %v1963 = vadd.f32 %v1947, %v1962
        %v1964 = vrot.slane %v1963, 2
        %v1965 = vadd.f32 %v1963, %v1964
        %v1966 = vrot.slane %v1965, 1
        %v1967 = vadd.f32 %v1965, %v1966
        %v1968 = vrot.slane %v1949, 4
        %v1969 = vadd.f32 %v1949, %v1968
        %v1970 = vrot.slane %v1969, 2
        %v1971 = vadd.f32 %v1969, %v1970
        %v1972 = vrot.slane %v1971, 1
        %v1973 = vadd.f32 %v1971, %v1972
        %v1974 = vrot.slane %v1951, 4
        %v1975 = vadd.f32 %v1951, %v1974
        %v1976 = vrot.slane %v1975, 2
        %v1977 = vadd.f32 %v1975, %v1976
        %v1978 = vrot.slane %v1977, 1
        %v1979 = vadd.f32 %v1977, %v1978
        %v1980 = vrot.slane %v1953, 4
        %v1981 = vadd.f32 %v1953, %v1980
        %v1982 = vrot.slane %v1981, 2
        %v1983 = vadd.f32 %v1981, %v1982
        %v1984 = vrot.slane %v1983, 1
        %v1985 = vadd.f32 %v1983, %v1984
        %v1986 = vrot.slane %v1955, 4
        %v1987 = vadd.f32 %v1955, %v1986
        %v1988 = vrot.slane %v1987, 2
        %v1989 = vadd.f32 %v1987, %v1988
        %v1990 = vrot.slane %v1989, 1
        %v1991 = vadd.f32 %v1989, %v1990
        %v1992 = vrot.slane %v1957, 4
        %v1993 = vadd.f32 %v1957, %v1992
        %v1994 = vrot.slane %v1993, 2
        %v1995 = vadd.f32 %v1993, %v1994
        %v1996 = vrot.slane %v1995, 1
        %v1997 = vadd.f32 %v1995, %v1996
        %v1998 = vrot.slane %v1959, 4
        %v1999 = vadd.f32 %v1959, %v1998
        %v2000 = vrot.slane %v1999, 2
        %v2001 = vadd.f32 %v1999, %v2000
        %v2002 = vrot.slane %v2001, 1
        %v2003 = vadd.f32 %v2001, %v2002
        %v2004 = vrot.slane %v1961, 4
        %v2005 = vadd.f32 %v1961, %v2004
        %v2006 = vrot.slane %v2005, 2
        %v2007 = vadd.f32 %v2005, %v2006
        %v2008 = vrot.slane %v2007, 1
        %v2009 = vadd.f32 %v2007, %v2008
        %v2010 = vmul.f32 %v1967, 0.0009765625
        %v2011 = vmul.f32 %v1973, 0.0009765625
        %v2012 = vmul.f32 %v1979, 0.0009765625
        %v2013 = vmul.f32 %v1985, 0.0009765625
        %v2014 = vmul.f32 %v1991, 0.0009765625
        %v2015 = vmul.f32 %v1997, 0.0009765625
        %v2016 = vmul.f32 %v2003, 0.0009765625
        %v2017 = vmul.f32 %v2009, 0.0009765625
        %v2018 = vsub.f32 %v1916, %v2010
        %v2019 = vsub.f32 %v1919, %v2011
        %v2020 = vsub.f32 %v1924, %v2012
        %v2021 = vsub.f32 %v1927, %v2013
        %v2022 = vsub.f32 %v1932, %v2014
        %v2023 = vsub.f32 %v1935, %v2015
        %v2024 = vsub.f32 %v1940, %v2016
        %v2025 = vsub.f32 %v1943, %v2017
        %v2026 = vmul.f32 %v2018, %v2018
        %v2027 = vmul.f32 %v2019, %v2019
        %v2028 = vmul.f32 %v2020, %v2020
        %v2029 = vmul.f32 %v2021, %v2021
        %v2030 = vmul.f32 %v2022, %v2022
        %v2031 = vmul.f32 %v2023, %v2023
        %v2032 = vmul.f32 %v2024, %v2024
        %v2033 = vmul.f32 %v2025, %v2025
        %2034 = vadd.xlane.f32.xlu0 %v2026
        %v2035 = vpop.xlane.xlu0 %2034
        %2036 = vadd.xlane.f32.xlu0 %v2027
        %v2037 = vpop.xlane.xlu0 %2036
        %2038 = vadd.xlane.f32.xlu0 %v2028
        %v2039 = vpop.xlane.xlu0 %2038
        %2040 = vadd.xlane.f32.xlu0 %v2029
        %v2041 = vpop.xlane.xlu0 %2040
        %2042 = vadd.xlane.f32.xlu0 %v2030
        %v2043 = vpop.xlane.xlu0 %2042
        %2044 = vadd.xlane.f32.xlu0 %v2031
        %v2045 = vpop.xlane.xlu0 %2044
        %2046 = vadd.xlane.f32.xlu0 %v2032
        %v2047 = vpop.xlane.xlu0 %2046
        %2048 = vadd.xlane.f32.xlu0 %v2033
        %v2049 = vpop.xlane.xlu0 %2048
        %v2050 = vrot.slane %v2035, 4
        %v2051 = vadd.f32 %v2035, %v2050
        %v2052 = vrot.slane %v2051, 2
        %v2053 = vadd.f32 %v2051, %v2052
        %v2054 = vrot.slane %v2053, 1
        %v2055 = vadd.f32 %v2053, %v2054
        %v2056 = vrot.slane %v2037, 4
        %v2057 = vadd.f32 %v2037, %v2056
        %v2058 = vrot.slane %v2057, 2
        %v2059 = vadd.f32 %v2057, %v2058
        %v2060 = vrot.slane %v2059, 1
        %v2061 = vadd.f32 %v2059, %v2060
        %v2062 = vrot.slane %v2039, 4
        %v2063 = vadd.f32 %v2039, %v2062
        %v2064 = vrot.slane %v2063, 2
        %v2065 = vadd.f32 %v2063, %v2064
        %v2066 = vrot.slane %v2065, 1
        %v2067 = vadd.f32 %v2065, %v2066
        %v2068 = vrot.slane %v2041, 4
        %v2069 = vadd.f32 %v2041, %v2068
        %v2070 = vrot.slane %v2069, 2
        %v2071 = vadd.f32 %v2069, %v2070
        %v2072 = vrot.slane %v2071, 1
        %v2073 = vadd.f32 %v2071, %v2072
        %v2074 = vrot.slane %v2043, 4
        %v2075 = vadd.f32 %v2043, %v2074
        %v2076 = vrot.slane %v2075, 2
        %v2077 = vadd.f32 %v2075, %v2076
        %v2078 = vrot.slane %v2077, 1
        %v2079 = vadd.f32 %v2077, %v2078
        %v2080 = vrot.slane %v2045, 4
        %v2081 = vadd.f32 %v2045, %v2080
        %v2082 = vrot.slane %v2081, 2
        %v2083 = vadd.f32 %v2081, %v2082
        %v2084 = vrot.slane %v2083, 1
        %v2085 = vadd.f32 %v2083, %v2084
        %v2086 = vrot.slane %v2047, 4
        %v2087 = vadd.f32 %v2047, %v2086
        %v2088 = vrot.slane %v2087, 2
        %v2089 = vadd.f32 %v2087, %v2088
        %v2090 = vrot.slane %v2089, 1
        %v2091 = vadd.f32 %v2089, %v2090
        %v2092 = vrot.slane %v2049, 4
        %v2093 = vadd.f32 %v2049, %v2092
        %v2094 = vrot.slane %v2093, 2
        %v2095 = vadd.f32 %v2093, %v2094
        %v2096 = vrot.slane %v2095, 1
        %v2097 = vadd.f32 %v2095, %v2096
        %v2098 = vmul.f32 %v2055, 0.0009765625
        %v2099 = vmul.f32 %v2061, 0.0009765625
        %v2100 = vmul.f32 %v2067, 0.0009765625
        %v2101 = vmul.f32 %v2073, 0.0009765625
        %v2102 = vmul.f32 %v2079, 0.0009765625
        %v2103 = vmul.f32 %v2085, 0.0009765625
        %v2104 = vmul.f32 %v2091, 0.0009765625
        %v2105 = vmul.f32 %v2097, 0.0009765625
        %v2106 = vadd.f32 %v2098, 1e-05
        %v2107 = vadd.f32 %v2099, 1e-05
        %v2108 = vadd.f32 %v2100, 1e-05
        %v2109 = vadd.f32 %v2101, 1e-05
        %v2110 = vadd.f32 %v2102, 1e-05
        %v2111 = vadd.f32 %v2103, 1e-05
        %v2112 = vadd.f32 %v2104, 1e-05
        %v2113 = vadd.f32 %v2105, 1e-05
        %v2114 = vrsqrt.pop %v2106
        %v2115 = vrsqrt.pop %v2107
        %v2116 = vrsqrt.pop %v2108
        %v2117 = vrsqrt.pop %v2109
        %v2118 = vrsqrt.pop %v2110
        %v2119 = vrsqrt.pop %v2111
        %v2120 = vrsqrt.pop %v2112
        %v2121 = vrsqrt.pop %v2113
        %v2122 = vmul.f32 %v2018, %v2114
        %v2123 = vmul.f32 %v2019, %v2115
        %v2124 = vmul.f32 %v2020, %v2116
        %v2125 = vmul.f32 %v2021, %v2117
        %v2126 = vmul.f32 %v2022, %v2118
        %v2127 = vmul.f32 %v2023, %v2119
        %v2128 = vmul.f32 %v2024, %v2120
        %v2129 = vmul.f32 %v2025, %v2121
        %2131 = vset.pattern.permute.xlu0 0
        %2132 = vperm.xlu0 %2131, %v563
        %v2133 = vpop.permute.xlu0 %2132
        %2136 = vset.pattern.permute.xlu0 0
        %2137 = vperm.xlu0 %2136, %v564
        %v2138 = vpop.permute.xlu0 %2137
        %2141 = vset.pattern.permute.xlu0 0
        %2142 = vperm.xlu0 %2141, %v565
        %v2143 = vpop.permute.xlu0 %2142
        %2146 = vset.pattern.permute.xlu0 0
        %2147 = vperm.xlu0 %2146, %v566
        %v2148 = vpop.permute.xlu0 %2147
        %2151 = vset.pattern.permute.xlu0 0
        %2152 = vperm.xlu0 %2151, %v567
        %v2153 = vpop.permute.xlu0 %2152
        %2156 = vset.pattern.permute.xlu0 0
        %2157 = vperm.xlu0 %2156, %v568
        %v2158 = vpop.permute.xlu0 %2157
        %2161 = vset.pattern.permute.xlu0 0
        %2162 = vperm.xlu0 %2161, %v569
        %v2163 = vpop.permute.xlu0 %2162
        %2166 = vset.pattern.permute.xlu0 0
        %2167 = vperm.xlu0 %2166, %v570
        %v2168 = vpop.permute.xlu0 %2167
        %v2170 = vmul.f32 %v2122, %v2133
        %v2171 = vmul.f32 %v2123, %v2138
        %v2172 = vmul.f32 %v2124, %v2143
        %v2173 = vmul.f32 %v2125, %v2148
        %v2174 = vmul.f32 %v2126, %v2153
        %v2175 = vmul.f32 %v2127, %v2158
        %v2176 = vmul.f32 %v2128, %v2163
        %v2177 = vmul.f32 %v2129, %v2168
        %2179 = vset.pattern.permute.xlu0 0
        %2180 = vperm.xlu0 %2179, %v571
        %v2181 = vpop.permute.xlu0 %2180
        %2184 = vset.pattern.permute.xlu0 0
        %2185 = vperm.xlu0 %2184, %v572
        %v2186 = vpop.permute.xlu0 %2185
        %2189 = vset.pattern.permute.xlu0 0
        %2190 = vperm.xlu0 %2189, %v573
        %v2191 = vpop.permute.xlu0 %2190
        %2194 = vset.pattern.permute.xlu0 0
        %2195 = vperm.xlu0 %2194, %v574
        %v2196 = vpop.permute.xlu0 %2195
        %2199 = vset.pattern.permute.xlu0 0
        %2200 = vperm.xlu0 %2199, %v575
        %v2201 = vpop.permute.xlu0 %2200
        %2204 = vset.pattern.permute.xlu0 0
        %2205 = vperm.xlu0 %2204, %v576
        %v2206 = vpop.permute.xlu0 %2205
        %2209 = vset.pattern.permute.xlu0 0
        %2210 = vperm.xlu0 %2209, %v577
        %v2211 = vpop.permute.xlu0 %2210
        %2214 = vset.pattern.permute.xlu0 0
        %2215 = vperm.xlu0 %2214, %v578
        %v2216 = vpop.permute.xlu0 %2215
        %v2218 = vadd.f32 %v2170, %v2181
        %v2219 = vadd.f32 %v2171, %v2186
        %v2220 = vadd.f32 %v2172, %v2191
        %v2221 = vadd.f32 %v2173, %v2196
        %v2222 = vadd.f32 %v2174, %v2201
        %v2223 = vadd.f32 %v2175, %v2206
        %v2224 = vadd.f32 %v2176, %v2211
        %v2225 = vadd.f32 %v2177, %v2216
        %vm2226 = vcmp.gt.f32.partialorder %v2218, 0.0
        %vm2227 = vcmp.gt.f32.partialorder %v2219, 0.0
        %vm2228 = vcmp.gt.f32.partialorder %v2220, 0.0
        %vm2229 = vcmp.gt.f32.partialorder %v2221, 0.0
        %vm2230 = vcmp.gt.f32.partialorder %v2222, 0.0
        %vm2231 = vcmp.gt.f32.partialorder %v2223, 0.0
        %vm2232 = vcmp.gt.f32.partialorder %v2224, 0.0
        %vm2233 = vcmp.gt.f32.partialorder %v2225, 0.0
        %v2234 = vstv %s580
        %v2235 = vmul.f32 %v2234, %v2218
        %v2236 = vmul.f32 %v2234, %v2219
        %v2237 = vmul.f32 %v2234, %v2220
        %v2238 = vmul.f32 %v2234, %v2221
        %v2239 = vmul.f32 %v2234, %v2222
        %v2240 = vmul.f32 %v2234, %v2223
        %v2241 = vmul.f32 %v2234, %v2224
        %v2242 = vmul.f32 %v2234, %v2225
        %v2243 = vsel %vm2226, %v2218, %v2235
        %v2244 = vsel %vm2227, %v2219, %v2236
        %v2245 = vsel %vm2228, %v2220, %v2237
        %v2246 = vsel %vm2229, %v2221, %v2238
        %v2247 = vsel %vm2230, %v2222, %v2239
        %v2248 = vsel %vm2231, %v2223, %v2240
        %v2249 = vsel %vm2232, %v2224, %v2241
        %v2250 = vsel %vm2233, %v2225, %v2242
        %v2251 = vstv %s579
        %v2252 = vmul.f32 %v2251, %v2243
        %v2253 = vmul.f32 %v2251, %v2244
        %v2254 = vmul.f32 %v2251, %v2245
        %v2255 = vmul.f32 %v2251, %v2246
        %v2256 = vmul.f32 %v2251, %v2247
        %v2257 = vmul.f32 %v2251, %v2248
        %v2258 = vmul.f32 %v2251, %v2249
        %v2259 = vmul.f32 %v2251, %v2250
        %v2260 = vadd.f32 %v2252, %v589
        %v2261 = vadd.f32 %v2253, %v590
        %v2262 = vadd.f32 %v2254, %v591
        %v2263 = vadd.f32 %v2255, %v592
        %v2264 = vadd.f32 %v2256, %v593
        %v2265 = vadd.f32 %v2257, %v594
        %v2266 = vadd.f32 %v2258, %v595
        %v2267 = vadd.f32 %v2259, %v596
        %2268 = vst [vmem:[%s490] sm:$0xff] %v2260
        %2269 = vst [vmem:[%s490 + $0x8] sm:$0xff] %v2261
        %2270 = vst [vmem:[%s490 + $0x10] sm:$0xff] %v2262
        %2271 = vst [vmem:[%s490 + $0x18] sm:$0xff] %v2263
        %2272 = vst [vmem:[%s490 + $0x20] sm:$0xff] %v2264
        %2273 = vst [vmem:[%s490 + $0x28] sm:$0xff] %v2265
        %2274 = vst [vmem:[%s490 + $0x30] sm:$0xff] %v2266
        %2275 = vst [vmem:[%s490 + $0x38] sm:$0xff] %v2267
        %s2276 = scalar_lea.vmem %s496, 64
        %v2277 = vld [vmem:[%s2276] sm:$0xff]
        %v2278 = vld [vmem:[%s2276 + $0x8] sm:$0xff]
        %v2279 = vld [vmem:[%s2276 + $0x10] sm:$0xff]
        %v2280 = vld [vmem:[%s2276 + $0x18] sm:$0xff]
        %v2281 = vld [vmem:[%s2276 + $0x20] sm:$0xff]
        %v2282 = vld [vmem:[%s2276 + $0x28] sm:$0xff]
        %v2283 = vld [vmem:[%s2276 + $0x30] sm:$0xff]
        %v2284 = vld [vmem:[%s2276 + $0x38] sm:$0xff]
        %s2285 = scalar_lea.vmem %s503, 64
        %v2286 = vld [vmem:[%s2285] sm:$0xff]
        %v2287 = vld [vmem:[%s2285 + $0x8] sm:$0xff]
        %v2288 = vld [vmem:[%s2285 + $0x10] sm:$0xff]
        %v2289 = vld [vmem:[%s2285 + $0x18] sm:$0xff]
        %v2290 = vld [vmem:[%s2285 + $0x20] sm:$0xff]
        %v2291 = vld [vmem:[%s2285 + $0x28] sm:$0xff]
        %v2292 = vld [vmem:[%s2285 + $0x30] sm:$0xff]
        %v2293 = vld [vmem:[%s2285 + $0x38] sm:$0xff]
        %s2294 = scalar_lea.vmem %s510, 128
        %v2295 = vld [vmem:[%s2294] sm:$0xff]
        %v2296 = vld [vmem:[%s2294 + $0x8] sm:$0xff]
        %v2297 = vld [vmem:[%s2294 + $0x10] sm:$0xff]
        %v2298 = vld [vmem:[%s2294 + $0x18] sm:$0xff]
        %v2299 = vld [vmem:[%s2294 + $0x20] sm:$0xff]
        %v2300 = vld [vmem:[%s2294 + $0x28] sm:$0xff]
        %v2301 = vld [vmem:[%s2294 + $0x30] sm:$0xff]
        %v2302 = vld [vmem:[%s2294 + $0x38] sm:$0xff]
        %v2303 = vld [vmem:[%s2294 + $0x40] sm:$0xff]
        %v2304 = vld [vmem:[%s2294 + $0x48] sm:$0xff]
        %v2305 = vld [vmem:[%s2294 + $0x50] sm:$0xff]
        %v2306 = vld [vmem:[%s2294 + $0x58] sm:$0xff]
        %v2307 = vld [vmem:[%s2294 + $0x60] sm:$0xff]
        %v2308 = vld [vmem:[%s2294 + $0x68] sm:$0xff]
        %v2309 = vld [vmem:[%s2294 + $0x70] sm:$0xff]
        %v2310 = vld [vmem:[%s2294 + $0x78] sm:$0xff]
        %s2311 = scalar_lea.vmem %s516, 4
        %v2312 = vld [vmem:[%s2311] sm:$0x7]
        %v2313 = vlaneseq
        %v2314 = vshrl.u32 %v2313, 7
        %v2315 = vsub.s32 0, %v2314
        %v2316 = vrot.slane %v2312, %v2315
        %2318 = vset.pattern.permute.xlu0 0
        %2319 = vperm.xlu0 %2318, %v2295
        %v2320 = vpop.permute.xlu0 %2319
        %2323 = vset.pattern.permute.xlu0 0
        %2324 = vperm.xlu0 %2323, %v2296
        %v2325 = vpop.permute.xlu0 %2324
        %2328 = vset.pattern.permute.xlu0 0
        %2329 = vperm.xlu0 %2328, %v2297
        %v2330 = vpop.permute.xlu0 %2329
        %2333 = vset.pattern.permute.xlu0 0
        %2334 = vperm.xlu0 %2333, %v2298
        %v2335 = vpop.permute.xlu0 %2334
        %2338 = vset.pattern.permute.xlu0 0
        %2339 = vperm.xlu0 %2338, %v2299
        %v2340 = vpop.permute.xlu0 %2339
        %2343 = vset.pattern.permute.xlu0 0
        %2344 = vperm.xlu0 %2343, %v2300
        %v2345 = vpop.permute.xlu0 %2344
        %2348 = vset.pattern.permute.xlu0 0
        %2349 = vperm.xlu0 %2348, %v2301
        %v2350 = vpop.permute.xlu0 %2349
        %2353 = vset.pattern.permute.xlu0 0
        %2354 = vperm.xlu0 %2353, %v2302
        %v2355 = vpop.permute.xlu0 %2354
        %2358 = vset.pattern.permute.xlu0 0
        %2359 = vperm.xlu0 %2358, %v2303
        %v2360 = vpop.permute.xlu0 %2359
        %2363 = vset.pattern.permute.xlu0 0
        %2364 = vperm.xlu0 %2363, %v2304
        %v2365 = vpop.permute.xlu0 %2364
        %2368 = vset.pattern.permute.xlu0 0
        %2369 = vperm.xlu0 %2368, %v2305
        %v2370 = vpop.permute.xlu0 %2369
        %2373 = vset.pattern.permute.xlu0 0
        %2374 = vperm.xlu0 %2373, %v2306
        %v2375 = vpop.permute.xlu0 %2374
        %2378 = vset.pattern.permute.xlu0 0
        %2379 = vperm.xlu0 %2378, %v2307
        %v2380 = vpop.permute.xlu0 %2379
        %2383 = vset.pattern.permute.xlu0 0
        %2384 = vperm.xlu0 %2383, %v2308
        %v2385 = vpop.permute.xlu0 %2384
        %2388 = vset.pattern.permute.xlu0 0
        %2389 = vperm.xlu0 %2388, %v2309
        %v2390 = vpop.permute.xlu0 %2389
        %2393 = vset.pattern.permute.xlu0 0
        %2394 = vperm.xlu0 %2393, %v2310
        %v2395 = vpop.permute.xlu0 %2394
        %v2397 = vsub.f32 %v2316, %v2320
        %v2398 = vsub.f32 %v2316, %v2325
        %v2399 = vsub.f32 %v2316, %v2330
        %v2400 = vsub.f32 %v2316, %v2335
        %v2401 = vsub.f32 %v2316, %v2340
        %v2402 = vsub.f32 %v2316, %v2345
        %v2403 = vsub.f32 %v2316, %v2350
        %v2404 = vsub.f32 %v2316, %v2355
        %v2405 = vsub.f32 %v2316, %v2360
        %v2406 = vsub.f32 %v2316, %v2365
        %v2407 = vsub.f32 %v2316, %v2370
        %v2408 = vsub.f32 %v2316, %v2375
        %v2409 = vsub.f32 %v2316, %v2380
        %v2410 = vsub.f32 %v2316, %v2385
        %v2411 = vsub.f32 %v2316, %v2390
        %v2412 = vsub.f32 %v2316, %v2395
        %v2413 = vmul.f32 %v2397, %v2397
        %v2414 = vmul.f32 %v2398, %v2398
        %v2415 = vmul.f32 %v2399, %v2399
        %v2416 = vmul.f32 %v2400, %v2400
        %v2417 = vmul.f32 %v2401, %v2401
        %v2418 = vmul.f32 %v2402, %v2402
        %v2419 = vmul.f32 %v2403, %v2403
        %v2420 = vmul.f32 %v2404, %v2404
        %v2421 = vmul.f32 %v2405, %v2405
        %v2422 = vmul.f32 %v2406, %v2406
        %v2423 = vmul.f32 %v2407, %v2407
        %v2424 = vmul.f32 %v2408, %v2408
        %v2425 = vmul.f32 %v2409, %v2409
        %v2426 = vmul.f32 %v2410, %v2410
        %v2427 = vmul.f32 %v2411, %v2411
        %v2428 = vmul.f32 %v2412, %v2412
        %v2429 = vadd.f32 %v2413, 0.0
        %v2430 = vadd.f32 %v2414, 0.0
        %v2431 = vadd.f32 %v2415, 0.0
        %v2432 = vadd.f32 %v2416, 0.0
        %v2433 = vadd.f32 %v2417, 0.0
        %v2434 = vadd.f32 %v2418, 0.0
        %v2435 = vadd.f32 %v2419, 0.0
        %v2436 = vadd.f32 %v2420, 0.0
        %v2437 = vadd.f32 %v2421, 0.0
        %v2438 = vadd.f32 %v2422, 0.0
        %v2439 = vadd.f32 %v2423, 0.0
        %v2440 = vadd.f32 %v2424, 0.0
        %v2441 = vadd.f32 %v2425, 0.0
        %v2442 = vadd.f32 %v2426, 0.0
        %v2443 = vadd.f32 %v2427, 0.0
        %v2444 = vadd.f32 %v2428, 0.0
        %v2445 = vlaneseq
        %v2446 = vshrl.u32 %v2445, 7
        %v2447 = vsub.s32 1, %v2446
        %v2448 = vrot.slane %v2312, %v2447
        %2449 = vset.pattern.permute.xlu0 1
        %2450 = vperm.xlu0 %2449, %v2295
        %v2451 = vpop.permute.xlu0 %2450
        %2453 = vset.pattern.permute.xlu0 1
        %2454 = vperm.xlu0 %2453, %v2296
        %v2455 = vpop.permute.xlu0 %2454
        %2457 = vset.pattern.permute.xlu0 1
        %2458 = vperm.xlu0 %2457, %v2297
        %v2459 = vpop.permute.xlu0 %2458
        %2461 = vset.pattern.permute.xlu0 1
        %2462 = vperm.xlu0 %2461, %v2298
        %v2463 = vpop.permute.xlu0 %2462
        %2465 = vset.pattern.permute.xlu0 1
        %2466 = vperm.xlu0 %2465, %v2299
        %v2467 = vpop.permute.xlu0 %2466
        %2469 = vset.pattern.permute.xlu0 1
        %2470 = vperm.xlu0 %2469, %v2300
        %v2471 = vpop.permute.xlu0 %2470
        %2473 = vset.pattern.permute.xlu0 1
        %2474 = vperm.xlu0 %2473, %v2301
        %v2475 = vpop.permute.xlu0 %2474
        %2477 = vset.pattern.permute.xlu0 1
        %2478 = vperm.xlu0 %2477, %v2302
        %v2479 = vpop.permute.xlu0 %2478
        %2481 = vset.pattern.permute.xlu0 1
        %2482 = vperm.xlu0 %2481, %v2303
        %v2483 = vpop.permute.xlu0 %2482
        %2485 = vset.pattern.permute.xlu0 1
        %2486 = vperm.xlu0 %2485, %v2304
        %v2487 = vpop.permute.xlu0 %2486
        %2489 = vset.pattern.permute.xlu0 1
        %2490 = vperm.xlu0 %2489, %v2305
        %v2491 = vpop.permute.xlu0 %2490
        %2493 = vset.pattern.permute.xlu0 1
        %2494 = vperm.xlu0 %2493, %v2306
        %v2495 = vpop.permute.xlu0 %2494
        %2497 = vset.pattern.permute.xlu0 1
        %2498 = vperm.xlu0 %2497, %v2307
        %v2499 = vpop.permute.xlu0 %2498
        %2501 = vset.pattern.permute.xlu0 1
        %2502 = vperm.xlu0 %2501, %v2308
        %v2503 = vpop.permute.xlu0 %2502
        %2505 = vset.pattern.permute.xlu0 1
        %2506 = vperm.xlu0 %2505, %v2309
        %v2507 = vpop.permute.xlu0 %2506
        %2509 = vset.pattern.permute.xlu0 1
        %2510 = vperm.xlu0 %2509, %v2310
        %v2511 = vpop.permute.xlu0 %2510
        %v2513 = vsub.f32 %v2448, %v2451
        %v2514 = vsub.f32 %v2448, %v2455
        %v2515 = vsub.f32 %v2448, %v2459
        %v2516 = vsub.f32 %v2448, %v2463
        %v2517 = vsub.f32 %v2448, %v2467
        %v2518 = vsub.f32 %v2448, %v2471
        %v2519 = vsub.f32 %v2448, %v2475
        %v2520 = vsub.f32 %v2448, %v2479
        %v2521 = vsub.f32 %v2448, %v2483
        %v2522 = vsub.f32 %v2448, %v2487
        %v2523 = vsub.f32 %v2448, %v2491
        %v2524 = vsub.f32 %v2448, %v2495
        %v2525 = vsub.f32 %v2448, %v2499
        %v2526 = vsub.f32 %v2448, %v2503
        %v2527 = vsub.f32 %v2448, %v2507
        %v2528 = vsub.f32 %v2448, %v2511
        %v2529 = vmul.f32 %v2513, %v2513
        %v2530 = vmul.f32 %v2514, %v2514
        %v2531 = vmul.f32 %v2515, %v2515
        %v2532 = vmul.f32 %v2516, %v2516
        %v2533 = vmul.f32 %v2517, %v2517
        %v2534 = vmul.f32 %v2518, %v2518
        %v2535 = vmul.f32 %v2519, %v2519
        %v2536 = vmul.f32 %v2520, %v2520
        %v2537 = vmul.f32 %v2521, %v2521
        %v2538 = vmul.f32 %v2522, %v2522
        %v2539 = vmul.f32 %v2523, %v2523
        %v2540 = vmul.f32 %v2524, %v2524
        %v2541 = vmul.f32 %v2525, %v2525
        %v2542 = vmul.f32 %v2526, %v2526
        %v2543 = vmul.f32 %v2527, %v2527
        %v2544 = vmul.f32 %v2528, %v2528
        %v2545 = vadd.f32 %v2429, %v2529
        %v2546 = vadd.f32 %v2430, %v2530
        %v2547 = vadd.f32 %v2431, %v2531
        %v2548 = vadd.f32 %v2432, %v2532
        %v2549 = vadd.f32 %v2433, %v2533
        %v2550 = vadd.f32 %v2434, %v2534
        %v2551 = vadd.f32 %v2435, %v2535
        %v2552 = vadd.f32 %v2436, %v2536
        %v2553 = vadd.f32 %v2437, %v2537
        %v2554 = vadd.f32 %v2438, %v2538
        %v2555 = vadd.f32 %v2439, %v2539
        %v2556 = vadd.f32 %v2440, %v2540
        %v2557 = vadd.f32 %v2441, %v2541
        %v2558 = vadd.f32 %v2442, %v2542
        %v2559 = vadd.f32 %v2443, %v2543
        %v2560 = vadd.f32 %v2444, %v2544
        %v2561 = vlaneseq
        %v2562 = vshrl.u32 %v2561, 7
        %v2563 = vsub.s32 2, %v2562
        %v2564 = vrot.slane %v2312, %v2563
        %2565 = vset.pattern.permute.xlu0 2
        %2566 = vperm.xlu0 %2565, %v2295
        %v2567 = vpop.permute.xlu0 %2566
        %2569 = vset.pattern.permute.xlu0 2
        %2570 = vperm.xlu0 %2569, %v2296
        %v2571 = vpop.permute.xlu0 %2570
        %2573 = vset.pattern.permute.xlu0 2
        %2574 = vperm.xlu0 %2573, %v2297
        %v2575 = vpop.permute.xlu0 %2574
        %2577 = vset.pattern.permute.xlu0 2
        %2578 = vperm.xlu0 %2577, %v2298
        %v2579 = vpop.permute.xlu0 %2578
        %2581 = vset.pattern.permute.xlu0 2
        %2582 = vperm.xlu0 %2581, %v2299
        %v2583 = vpop.permute.xlu0 %2582
        %2585 = vset.pattern.permute.xlu0 2
        %2586 = vperm.xlu0 %2585, %v2300
        %v2587 = vpop.permute.xlu0 %2586
        %2589 = vset.pattern.permute.xlu0 2
        %2590 = vperm.xlu0 %2589, %v2301
        %v2591 = vpop.permute.xlu0 %2590
        %2593 = vset.pattern.permute.xlu0 2
        %2594 = vperm.xlu0 %2593, %v2302
        %v2595 = vpop.permute.xlu0 %2594
        %2597 = vset.pattern.permute.xlu0 2
        %2598 = vperm.xlu0 %2597, %v2303
        %v2599 = vpop.permute.xlu0 %2598
        %2601 = vset.pattern.permute.xlu0 2
        %2602 = vperm.xlu0 %2601, %v2304
        %v2603 = vpop.permute.xlu0 %2602
        %2605 = vset.pattern.permute.xlu0 2
        %2606 = vperm.xlu0 %2605, %v2305
        %v2607 = vpop.permute.xlu0 %2606
        %2609 = vset.pattern.permute.xlu0 2
        %2610 = vperm.xlu0 %2609, %v2306
        %v2611 = vpop.permute.xlu0 %2610
        %2613 = vset.pattern.permute.xlu0 2
        %2614 = vperm.xlu0 %2613, %v2307
        %v2615 = vpop.permute.xlu0 %2614
        %2617 = vset.pattern.permute.xlu0 2
        %2618 = vperm.xlu0 %2617, %v2308
        %v2619 = vpop.permute.xlu0 %2618
        %2621 = vset.pattern.permute.xlu0 2
        %2622 = vperm.xlu0 %2621, %v2309
        %v2623 = vpop.permute.xlu0 %2622
        %2625 = vset.pattern.permute.xlu0 2
        %2626 = vperm.xlu0 %2625, %v2310
        %v2627 = vpop.permute.xlu0 %2626
        %v2629 = vsub.f32 %v2564, %v2567
        %v2630 = vsub.f32 %v2564, %v2571
        %v2631 = vsub.f32 %v2564, %v2575
        %v2632 = vsub.f32 %v2564, %v2579
        %v2633 = vsub.f32 %v2564, %v2583
        %v2634 = vsub.f32 %v2564, %v2587
        %v2635 = vsub.f32 %v2564, %v2591
        %v2636 = vsub.f32 %v2564, %v2595
        %v2637 = vsub.f32 %v2564, %v2599
        %v2638 = vsub.f32 %v2564, %v2603
        %v2639 = vsub.f32 %v2564, %v2607
        %v2640 = vsub.f32 %v2564, %v2611
        %v2641 = vsub.f32 %v2564, %v2615
        %v2642 = vsub.f32 %v2564, %v2619
        %v2643 = vsub.f32 %v2564, %v2623
        %v2644 = vsub.f32 %v2564, %v2627
        %v2645 = vmul.f32 %v2629, %v2629
        %v2646 = vmul.f32 %v2630, %v2630
        %v2647 = vmul.f32 %v2631, %v2631
        %v2648 = vmul.f32 %v2632, %v2632
        %v2649 = vmul.f32 %v2633, %v2633
        %v2650 = vmul.f32 %v2634, %v2634
        %v2651 = vmul.f32 %v2635, %v2635
        %v2652 = vmul.f32 %v2636, %v2636
        %v2653 = vmul.f32 %v2637, %v2637
        %v2654 = vmul.f32 %v2638, %v2638
        %v2655 = vmul.f32 %v2639, %v2639
        %v2656 = vmul.f32 %v2640, %v2640
        %v2657 = vmul.f32 %v2641, %v2641
        %v2658 = vmul.f32 %v2642, %v2642
        %v2659 = vmul.f32 %v2643, %v2643
        %v2660 = vmul.f32 %v2644, %v2644
        %v2661 = vadd.f32 %v2545, %v2645
        %v2662 = vadd.f32 %v2546, %v2646
        %v2663 = vadd.f32 %v2547, %v2647
        %v2664 = vadd.f32 %v2548, %v2648
        %v2665 = vadd.f32 %v2549, %v2649
        %v2666 = vadd.f32 %v2550, %v2650
        %v2667 = vadd.f32 %v2551, %v2651
        %v2668 = vadd.f32 %v2552, %v2652
        %v2669 = vadd.f32 %v2553, %v2653
        %v2670 = vadd.f32 %v2554, %v2654
        %v2671 = vadd.f32 %v2555, %v2655
        %v2672 = vadd.f32 %v2556, %v2656
        %v2673 = vadd.f32 %v2557, %v2657
        %v2674 = vadd.f32 %v2558, %v2658
        %v2675 = vadd.f32 %v2559, %v2659
        %v2676 = vadd.f32 %v2560, %v2660
        %v2677 = vadd.f32 %v2661, %v2662
        %v2678 = vadd.f32 %v2677, %v2663
        %v2679 = vadd.f32 %v2678, %v2664
        %v2680 = vadd.f32 %v2679, %v2665
        %v2681 = vadd.f32 %v2680, %v2666
        %v2682 = vadd.f32 %v2681, %v2667
        %v2683 = vadd.f32 %v2682, %v2668
        %v2684 = vadd.f32 %v2683, %v2669
        %v2685 = vadd.f32 %v2684, %v2670
        %v2686 = vadd.f32 %v2685, %v2671
        %v2687 = vadd.f32 %v2686, %v2672
        %v2688 = vadd.f32 %v2687, %v2673
        %v2689 = vadd.f32 %v2688, %v2674
        %v2690 = vadd.f32 %v2689, %v2675
        %v2691 = vadd.f32 %v2690, %v2676
        %v2692 = vrot.slane %v2691, 4
        %v2693 = vadd.f32 %v2691, %v2692
        %v2694 = vrot.slane %v2693, 2
        %v2695 = vadd.f32 %v2693, %v2694
        %v2696 = vrot.slane %v2695, 1
        %v2697 = vadd.f32 %v2695, %v2696
        %v2698 = vadd.f32 %v2697, 1e-09
        %v2699 = vrcp.pop %v2698
        %v2700 = vmul.f32 %v2661, %v2699
        %v2701 = vmul.f32 %v2662, %v2699
        %v2702 = vmul.f32 %v2663, %v2699
        %v2703 = vmul.f32 %v2664, %v2699
        %v2704 = vmul.f32 %v2665, %v2699
        %v2705 = vmul.f32 %v2666, %v2699
        %v2706 = vmul.f32 %v2667, %v2699
        %v2707 = vmul.f32 %v2668, %v2699
        %v2708 = vmul.f32 %v2669, %v2699
        %v2709 = vmul.f32 %v2670, %v2699
        %v2710 = vmul.f32 %v2671, %v2699
        %v2711 = vmul.f32 %v2672, %v2699
        %v2712 = vmul.f32 %v2673, %v2699
        %v2713 = vmul.f32 %v2674, %v2699
        %v2714 = vmul.f32 %v2675, %v2699
        %v2715 = vmul.f32 %v2676, %v2699
        %vm2716 = vcmp.le.f32.partialorder %v2700, 0.1
        %vm2717 = vcmp.le.f32.partialorder %v2701, 0.1
        %vm2718 = vcmp.le.f32.partialorder %v2702, 0.1
        %vm2719 = vcmp.le.f32.partialorder %v2703, 0.1
        %vm2720 = vcmp.le.f32.partialorder %v2704, 0.1
        %vm2721 = vcmp.le.f32.partialorder %v2705, 0.1
        %vm2722 = vcmp.le.f32.partialorder %v2706, 0.1
        %vm2723 = vcmp.le.f32.partialorder %v2707, 0.1
        %vm2724 = vcmp.le.f32.partialorder %v2708, 0.1
        %vm2725 = vcmp.le.f32.partialorder %v2709, 0.1
        %vm2726 = vcmp.le.f32.partialorder %v2710, 0.1
        %vm2727 = vcmp.le.f32.partialorder %v2711, 0.1
        %vm2728 = vcmp.le.f32.partialorder %v2712, 0.1
        %vm2729 = vcmp.le.f32.partialorder %v2713, 0.1
        %vm2730 = vcmp.le.f32.partialorder %v2714, 0.1
        %vm2731 = vcmp.le.f32.partialorder %v2715, 0.1
        %v2732 = vpack.c.bf16 %v2278, %v2277
        %v2733 = vpack.c.bf16 %v2280, %v2279
        %v2734 = vpack.c.bf16 %v2282, %v2281
        %v2735 = vpack.c.bf16 %v2284, %v2283
        %2736 = vmatprep.subr.bf16.mxu0 0
        %2737 = vmatpush1.bf16.msra.mxu0 %v2732
        %2738 = vmatprep.subr.bf16.mxu0 0
        %2739 = vmatpush1.bf16.msra.mxu0 %v2733
        %2740 = vmatprep.subr.bf16.mxu0 0
        %2741 = vmatpush1.bf16.msra.mxu0 %v2734
        %2742 = vmatprep.subr.bf16.mxu0 0
        %2743 = vmatpush1.bf16.msra.mxu0 %v2735
        %2744 = vmatprep.subr.bf16.mxu0 0
        %2745 = vmatpush1.bf16.msra.mxu0 0
        %2746 = vmatprep.subr.bf16.mxu0 0
        %2747 = vmatpush1.bf16.msra.mxu0 0
        %2748 = vmatprep.subr.bf16.mxu0 0
        %2749 = vmatpush1.bf16.msra.mxu0 0
        %2750 = vmatprep.subr.bf16.mxu0 0
        %2751 = vmatpush1.bf16.msra.mxu0 0
        %2752 = vmatprep.subr.bf16.mxu0 0
        %2753 = vmatpush1.bf16.msra.mxu0 0
        %2754 = vmatprep.subr.bf16.mxu0 0
        %2755 = vmatpush1.bf16.msra.mxu0 0
        %2756 = vmatprep.subr.bf16.mxu0 0
        %2757 = vmatpush1.bf16.msra.mxu0 0
        %2758 = vmatprep.subr.bf16.mxu0 0
        %2759 = vmatpush1.bf16.msra.mxu0 0
        %2760 = vmatprep.subr.bf16.mxu0 0
        %2761 = vmatpush1.bf16.msra.mxu0 0
        %2762 = vmatprep.subr.bf16.mxu0 0
        %2763 = vmatpush1.bf16.msra.mxu0 0
        %2764 = vmatprep.subr.bf16.mxu0 0
        %2765 = vmatpush1.bf16.msra.mxu0 0
        %2766 = vmatprep.subr.bf16.mxu0 0
        %2767 = vmatpush1.bf16.msra.mxu0 0
        %2768 = vmatprep.mubr.bf16.mxu0 0
        %2769 = vmatmul.mubr.bf16.gmra.mrb[0].mxu0 %v1039
        %v2770 = vpop.f32.mrb[0].mxu0
        %v2771 = vadd.f32 0.0, %v2770
        %v2772 = vpop.f32.mrb[0].mxu0
        %v2773 = vpop.f32.mrb[0].mxu0
        %v2774 = vadd.f32 0.0, %v2773
        %v2775 = vpop.f32.mrb[0].mxu0
        %2776 = vdwg.mxu0
        %v2777 = vpack.c.bf16 %v2774, %v2771
        %2778 = vxpose.xlu0.c.b16.start [1/8] %v2777, 128
        %2779 = vxpose.xlu0.c.b16.cont [2/8] 0, 128
        %2780 = vxpose.xlu0.c.b16.cont [3/8] 0, 128
        %2781 = vxpose.xlu0.c.b16.cont [4/8] 0, 128
        %2782 = vxpose.xlu0.c.b16.cont [5/8] 0, 128
        %2783 = vxpose.xlu0.c.b16.cont [6/8] 0, 128
        %2784 = vxpose.xlu0.c.b16.cont [7/8] 0, 128
        %2785 = vxpose.xlu0.c.b16.end [8/8] 0, 128
        %v2786 = vpop.trf.xlu0
        %v2787 = vpop.trf.xlu0
        %v2788 = vpop.trf.xlu0
        %v2789 = vpop.trf.xlu0
        %v2790 = vpop.trf.xlu0
        %v2791 = vpop.trf.xlu0
        %v2792 = vpop.trf.xlu0
        %v2793 = vpop.trf.xlu0
        %v2795 = vsel %vm1099, %v2786, 0
        %v2798 = vsel %vm1099, %v2787, 0
        %v2801 = vsel %vm1099, %v2788, 0
        %v2804 = vsel %vm1099, %v2789, 0
        %v2807 = vsel %vm1099, %v2790, 0
        %v2810 = vsel %vm1099, %v2791, 0
        %v2813 = vsel %vm1099, %v2792, 0
        %v2816 = vsel %vm1099, %v2793, 0
        %2818 = vmatprep.subr.bf16.mxu0 0
        %2819 = vmatpush1.bf16.msra.mxu0 %v2777
        %2820 = vmatprep.subr.bf16.mxu0 0
        %2821 = vmatpush1.bf16.msra.mxu0 0
        %2822 = vmatprep.subr.bf16.mxu0 0
        %2823 = vmatpush1.bf16.msra.mxu0 0
        %2824 = vmatprep.subr.bf16.mxu0 0
        %2825 = vmatpush1.bf16.msra.mxu0 0
        %2826 = vmatprep.subr.bf16.mxu0 0
        %2827 = vmatpush1.bf16.msra.mxu0 0
        %2828 = vmatprep.subr.bf16.mxu0 0
        %2829 = vmatpush1.bf16.msra.mxu0 0
        %2830 = vmatprep.subr.bf16.mxu0 0
        %2831 = vmatpush1.bf16.msra.mxu0 0
        %2832 = vmatprep.subr.bf16.mxu0 0
        %2833 = vmatpush1.bf16.msra.mxu0 0
        %2834 = vmatprep.subr.bf16.mxu0 0
        %2835 = vmatpush1.bf16.msra.mxu0 0
        %2836 = vmatprep.subr.bf16.mxu0 0
        %2837 = vmatpush1.bf16.msra.mxu0 0
        %2838 = vmatprep.subr.bf16.mxu0 0
        %2839 = vmatpush1.bf16.msra.mxu0 0
        %2840 = vmatprep.subr.bf16.mxu0 0
        %2841 = vmatpush1.bf16.msra.mxu0 0
        %2842 = vmatprep.subr.bf16.mxu0 0
        %2843 = vmatpush1.bf16.msra.mxu0 0
        %2844 = vmatprep.subr.bf16.mxu0 0
        %2845 = vmatpush1.bf16.msra.mxu0 0
        %2846 = vmatprep.subr.bf16.mxu0 0
        %2847 = vmatpush1.bf16.msra.mxu0 0
        %2848 = vmatprep.subr.bf16.mxu0 0
        %2849 = vmatpush1.bf16.msra.mxu0 0
        %2850 = vmatprep.mubr.bf16.mxu0 0
        %2851 = vmatmul.mubr.bf16.gmra.mrb[0].mxu0 %v2795
        %v2852 = vpop.f32.mrb[0].mxu0
        %v2853 = vadd.f32 0.0, %v2852
        %v2854 = vpop.f32.mrb[0].mxu0
        %v2855 = vpop.f32.mrb[0].mxu0
        %v2856 = vadd.f32 0.0, %v2855
        %v2857 = vpop.f32.mrb[0].mxu0
        %2858 = vmatprep.mubr.bf16.mxu0 0
        %2859 = vmatmul.mubr.bf16.gmra.mrb[0].mxu0 %v2798
        %v2860 = vpop.f32.mrb[0].mxu0
        %v2861 = vadd.f32 0.0, %v2860
        %v2862 = vpop.f32.mrb[0].mxu0
        %v2863 = vpop.f32.mrb[0].mxu0
        %v2864 = vadd.f32 0.0, %v2863
        %v2865 = vpop.f32.mrb[0].mxu0
        %2866 = vmatprep.mubr.bf16.mxu0 0
        %2867 = vmatmul.mubr.bf16.gmra.mrb[0].mxu0 %v2801
        %v2868 = vpop.f32.mrb[0].mxu0
        %v2869 = vadd.f32 0.0, %v2868
        %v2870 = vpop.f32.mrb[0].mxu0
        %v2871 = vpop.f32.mrb[0].mxu0
        %v2872 = vadd.f32 0.0, %v2871
        %v2873 = vpop.f32.mrb[0].mxu0
        %2874 = vmatprep.mubr.bf16.mxu0 0
        %2875 = vmatmul.mubr.bf16.gmra.mrb[0].mxu0 %v2804
        %v2876 = vpop.f32.mrb[0].mxu0
        %v2877 = vadd.f32 0.0, %v2876
        %v2878 = vpop.f32.mrb[0].mxu0
        %v2879 = vpop.f32.mrb[0].mxu0
        %v2880 = vadd.f32 0.0, %v2879
        %v2881 = vpop.f32.mrb[0].mxu0
        %2882 = vmatprep.mubr.bf16.mxu0 0
        %2883 = vmatmul.mubr.bf16.gmra.mrb[0].mxu0 %v2807
        %v2884 = vpop.f32.mrb[0].mxu0
        %v2885 = vadd.f32 0.0, %v2884
        %v2886 = vpop.f32.mrb[0].mxu0
        %v2887 = vpop.f32.mrb[0].mxu0
        %v2888 = vadd.f32 0.0, %v2887
        %v2889 = vpop.f32.mrb[0].mxu0
        %2890 = vmatprep.mubr.bf16.mxu0 0
        %2891 = vmatmul.mubr.bf16.gmra.mrb[0].mxu0 %v2810
        %v2892 = vpop.f32.mrb[0].mxu0
        %v2893 = vadd.f32 0.0, %v2892
        %v2894 = vpop.f32.mrb[0].mxu0
        %v2895 = vpop.f32.mrb[0].mxu0
        %v2896 = vadd.f32 0.0, %v2895
        %v2897 = vpop.f32.mrb[0].mxu0
        %2898 = vmatprep.mubr.bf16.mxu0 0
        %2899 = vmatmul.mubr.bf16.gmra.mrb[0].mxu0 %v2813
        %v2900 = vpop.f32.mrb[0].mxu0
        %v2901 = vadd.f32 0.0, %v2900
        %v2902 = vpop.f32.mrb[0].mxu0
        %v2903 = vpop.f32.mrb[0].mxu0
        %v2904 = vadd.f32 0.0, %v2903
        %v2905 = vpop.f32.mrb[0].mxu0
        %2906 = vmatprep.mubr.bf16.mxu0 0
        %2907 = vmatmul.mubr.bf16.gmra.mrb[0].mxu0 %v2816
        %v2908 = vpop.f32.mrb[0].mxu0
        %v2909 = vadd.f32 0.0, %v2908
        %v2910 = vpop.f32.mrb[0].mxu0
        %v2911 = vpop.f32.mrb[0].mxu0
        %v2912 = vadd.f32 0.0, %v2911
        %v2913 = vpop.f32.mrb[0].mxu0
        %2914 = vdwg.mxu0
        %2915 = vmax.xlane.f32.xlu0 %v2853
        %v2916 = vpop.xlane.xlu0 %2915
        %2917 = vmax.xlane.f32.xlu0 %v2856
        %v2918 = vpop.xlane.xlu0 %2917
        %2919 = vmax.xlane.f32.xlu0 %v2861
        %v2920 = vpop.xlane.xlu0 %2919
        %2921 = vmax.xlane.f32.xlu0 %v2864
        %v2922 = vpop.xlane.xlu0 %2921
        %2923 = vmax.xlane.f32.xlu0 %v2869
        %v2924 = vpop.xlane.xlu0 %2923
        %2925 = vmax.xlane.f32.xlu0 %v2872
        %v2926 = vpop.xlane.xlu0 %2925
        %2927 = vmax.xlane.f32.xlu0 %v2877
        %v2928 = vpop.xlane.xlu0 %2927
        %2929 = vmax.xlane.f32.xlu0 %v2880
        %v2930 = vpop.xlane.xlu0 %2929
        %2931 = vmax.xlane.f32.xlu0 %v2885
        %v2932 = vpop.xlane.xlu0 %2931
        %2933 = vmax.xlane.f32.xlu0 %v2888
        %v2934 = vpop.xlane.xlu0 %2933
        %2935 = vmax.xlane.f32.xlu0 %v2893
        %v2936 = vpop.xlane.xlu0 %2935
        %2937 = vmax.xlane.f32.xlu0 %v2896
        %v2938 = vpop.xlane.xlu0 %2937
        %2939 = vmax.xlane.f32.xlu0 %v2901
        %v2940 = vpop.xlane.xlu0 %2939
        %2941 = vmax.xlane.f32.xlu0 %v2904
        %v2942 = vpop.xlane.xlu0 %2941
        %2943 = vmax.xlane.f32.xlu0 %v2909
        %v2944 = vpop.xlane.xlu0 %2943
        %2945 = vmax.xlane.f32.xlu0 %v2912
        %v2946 = vpop.xlane.xlu0 %2945
        %v2947 = vsub.f32 %v2853, %v2916
        %v2948 = vsub.f32 %v2856, %v2918
        %v2949 = vsub.f32 %v2861, %v2920
        %v2950 = vsub.f32 %v2864, %v2922
        %v2951 = vsub.f32 %v2869, %v2924
        %v2952 = vsub.f32 %v2872, %v2926
        %v2953 = vsub.f32 %v2877, %v2928
        %v2954 = vsub.f32 %v2880, %v2930
        %v2955 = vsub.f32 %v2885, %v2932
        %v2956 = vsub.f32 %v2888, %v2934
        %v2957 = vsub.f32 %v2893, %v2936
        %v2958 = vsub.f32 %v2896, %v2938
        %v2959 = vsub.f32 %v2901, %v2940
        %v2960 = vsub.f32 %v2904, %v2942
        %v2961 = vsub.f32 %v2909, %v2944
        %v2962 = vsub.f32 %v2912, %v2946
        %v2963 = vmul.f32 %v2947, 1.442695
        %v2964 = vpow.pop %v2963
        %v2965 = vmul.f32 %v2948, 1.442695
        %v2966 = vpow.pop %v2965
        %v2967 = vmul.f32 %v2949, 1.442695
        %v2968 = vpow.pop %v2967
        %v2969 = vmul.f32 %v2950, 1.442695
        %v2970 = vpow.pop %v2969
        %v2971 = vmul.f32 %v2951, 1.442695
        %v2972 = vpow.pop %v2971
        %v2973 = vmul.f32 %v2952, 1.442695
        %v2974 = vpow.pop %v2973
        %v2975 = vmul.f32 %v2953, 1.442695
        %v2976 = vpow.pop %v2975
        %v2977 = vmul.f32 %v2954, 1.442695
        %v2978 = vpow.pop %v2977
        %v2979 = vmul.f32 %v2955, 1.442695
        %v2980 = vpow.pop %v2979
        %v2981 = vmul.f32 %v2956, 1.442695
        %v2982 = vpow.pop %v2981
        %v2983 = vmul.f32 %v2957, 1.442695
        %v2984 = vpow.pop %v2983
        %v2985 = vmul.f32 %v2958, 1.442695
        %v2986 = vpow.pop %v2985
        %v2987 = vmul.f32 %v2959, 1.442695
        %v2988 = vpow.pop %v2987
        %v2989 = vmul.f32 %v2960, 1.442695
        %v2990 = vpow.pop %v2989
        %v2991 = vmul.f32 %v2961, 1.442695
        %v2992 = vpow.pop %v2991
        %v2993 = vmul.f32 %v2962, 1.442695
        %v2994 = vpow.pop %v2993
        %2995 = vadd.xlane.f32.xlu0 %v2964
        %v2996 = vpop.xlane.xlu0 %2995
        %2997 = vadd.xlane.f32.xlu0 %v2966
        %v2998 = vpop.xlane.xlu0 %2997
        %2999 = vadd.xlane.f32.xlu0 %v2968
        %v3000 = vpop.xlane.xlu0 %2999
        %3001 = vadd.xlane.f32.xlu0 %v2970
        %v3002 = vpop.xlane.xlu0 %3001
        %3003 = vadd.xlane.f32.xlu0 %v2972
        %v3004 = vpop.xlane.xlu0 %3003
        %3005 = vadd.xlane.f32.xlu0 %v2974
        %v3006 = vpop.xlane.xlu0 %3005
        %3007 = vadd.xlane.f32.xlu0 %v2976
        %v3008 = vpop.xlane.xlu0 %3007
        %3009 = vadd.xlane.f32.xlu0 %v2978
        %v3010 = vpop.xlane.xlu0 %3009
        %3011 = vadd.xlane.f32.xlu0 %v2980
        %v3012 = vpop.xlane.xlu0 %3011
        %3013 = vadd.xlane.f32.xlu0 %v2982
        %v3014 = vpop.xlane.xlu0 %3013
        %3015 = vadd.xlane.f32.xlu0 %v2984
        %v3016 = vpop.xlane.xlu0 %3015
        %3017 = vadd.xlane.f32.xlu0 %v2986
        %v3018 = vpop.xlane.xlu0 %3017
        %3019 = vadd.xlane.f32.xlu0 %v2988
        %v3020 = vpop.xlane.xlu0 %3019
        %3021 = vadd.xlane.f32.xlu0 %v2990
        %v3022 = vpop.xlane.xlu0 %3021
        %3023 = vadd.xlane.f32.xlu0 %v2992
        %v3024 = vpop.xlane.xlu0 %3023
        %3025 = vadd.xlane.f32.xlu0 %v2994
        %v3026 = vpop.xlane.xlu0 %3025
        %v3027 = vrcp.pop %v2996
        %v3028 = vrcp.pop %v2998
        %v3029 = vrcp.pop %v3000
        %v3030 = vrcp.pop %v3002
        %v3031 = vrcp.pop %v3004
        %v3032 = vrcp.pop %v3006
        %v3033 = vrcp.pop %v3008
        %v3034 = vrcp.pop %v3010
        %v3035 = vrcp.pop %v3012
        %v3036 = vrcp.pop %v3014
        %v3037 = vrcp.pop %v3016
        %v3038 = vrcp.pop %v3018
        %v3039 = vrcp.pop %v3020
        %v3040 = vrcp.pop %v3022
        %v3041 = vrcp.pop %v3024
        %v3042 = vrcp.pop %v3026
        %v3043 = vmul.f32 %v2964, %v3027
        %v3044 = vmul.f32 %v2966, %v3028
        %v3045 = vmul.f32 %v2968, %v3029
        %v3046 = vmul.f32 %v2970, %v3030
        %v3047 = vmul.f32 %v2972, %v3031
        %v3048 = vmul.f32 %v2974, %v3032
        %v3049 = vmul.f32 %v2976, %v3033
        %v3050 = vmul.f32 %v2978, %v3034
        %v3051 = vmul.f32 %v2980, %v3035
        %v3052 = vmul.f32 %v2982, %v3036
        %v3053 = vmul.f32 %v2984, %v3037
        %v3054 = vmul.f32 %v2986, %v3038
        %v3055 = vmul.f32 %v2988, %v3039
        %v3056 = vmul.f32 %v2990, %v3040
        %v3057 = vmul.f32 %v2992, %v3041
        %v3058 = vmul.f32 %v2994, %v3042
        %v3059 = vadd.f32 %v3043, %v3044
        %v3060 = vadd.f32 %v3059, %v3045
        %v3061 = vadd.f32 %v3060, %v3046
        %v3062 = vadd.f32 %v3061, %v3047
        %v3063 = vadd.f32 %v3062, %v3048
        %v3064 = vadd.f32 %v3063, %v3049
        %v3065 = vadd.f32 %v3064, %v3050
        %v3066 = vadd.f32 %v3065, %v3051
        %v3067 = vadd.f32 %v3066, %v3052
        %v3068 = vadd.f32 %v3067, %v3053
        %v3069 = vadd.f32 %v3068, %v3054
        %v3070 = vadd.f32 %v3069, %v3055
        %v3071 = vadd.f32 %v3070, %v3056
        %v3072 = vadd.f32 %v3071, %v3057
        %v3073 = vadd.f32 %v3072, %v3058
        %v3074 = vrot.slane %v3073, 4
        %v3075 = vadd.f32 %v3073, %v3074
        %v3076 = vrot.slane %v3075, 2
        %v3077 = vadd.f32 %v3075, %v3076
        %v3078 = vrot.slane %v3077, 1
        %v3079 = vadd.f32 %v3077, %v3078
        %v3080 = vadd.f32 %v3079, 1e-09
        %v3081 = vrcp.pop %v3080
        %v3082 = vmul.f32 %v3043, %v3081
        %v3083 = vmul.f32 %v3044, %v3081
        %v3084 = vmul.f32 %v3045, %v3081
        %v3085 = vmul.f32 %v3046, %v3081
        %v3086 = vmul.f32 %v3047, %v3081
        %v3087 = vmul.f32 %v3048, %v3081
        %v3088 = vmul.f32 %v3049, %v3081
        %v3089 = vmul.f32 %v3050, %v3081
        %v3090 = vmul.f32 %v3051, %v3081
        %v3091 = vmul.f32 %v3052, %v3081
        %v3092 = vmul.f32 %v3053, %v3081
        %v3093 = vmul.f32 %v3054, %v3081
        %v3094 = vmul.f32 %v3055, %v3081
        %v3095 = vmul.f32 %v3056, %v3081
        %v3096 = vmul.f32 %v3057, %v3081
        %v3097 = vmul.f32 %v3058, %v3081
        %v3098 = vsel %vm2716, %v3082, 0.0
        %v3099 = vsel %vm2717, %v3083, 0.0
        %v3100 = vsel %vm2718, %v3084, 0.0
        %v3101 = vsel %vm2719, %v3085, 0.0
        %v3102 = vsel %vm2720, %v3086, 0.0
        %v3103 = vsel %vm2721, %v3087, 0.0
        %v3104 = vsel %vm2722, %v3088, 0.0
        %v3105 = vsel %vm2723, %v3089, 0.0
        %v3106 = vsel %vm2724, %v3090, 0.0
        %v3107 = vsel %vm2725, %v3091, 0.0
        %v3108 = vsel %vm2726, %v3092, 0.0
        %v3109 = vsel %vm2727, %v3093, 0.0
        %v3110 = vsel %vm2728, %v3094, 0.0
        %v3111 = vsel %vm2729, %v3095, 0.0
        %v3112 = vsel %vm2730, %v3096, 0.0
        %v3113 = vsel %vm2731, %v3097, 0.0
        %3114 = vmax.xlane.f32.xlu0 %v3098
        %v3115 = vpop.xlane.xlu0 %3114
        %3116 = vmax.xlane.f32.xlu0 %v3099
        %v3117 = vpop.xlane.xlu0 %3116
        %3118 = vmax.xlane.f32.xlu0 %v3100
        %v3119 = vpop.xlane.xlu0 %3118
        %3120 = vmax.xlane.f32.xlu0 %v3101
        %v3121 = vpop.xlane.xlu0 %3120
        %3122 = vmax.xlane.f32.xlu0 %v3102
        %v3123 = vpop.xlane.xlu0 %3122
        %3124 = vmax.xlane.f32.xlu0 %v3103
        %v3125 = vpop.xlane.xlu0 %3124
        %3126 = vmax.xlane.f32.xlu0 %v3104
        %v3127 = vpop.xlane.xlu0 %3126
        %3128 = vmax.xlane.f32.xlu0 %v3105
        %v3129 = vpop.xlane.xlu0 %3128
        %3130 = vmax.xlane.f32.xlu0 %v3106
        %v3131 = vpop.xlane.xlu0 %3130
        %3132 = vmax.xlane.f32.xlu0 %v3107
        %v3133 = vpop.xlane.xlu0 %3132
        %3134 = vmax.xlane.f32.xlu0 %v3108
        %v3135 = vpop.xlane.xlu0 %3134
        %3136 = vmax.xlane.f32.xlu0 %v3109
        %v3137 = vpop.xlane.xlu0 %3136
        %3138 = vmax.xlane.f32.xlu0 %v3110
        %v3139 = vpop.xlane.xlu0 %3138
        %3140 = vmax.xlane.f32.xlu0 %v3111
        %v3141 = vpop.xlane.xlu0 %3140
        %3142 = vmax.xlane.f32.xlu0 %v3112
        %v3143 = vpop.xlane.xlu0 %3142
        %3144 = vmax.xlane.f32.xlu0 %v3113
        %v3145 = vpop.xlane.xlu0 %3144
        %v3146 = vsub.f32 %v3098, %v3115
        %v3147 = vsub.f32 %v3099, %v3117
        %v3148 = vsub.f32 %v3100, %v3119
        %v3149 = vsub.f32 %v3101, %v3121
        %v3150 = vsub.f32 %v3102, %v3123
        %v3151 = vsub.f32 %v3103, %v3125
        %v3152 = vsub.f32 %v3104, %v3127
        %v3153 = vsub.f32 %v3105, %v3129
        %v3154 = vsub.f32 %v3106, %v3131
        %v3155 = vsub.f32 %v3107, %v3133
        %v3156 = vsub.f32 %v3108, %v3135
        %v3157 = vsub.f32 %v3109, %v3137
        %v3158 = vsub.f32 %v3110, %v3139
        %v3159 = vsub.f32 %v3111, %v3141
        %v3160 = vsub.f32 %v3112, %v3143
        %v3161 = vsub.f32 %v3113, %v3145
        %v3162 = vmul.f32 %v3146, 1.442695
        %v3163 = vpow.pop %v3162
        %v3164 = vmul.f32 %v3147, 1.442695
        %v3165 = vpow.pop %v3164
        %v3166 = vmul.f32 %v3148, 1.442695
        %v3167 = vpow.pop %v3166
        %v3168 = vmul.f32 %v3149, 1.442695
        %v3169 = vpow.pop %v3168
        %v3170 = vmul.f32 %v3150, 1.442695
        %v3171 = vpow.pop %v3170
        %v3172 = vmul.f32 %v3151, 1.442695
        %v3173 = vpow.pop %v3172
        %v3174 = vmul.f32 %v3152, 1.442695
        %v3175 = vpow.pop %v3174
        %v3176 = vmul.f32 %v3153, 1.442695
        %v3177 = vpow.pop %v3176
        %v3178 = vmul.f32 %v3154, 1.442695
        %v3179 = vpow.pop %v3178
        %v3180 = vmul.f32 %v3155, 1.442695
        %v3181 = vpow.pop %v3180
        %v3182 = vmul.f32 %v3156, 1.442695
        %v3183 = vpow.pop %v3182
        %v3184 = vmul.f32 %v3157, 1.442695
        %v3185 = vpow.pop %v3184
        %v3186 = vmul.f32 %v3158, 1.442695
        %v3187 = vpow.pop %v3186
        %v3188 = vmul.f32 %v3159, 1.442695
        %v3189 = vpow.pop %v3188
        %v3190 = vmul.f32 %v3160, 1.442695
        %v3191 = vpow.pop %v3190
        %v3192 = vmul.f32 %v3161, 1.442695
        %v3193 = vpow.pop %v3192
        %3194 = vadd.xlane.f32.xlu0 %v3163
        %v3195 = vpop.xlane.xlu0 %3194
        %3196 = vadd.xlane.f32.xlu0 %v3165
        %v3197 = vpop.xlane.xlu0 %3196
        %3198 = vadd.xlane.f32.xlu0 %v3167
        %v3199 = vpop.xlane.xlu0 %3198
        %3200 = vadd.xlane.f32.xlu0 %v3169
        %v3201 = vpop.xlane.xlu0 %3200
        %3202 = vadd.xlane.f32.xlu0 %v3171
        %v3203 = vpop.xlane.xlu0 %3202
        %3204 = vadd.xlane.f32.xlu0 %v3173
        %v3205 = vpop.xlane.xlu0 %3204
        %3206 = vadd.xlane.f32.xlu0 %v3175
        %v3207 = vpop.xlane.xlu0 %3206
        %3208 = vadd.xlane.f32.xlu0 %v3177
        %v3209 = vpop.xlane.xlu0 %3208
        %3210 = vadd.xlane.f32.xlu0 %v3179
        %v3211 = vpop.xlane.xlu0 %3210
        %3212 = vadd.xlane.f32.xlu0 %v3181
        %v3213 = vpop.xlane.xlu0 %3212
        %3214 = vadd.xlane.f32.xlu0 %v3183
        %v3215 = vpop.xlane.xlu0 %3214
        %3216 = vadd.xlane.f32.xlu0 %v3185
        %v3217 = vpop.xlane.xlu0 %3216
        %3218 = vadd.xlane.f32.xlu0 %v3187
        %v3219 = vpop.xlane.xlu0 %3218
        %3220 = vadd.xlane.f32.xlu0 %v3189
        %v3221 = vpop.xlane.xlu0 %3220
        %3222 = vadd.xlane.f32.xlu0 %v3191
        %v3223 = vpop.xlane.xlu0 %3222
        %3224 = vadd.xlane.f32.xlu0 %v3193
        %v3225 = vpop.xlane.xlu0 %3224
        %v3226 = vrcp.pop %v3195
        %v3227 = vrcp.pop %v3197
        %v3228 = vrcp.pop %v3199
        %v3229 = vrcp.pop %v3201
        %v3230 = vrcp.pop %v3203
        %v3231 = vrcp.pop %v3205
        %v3232 = vrcp.pop %v3207
        %v3233 = vrcp.pop %v3209
        %v3234 = vrcp.pop %v3211
        %v3235 = vrcp.pop %v3213
        %v3236 = vrcp.pop %v3215
        %v3237 = vrcp.pop %v3217
        %v3238 = vrcp.pop %v3219
        %v3239 = vrcp.pop %v3221
        %v3240 = vrcp.pop %v3223
        %v3241 = vrcp.pop %v3225
        %v3242 = vmul.f32 %v3163, %v3226
        %v3243 = vmul.f32 %v3165, %v3227
        %v3244 = vmul.f32 %v3167, %v3228
        %v3245 = vmul.f32 %v3169, %v3229
        %v3246 = vmul.f32 %v3171, %v3230
        %v3247 = vmul.f32 %v3173, %v3231
        %v3248 = vmul.f32 %v3175, %v3232
        %v3249 = vmul.f32 %v3177, %v3233
        %v3250 = vmul.f32 %v3179, %v3234
        %v3251 = vmul.f32 %v3181, %v3235
        %v3252 = vmul.f32 %v3183, %v3236
        %v3253 = vmul.f32 %v3185, %v3237
        %v3254 = vmul.f32 %v3187, %v3238
        %v3255 = vmul.f32 %v3189, %v3239
        %v3256 = vmul.f32 %v3191, %v3240
        %v3257 = vmul.f32 %v3193, %v3241
        %v3258 = vadd.f32 %v3242, %v3243
        %v3259 = vadd.f32 %v3258, %v3244
        %v3260 = vadd.f32 %v3259, %v3245
        %v3261 = vadd.f32 %v3260, %v3246
        %v3262 = vadd.f32 %v3261, %v3247
        %v3263 = vadd.f32 %v3262, %v3248
        %v3264 = vadd.f32 %v3263, %v3249
        %v3265 = vadd.f32 %v3264, %v3250
        %v3266 = vadd.f32 %v3265, %v3251
        %v3267 = vadd.f32 %v3266, %v3252
        %v3268 = vadd.f32 %v3267, %v3253
        %v3269 = vadd.f32 %v3268, %v3254
        %v3270 = vadd.f32 %v3269, %v3255
        %v3271 = vadd.f32 %v3270, %v3256
        %v3272 = vadd.f32 %v3271, %v3257
        %v3273 = vrot.slane %v3272, 4
        %v3274 = vadd.f32 %v3272, %v3273
        %v3275 = vrot.slane %v3274, 2
        %v3276 = vadd.f32 %v3274, %v3275
        %v3277 = vrot.slane %v3276, 1
        %v3278 = vadd.f32 %v3276, %v3277
        %v3279 = vadd.f32 %v3278, 1e-09
        %v3280 = vrcp.pop %v3279
        %v3281 = vmul.f32 %v3242, %v3280
        %v3282 = vmul.f32 %v3243, %v3280
        %v3283 = vmul.f32 %v3244, %v3280
        %v3284 = vmul.f32 %v3245, %v3280
        %v3285 = vmul.f32 %v3246, %v3280
        %v3286 = vmul.f32 %v3247, %v3280
        %v3287 = vmul.f32 %v3248, %v3280
        %v3288 = vmul.f32 %v3249, %v3280
        %v3289 = vmul.f32 %v3250, %v3280
        %v3290 = vmul.f32 %v3251, %v3280
        %v3291 = vmul.f32 %v3252, %v3280
        %v3292 = vmul.f32 %v3253, %v3280
        %v3293 = vmul.f32 %v3254, %v3280
        %v3294 = vmul.f32 %v3255, %v3280
        %v3295 = vmul.f32 %v3256, %v3280
        %v3296 = vmul.f32 %v3257, %v3280
        %v3297 = vadd.f32 %v3082, %v3281
        %v3298 = vadd.f32 %v3083, %v3282
        %v3299 = vadd.f32 %v3084, %v3283
        %v3300 = vadd.f32 %v3085, %v3284
        %v3301 = vadd.f32 %v3086, %v3285
        %v3302 = vadd.f32 %v3087, %v3286
        %v3303 = vadd.f32 %v3088, %v3287
        %v3304 = vadd.f32 %v3089, %v3288
        %v3305 = vadd.f32 %v3090, %v3289
        %v3306 = vadd.f32 %v3091, %v3290
        %v3307 = vadd.f32 %v3092, %v3291
        %v3308 = vadd.f32 %v3093, %v3292
        %v3309 = vadd.f32 %v3094, %v3293
        %v3310 = vadd.f32 %v3095, %v3294
        %v3311 = vadd.f32 %v3096, %v3295
        %v3312 = vadd.f32 %v3097, %v3296
        %v3313 = vpack.c.bf16 %v2287, %v2286
        %v3314 = vpack.c.bf16 %v2289, %v2288
        %v3315 = vpack.c.bf16 %v2291, %v2290
        %v3316 = vpack.c.bf16 %v2293, %v2292
        %3317 = vmatprep.subr.bf16.mxu0 0
        %3318 = vmatpush1.bf16.msra.mxu0 %v3313
        %3319 = vmatprep.subr.bf16.mxu0 0
        %3320 = vmatpush1.bf16.msra.mxu0 %v3314
        %3321 = vmatprep.subr.bf16.mxu0 0
        %3322 = vmatpush1.bf16.msra.mxu0 %v3315
        %3323 = vmatprep.subr.bf16.mxu0 0
        %3324 = vmatpush1.bf16.msra.mxu0 %v3316
        %3325 = vmatprep.subr.bf16.mxu0 0
        %3326 = vmatpush1.bf16.msra.mxu0 0
        %3327 = vmatprep.subr.bf16.mxu0 0
        %3328 = vmatpush1.bf16.msra.mxu0 0
        %3329 = vmatprep.subr.bf16.mxu0 0
        %3330 = vmatpush1.bf16.msra.mxu0 0
        %3331 = vmatprep.subr.bf16.mxu0 0
        %3332 = vmatpush1.bf16.msra.mxu0 0
        %3333 = vmatprep.subr.bf16.mxu0 0
        %3334 = vmatpush1.bf16.msra.mxu0 0
        %3335 = vmatprep.subr.bf16.mxu0 0
        %3336 = vmatpush1.bf16.msra.mxu0 0
        %3337 = vmatprep.subr.bf16.mxu0 0
        %3338 = vmatpush1.bf16.msra.mxu0 0
        %3339 = vmatprep.subr.bf16.mxu0 0
        %3340 = vmatpush1.bf16.msra.mxu0 0
        %3341 = vmatprep.subr.bf16.mxu0 0
        %3342 = vmatpush1.bf16.msra.mxu0 0
        %3343 = vmatprep.subr.bf16.mxu0 0
        %3344 = vmatpush1.bf16.msra.mxu0 0
        %3345 = vmatprep.subr.bf16.mxu0 0
        %3346 = vmatpush1.bf16.msra.mxu0 0
        %3347 = vmatprep.subr.bf16.mxu0 0
        %3348 = vmatpush1.bf16.msra.mxu0 0
        %3349 = vmatprep.mubr.bf16.mxu0 0
        %3350 = vmatmul.mubr.bf16.gmra.mrb[0].mxu0 %v1664
        %v3351 = vpop.f32.mrb[0].mxu0
        %v3352 = vadd.f32 %v1626, %v3351
        %v3353 = vpop.f32.mrb[0].mxu0
        %v3354 = vpop.f32.mrb[0].mxu0
        %v3355 = vadd.f32 %v1631, %v3354
        %v3356 = vpop.f32.mrb[0].mxu0
        %3357 = vmatprep.mubr.bf16.mxu0 0
        %3358 = vmatmul.mubr.bf16.gmra.mrb[0].mxu0 %v1667
        %v3359 = vpop.f32.mrb[0].mxu0
        %v3360 = vadd.f32 %v1636, %v3359
        %v3361 = vpop.f32.mrb[0].mxu0
        %v3362 = vpop.f32.mrb[0].mxu0
        %v3363 = vadd.f32 %v1641, %v3362
        %v3364 = vpop.f32.mrb[0].mxu0
        %3365 = vmatprep.mubr.bf16.mxu0 0
        %3366 = vmatmul.mubr.bf16.gmra.mrb[0].mxu0 %v1670
        %v3367 = vpop.f32.mrb[0].mxu0
        %v3368 = vadd.f32 %v1646, %v3367
        %v3369 = vpop.f32.mrb[0].mxu0
        %v3370 = vpop.f32.mrb[0].mxu0
        %v3371 = vadd.f32 %v1651, %v3370
        %v3372 = vpop.f32.mrb[0].mxu0
        %3373 = vmatprep.mubr.bf16.mxu0 0
        %3374 = vmatmul.mubr.bf16.gmra.mrb[0].mxu0 %v1673
        %v3375 = vpop.f32.mrb[0].mxu0
        %v3376 = vadd.f32 %v1656, %v3375
        %v3377 = vpop.f32.mrb[0].mxu0
        %v3378 = vpop.f32.mrb[0].mxu0
        %v3379 = vadd.f32 %v1661, %v3378
        %v3380 = vpop.f32.mrb[0].mxu0
        %3381 = vdwg.mxu0
        %v3382 = vpack.c.bf16 %v3355, %v3352
        %v3383 = vpack.c.bf16 %v3363, %v3360
        %v3384 = vpack.c.bf16 %v3371, %v3368
        %v3385 = vpack.c.bf16 %v3379, %v3376
        %v3386 = vpack.c.bf16 %v3298, %v3297
        %v3387 = vpack.c.bf16 %v3300, %v3299
        %v3388 = vpack.c.bf16 %v3302, %v3301
        %v3389 = vpack.c.bf16 %v3304, %v3303
        %v3390 = vpack.c.bf16 %v3306, %v3305
        %v3391 = vpack.c.bf16 %v3308, %v3307
        %v3392 = vpack.c.bf16 %v3310, %v3309
        %v3393 = vpack.c.bf16 %v3312, %v3311
        %3394 = vmatprep.subr.bf16.mxu0 0
        %3395 = vmatpush1.bf16.msra.mxu0 %v3386
        %3396 = vmatprep.subr.bf16.mxu0 0
        %3397 = vmatpush1.bf16.msra.mxu0 %v3387
        %3398 = vmatprep.subr.bf16.mxu0 0
        %3399 = vmatpush1.bf16.msra.mxu0 %v3388
        %3400 = vmatprep.subr.bf16.mxu0 0
        %3401 = vmatpush1.bf16.msra.mxu0 %v3389
        %3402 = vmatprep.subr.bf16.mxu0 0
        %3403 = vmatpush1.bf16.msra.mxu0 %v3390
        %3404 = vmatprep.subr.bf16.mxu0 0
        %3405 = vmatpush1.bf16.msra.mxu0 %v3391
        %3406 = vmatprep.subr.bf16.mxu0 0
        %3407 = vmatpush1.bf16.msra.mxu0 %v3392
        %3408 = vmatprep.subr.bf16.mxu0 0
        %3409 = vmatpush1.bf16.msra.mxu0 %v3393
        %3410 = vmatprep.subr.bf16.mxu0 0
        %3411 = vmatpush1.bf16.msra.mxu0 0
        %3412 = vmatprep.subr.bf16.mxu0 0
        %3413 = vmatpush1.bf16.msra.mxu0 0
        %3414 = vmatprep.subr.bf16.mxu0 0
        %3415 = vmatpush1.bf16.msra.mxu0 0
        %3416 = vmatprep.subr.bf16.mxu0 0
        %3417 = vmatpush1.bf16.msra.mxu0 0
        %3418 = vmatprep.subr.bf16.mxu0 0
        %3419 = vmatpush1.bf16.msra.mxu0 0
        %3420 = vmatprep.subr.bf16.mxu0 0
        %3421 = vmatpush1.bf16.msra.mxu0 0
        %3422 = vmatprep.subr.bf16.mxu0 0
        %3423 = vmatpush1.bf16.msra.mxu0 0
        %3424 = vmatprep.subr.bf16.mxu0 0
        %3425 = vmatpush1.bf16.msra.mxu0 0
        %3426 = vmatprep.mubr.bf16.mxu0 0
        %3427 = vmatmul.mubr.bf16.gmra.mrb[0].mxu0 %v3382
        %v3428 = vpop.f32.mrb[0].mxu0
        %v3429 = vadd.f32 0.0, %v3428
        %v3430 = vpop.f32.mrb[0].mxu0
        %v3431 = vpop.f32.mrb[0].mxu0
        %v3432 = vadd.f32 0.0, %v3431
        %v3433 = vpop.f32.mrb[0].mxu0
        %3434 = vmatprep.mubr.bf16.mxu0 0
        %3435 = vmatmul.mubr.bf16.gmra.mrb[0].mxu0 %v3383
        %v3436 = vpop.f32.mrb[0].mxu0
        %v3437 = vadd.f32 0.0, %v3436
        %v3438 = vpop.f32.mrb[0].mxu0
        %v3439 = vpop.f32.mrb[0].mxu0
        %v3440 = vadd.f32 0.0, %v3439
        %v3441 = vpop.f32.mrb[0].mxu0
        %3442 = vmatprep.mubr.bf16.mxu0 0
        %3443 = vmatmul.mubr.bf16.gmra.mrb[0].mxu0 %v3384
        %v3444 = vpop.f32.mrb[0].mxu0
        %v3445 = vadd.f32 0.0, %v3444
        %v3446 = vpop.f32.mrb[0].mxu0
        %v3447 = vpop.f32.mrb[0].mxu0
        %v3448 = vadd.f32 0.0, %v3447
        %v3449 = vpop.f32.mrb[0].mxu0
        %3450 = vmatprep.mubr.bf16.mxu0 0
        %3451 = vmatmul.mubr.bf16.gmra.mrb[0].mxu0 %v3385
        %v3452 = vpop.f32.mrb[0].mxu0
        %v3453 = vadd.f32 0.0, %v3452
        %v3454 = vpop.f32.mrb[0].mxu0
        %v3455 = vpop.f32.mrb[0].mxu0
        %v3456 = vadd.f32 0.0, %v3455
        %v3457 = vpop.f32.mrb[0].mxu0
        %3458 = vdwg.mxu0
        %v3459 = vsub.f32 %v2286, %v3429
        %v3460 = vsub.f32 %v2287, %v3432
        %v3461 = vsub.f32 %v2288, %v3437
        %v3462 = vsub.f32 %v2289, %v3440
        %v3463 = vsub.f32 %v2290, %v3445
        %v3464 = vsub.f32 %v2291, %v3448
        %v3465 = vsub.f32 %v2292, %v3453
        %v3466 = vsub.f32 %v2293, %v3456
        %v3467 = vpack.c.bf16 %v3460, %v3459
        %v3468 = vpack.c.bf16 %v3462, %v3461
        %v3469 = vpack.c.bf16 %v3464, %v3463
        %v3470 = vpack.c.bf16 %v3466, %v3465
        %3471 = vmatprep.subr.bf16.mxu0 0
        %3472 = vmatpush1.bf16.msra.mxu0 %v3467
        %3473 = vmatprep.subr.bf16.mxu0 0
        %3474 = vmatpush1.bf16.msra.mxu0 %v3468
        %3475 = vmatprep.subr.bf16.mxu0 0
        %3476 = vmatpush1.bf16.msra.mxu0 %v3469
        %3477 = vmatprep.subr.bf16.mxu0 0
        %3478 = vmatpush1.bf16.msra.mxu0 %v3470
        %3479 = vmatprep.subr.bf16.mxu0 0
        %3480 = vmatpush1.bf16.msra.mxu0 0
        %3481 = vmatprep.subr.bf16.mxu0 0
        %3482 = vmatpush1.bf16.msra.mxu0 0
        %3483 = vmatprep.subr.bf16.mxu0 0
        %3484 = vmatpush1.bf16.msra.mxu0 0
        %3485 = vmatprep.subr.bf16.mxu0 0
        %3486 = vmatpush1.bf16.msra.mxu0 0
        %3487 = vmatprep.subr.bf16.mxu0 0
        %3488 = vmatpush1.bf16.msra.mxu0 0
        %3489 = vmatprep.subr.bf16.mxu0 0
        %3490 = vmatpush1.bf16.msra.mxu0 0
        %3491 = vmatprep.subr.bf16.mxu0 0
        %3492 = vmatpush1.bf16.msra.mxu0 0
        %3493 = vmatprep.subr.bf16.mxu0 0
        %3494 = vmatpush1.bf16.msra.mxu0 0
        %3495 = vmatprep.subr.bf16.mxu0 0
        %3496 = vmatpush1.bf16.msra.mxu0 0
        %3497 = vmatprep.subr.bf16.mxu0 0
        %3498 = vmatpush1.bf16.msra.mxu0 0
        %3499 = vmatprep.subr.bf16.mxu0 0
        %3500 = vmatpush1.bf16.msra.mxu0 0
        %3501 = vmatprep.subr.bf16.mxu0 0
        %3502 = vmatpush1.bf16.msra.mxu0 0
        %3503 = vmatprep.mubr.bf16.mxu0 0
        %3504 = vmatmul.mubr.bf16.gmra.mrb[0].mxu0 %v1870
        %v3505 = vpop.f32.mrb[0].mxu0
        %v3506 = vadd.f32 %v1832, %v3505
        %v3507 = vpop.f32.mrb[0].mxu0
        %v3508 = vpop.f32.mrb[0].mxu0
        %v3509 = vadd.f32 %v1837, %v3508
        %v3510 = vpop.f32.mrb[0].mxu0
        %3511 = vmatprep.mubr.bf16.mxu0 0
        %3512 = vmatmul.mubr.bf16.gmra.mrb[0].mxu0 %v1873
        %v3513 = vpop.f32.mrb[0].mxu0
        %v3514 = vadd.f32 %v1842, %v3513
        %v3515 = vpop.f32.mrb[0].mxu0
        %v3516 = vpop.f32.mrb[0].mxu0
        %v3517 = vadd.f32 %v1847, %v3516
        %v3518 = vpop.f32.mrb[0].mxu0
        %3519 = vmatprep.mubr.bf16.mxu0 0
        %3520 = vmatmul.mubr.bf16.gmra.mrb[0].mxu0 %v1876
        %v3521 = vpop.f32.mrb[0].mxu0
        %v3522 = vadd.f32 %v1852, %v3521
        %v3523 = vpop.f32.mrb[0].mxu0
        %v3524 = vpop.f32.mrb[0].mxu0
        %v3525 = vadd.f32 %v1857, %v3524
        %v3526 = vpop.f32.mrb[0].mxu0
        %3527 = vmatprep.mubr.bf16.mxu0 0
        %3528 = vmatmul.mubr.bf16.gmra.mrb[0].mxu0 %v1879
        %v3529 = vpop.f32.mrb[0].mxu0
        %v3530 = vadd.f32 %v1862, %v3529
        %v3531 = vpop.f32.mrb[0].mxu0
        %v3532 = vpop.f32.mrb[0].mxu0
        %v3533 = vadd.f32 %v1867, %v3532
        %v3534 = vpop.f32.mrb[0].mxu0
        %3535 = vdwg.mxu0
        %3536 = vadd.xlane.f32.xlu0 %v3506
        %v3537 = vpop.xlane.xlu0 %3536
        %3538 = vadd.xlane.f32.xlu0 %v3509
        %v3539 = vpop.xlane.xlu0 %3538
        %3540 = vadd.xlane.f32.xlu0 %v3514
        %v3541 = vpop.xlane.xlu0 %3540
        %3542 = vadd.xlane.f32.xlu0 %v3517
        %v3543 = vpop.xlane.xlu0 %3542
        %3544 = vadd.xlane.f32.xlu0 %v3522
        %v3545 = vpop.xlane.xlu0 %3544
        %3546 = vadd.xlane.f32.xlu0 %v3525
        %v3547 = vpop.xlane.xlu0 %3546
        %3548 = vadd.xlane.f32.xlu0 %v3530
        %v3549 = vpop.xlane.xlu0 %3548
        %3550 = vadd.xlane.f32.xlu0 %v3533
        %v3551 = vpop.xlane.xlu0 %3550
        %v3552 = vrot.slane %v3537, 4
        %v3553 = vadd.f32 %v3537, %v3552
        %v3554 = vrot.slane %v3553, 2
        %v3555 = vadd.f32 %v3553, %v3554
        %v3556 = vrot.slane %v3555, 1
        %v3557 = vadd.f32 %v3555, %v3556
        %v3558 = vrot.slane %v3539, 4
        %v3559 = vadd.f32 %v3539, %v3558
        %v3560 = vrot.slane %v3559, 2
        %v3561 = vadd.f32 %v3559, %v3560
        %v3562 = vrot.slane %v3561, 1
        %v3563 = vadd.f32 %v3561, %v3562
        %v3564 = vrot.slane %v3541, 4
        %v3565 = vadd.f32 %v3541, %v3564
        %v3566 = vrot.slane %v3565, 2
        %v3567 = vadd.f32 %v3565, %v3566
        %v3568 = vrot.slane %v3567, 1
        %v3569 = vadd.f32 %v3567, %v3568
        %v3570 = vrot.slane %v3543, 4
        %v3571 = vadd.f32 %v3543, %v3570
        %v3572 = vrot.slane %v3571, 2
        %v3573 = vadd.f32 %v3571, %v3572
        %v3574 = vrot.slane %v3573, 1
        %v3575 = vadd.f32 %v3573, %v3574
        %v3576 = vrot.slane %v3545, 4
        %v3577 = vadd.f32 %v3545, %v3576
        %v3578 = vrot.slane %v3577, 2
        %v3579 = vadd.f32 %v3577, %v3578
        %v3580 = vrot.slane %v3579, 1
        %v3581 = vadd.f32 %v3579, %v3580
        %v3582 = vrot.slane %v3547, 4
        %v3583 = vadd.f32 %v3547, %v3582
        %v3584 = vrot.slane %v3583, 2
        %v3585 = vadd.f32 %v3583, %v3584
        %v3586 = vrot.slane %v3585, 1
        %v3587 = vadd.f32 %v3585, %v3586
        %v3588 = vrot.slane %v3549, 4
        %v3589 = vadd.f32 %v3549, %v3588
        %v3590 = vrot.slane %v3589, 2
        %v3591 = vadd.f32 %v3589, %v3590
        %v3592 = vrot.slane %v3591, 1
        %v3593 = vadd.f32 %v3591, %v3592
        %v3594 = vrot.slane %v3551, 4
        %v3595 = vadd.f32 %v3551, %v3594
        %v3596 = vrot.slane %v3595, 2
        %v3597 = vadd.f32 %v3595, %v3596
        %v3598 = vrot.slane %v3597, 1
        %v3599 = vadd.f32 %v3597, %v3598
        %v3600 = vmul.f32 %v3557, 0.0009765625
        %v3601 = vmul.f32 %v3563, 0.0009765625
        %v3602 = vmul.f32 %v3569, 0.0009765625
        %v3603 = vmul.f32 %v3575, 0.0009765625
        %v3604 = vmul.f32 %v3581, 0.0009765625
        %v3605 = vmul.f32 %v3587, 0.0009765625
        %v3606 = vmul.f32 %v3593, 0.0009765625
        %v3607 = vmul.f32 %v3599, 0.0009765625
        %v3608 = vsub.f32 %v3506, %v3600
        %v3609 = vsub.f32 %v3509, %v3601
        %v3610 = vsub.f32 %v3514, %v3602
        %v3611 = vsub.f32 %v3517, %v3603
        %v3612 = vsub.f32 %v3522, %v3604
        %v3613 = vsub.f32 %v3525, %v3605
        %v3614 = vsub.f32 %v3530, %v3606
        %v3615 = vsub.f32 %v3533, %v3607
        %v3616 = vmul.f32 %v3608, %v3608
        %v3617 = vmul.f32 %v3609, %v3609
        %v3618 = vmul.f32 %v3610, %v3610
        %v3619 = vmul.f32 %v3611, %v3611
        %v3620 = vmul.f32 %v3612, %v3612
        %v3621 = vmul.f32 %v3613, %v3613
        %v3622 = vmul.f32 %v3614, %v3614
        %v3623 = vmul.f32 %v3615, %v3615
        %3624 = vadd.xlane.f32.xlu0 %v3616
        %v3625 = vpop.xlane.xlu0 %3624
        %3626 = vadd.xlane.f32.xlu0 %v3617
        %v3627 = vpop.xlane.xlu0 %3626
        %3628 = vadd.xlane.f32.xlu0 %v3618
        %v3629 = vpop.xlane.xlu0 %3628
        %3630 = vadd.xlane.f32.xlu0 %v3619
        %v3631 = vpop.xlane.xlu0 %3630
        %3632 = vadd.xlane.f32.xlu0 %v3620
        %v3633 = vpop.xlane.xlu0 %3632
        %3634 = vadd.xlane.f32.xlu0 %v3621
        %v3635 = vpop.xlane.xlu0 %3634
        %3636 = vadd.xlane.f32.xlu0 %v3622
        %v3637 = vpop.xlane.xlu0 %3636
        %3638 = vadd.xlane.f32.xlu0 %v3623
        %v3639 = vpop.xlane.xlu0 %3638
        %v3640 = vrot.slane %v3625, 4
        %v3641 = vadd.f32 %v3625, %v3640
        %v3642 = vrot.slane %v3641, 2
        %v3643 = vadd.f32 %v3641, %v3642
        %v3644 = vrot.slane %v3643, 1
        %v3645 = vadd.f32 %v3643, %v3644
        %v3646 = vrot.slane %v3627, 4
        %v3647 = vadd.f32 %v3627, %v3646
        %v3648 = vrot.slane %v3647, 2
        %v3649 = vadd.f32 %v3647, %v3648
        %v3650 = vrot.slane %v3649, 1
        %v3651 = vadd.f32 %v3649, %v3650
        %v3652 = vrot.slane %v3629, 4
        %v3653 = vadd.f32 %v3629, %v3652
        %v3654 = vrot.slane %v3653, 2
        %v3655 = vadd.f32 %v3653, %v3654
        %v3656 = vrot.slane %v3655, 1
        %v3657 = vadd.f32 %v3655, %v3656
        %v3658 = vrot.slane %v3631, 4
        %v3659 = vadd.f32 %v3631, %v3658
        %v3660 = vrot.slane %v3659, 2
        %v3661 = vadd.f32 %v3659, %v3660
        %v3662 = vrot.slane %v3661, 1
        %v3663 = vadd.f32 %v3661, %v3662
        %v3664 = vrot.slane %v3633, 4
        %v3665 = vadd.f32 %v3633, %v3664
        %v3666 = vrot.slane %v3665, 2
        %v3667 = vadd.f32 %v3665, %v3666
        %v3668 = vrot.slane %v3667, 1
        %v3669 = vadd.f32 %v3667, %v3668
        %v3670 = vrot.slane %v3635, 4
        %v3671 = vadd.f32 %v3635, %v3670
        %v3672 = vrot.slane %v3671, 2
        %v3673 = vadd.f32 %v3671, %v3672
        %v3674 = vrot.slane %v3673, 1
        %v3675 = vadd.f32 %v3673, %v3674
        %v3676 = vrot.slane %v3637, 4
        %v3677 = vadd.f32 %v3637, %v3676
        %v3678 = vrot.slane %v3677, 2
        %v3679 = vadd.f32 %v3677, %v3678
        %v3680 = vrot.slane %v3679, 1
        %v3681 = vadd.f32 %v3679, %v3680
        %v3682 = vrot.slane %v3639, 4
        %v3683 = vadd.f32 %v3639, %v3682
        %v3684 = vrot.slane %v3683, 2
        %v3685 = vadd.f32 %v3683, %v3684
        %v3686 = vrot.slane %v3685, 1
        %v3687 = vadd.f32 %v3685, %v3686
        %v3688 = vmul.f32 %v3645, 0.0009765625
        %v3689 = vmul.f32 %v3651, 0.0009765625
        %v3690 = vmul.f32 %v3657, 0.0009765625
        %v3691 = vmul.f32 %v3663, 0.0009765625
        %v3692 = vmul.f32 %v3669, 0.0009765625
        %v3693 = vmul.f32 %v3675, 0.0009765625
        %v3694 = vmul.f32 %v3681, 0.0009765625
        %v3695 = vmul.f32 %v3687, 0.0009765625
        %v3696 = vadd.f32 %v3688, 1e-05
        %v3697 = vadd.f32 %v3689, 1e-05
        %v3698 = vadd.f32 %v3690, 1e-05
        %v3699 = vadd.f32 %v3691, 1e-05
        %v3700 = vadd.f32 %v3692, 1e-05
        %v3701 = vadd.f32 %v3693, 1e-05
        %v3702 = vadd.f32 %v3694, 1e-05
        %v3703 = vadd.f32 %v3695, 1e-05
        %v3704 = vrsqrt.pop %v3696
        %v3705 = vrsqrt.pop %v3697
        %v3706 = vrsqrt.pop %v3698
        %v3707 = vrsqrt.pop %v3699
        %v3708 = vrsqrt.pop %v3700
        %v3709 = vrsqrt.pop %v3701
        %v3710 = vrsqrt.pop %v3702
        %v3711 = vrsqrt.pop %v3703
        %v3712 = vmul.f32 %v3608, %v3704
        %v3713 = vmul.f32 %v3609, %v3705
        %v3714 = vmul.f32 %v3610, %v3706
        %v3715 = vmul.f32 %v3611, %v3707
        %v3716 = vmul.f32 %v3612, %v3708
        %v3717 = vmul.f32 %v3613, %v3709
        %v3718 = vmul.f32 %v3614, %v3710
        %v3719 = vmul.f32 %v3615, %v3711
        %v3720 = vmul.f32 %v3712, %v2133
        %v3721 = vmul.f32 %v3713, %v2138
        %v3722 = vmul.f32 %v3714, %v2143
        %v3723 = vmul.f32 %v3715, %v2148
        %v3724 = vmul.f32 %v3716, %v2153
        %v3725 = vmul.f32 %v3717, %v2158
        %v3726 = vmul.f32 %v3718, %v2163
        %v3727 = vmul.f32 %v3719, %v2168
        %v3728 = vadd.f32 %v3720, %v2181
        %v3729 = vadd.f32 %v3721, %v2186
        %v3730 = vadd.f32 %v3722, %v2191
        %v3731 = vadd.f32 %v3723, %v2196
        %v3732 = vadd.f32 %v3724, %v2201
        %v3733 = vadd.f32 %v3725, %v2206
        %v3734 = vadd.f32 %v3726, %v2211
        %v3735 = vadd.f32 %v3727, %v2216
        %vm3736 = vcmp.gt.f32.partialorder %v3728, 0.0
        %vm3737 = vcmp.gt.f32.partialorder %v3729, 0.0
        %vm3738 = vcmp.gt.f32.partialorder %v3730, 0.0
        %vm3739 = vcmp.gt.f32.partialorder %v3731, 0.0
        %vm3740 = vcmp.gt.f32.partialorder %v3732, 0.0
        %vm3741 = vcmp.gt.f32.partialorder %v3733, 0.0
        %vm3742 = vcmp.gt.f32.partialorder %v3734, 0.0
        %vm3743 = vcmp.gt.f32.partialorder %v3735, 0.0
        %v3744 = vmul.f32 %v2234, %v3728
        %v3745 = vmul.f32 %v2234, %v3729
        %v3746 = vmul.f32 %v2234, %v3730
        %v3747 = vmul.f32 %v2234, %v3731
        %v3748 = vmul.f32 %v2234, %v3732
        %v3749 = vmul.f32 %v2234, %v3733
        %v3750 = vmul.f32 %v2234, %v3734
        %v3751 = vmul.f32 %v2234, %v3735
        %v3752 = vsel %vm3736, %v3728, %v3744
        %v3753 = vsel %vm3737, %v3729, %v3745
        %v3754 = vsel %vm3738, %v3730, %v3746
        %v3755 = vsel %vm3739, %v3731, %v3747
        %v3756 = vsel %vm3740, %v3732, %v3748
        %v3757 = vsel %vm3741, %v3733, %v3749
        %v3758 = vsel %vm3742, %v3734, %v3750
        %v3759 = vsel %vm3743, %v3735, %v3751
        %v3760 = vmul.f32 %v2251, %v3752
        %v3761 = vmul.f32 %v2251, %v3753
        %v3762 = vmul.f32 %v2251, %v3754
        %v3763 = vmul.f32 %v2251, %v3755
        %v3764 = vmul.f32 %v2251, %v3756
        %v3765 = vmul.f32 %v2251, %v3757
        %v3766 = vmul.f32 %v2251, %v3758
        %v3767 = vmul.f32 %v2251, %v3759
        %v3768 = vadd.f32 %v3760, %v2286
        %v3769 = vadd.f32 %v3761, %v2287
        %v3770 = vadd.f32 %v3762, %v2288
        %v3771 = vadd.f32 %v3763, %v2289
        %v3772 = vadd.f32 %v3764, %v2290
        %v3773 = vadd.f32 %v3765, %v2291
        %v3774 = vadd.f32 %v3766, %v2292
        %v3775 = vadd.f32 %v3767, %v2293
        %s3776 = scalar_lea.vmem %s490, 64 [#allocation4]
        %3777 = vst [vmem:[%s3776] sm:$0xff] %v3768
        %3778 = vst [vmem:[%s3776 + $0x8] sm:$0xff] %v3769
        %3779 = vst [vmem:[%s3776 + $0x10] sm:$0xff] %v3770
        %3780 = vst [vmem:[%s3776 + $0x18] sm:$0xff] %v3771
        %3781 = vst [vmem:[%s3776 + $0x20] sm:$0xff] %v3772
        %3782 = vst [vmem:[%s3776 + $0x28] sm:$0xff] %v3773
        %3783 = vst [vmem:[%s3776 + $0x30] sm:$0xff] %v3774
        %3784 = vst [vmem:[%s3776 + $0x38] sm:$0xff] %v3775
        %s3785 = sand.u32 %s330, 1
        %s3786 = scalar_lea.sflag [#allocation5], %s3785
        %s3787 = sand.u32 %s330, 1
        %s3788 = smul.addr %s3787, 128
        %s3789 = scalar_lea.vmem [#allocation4], %s3788
        // Predicated region
        $region73: #{tpu_custom_call.1} parent=71 // pred_check
          %p3790 = pneg %p340
        $region74: #{tpu_custom_call.1} parent=71 // pred_check_branch
          %3792 = sbr.rel (%p3790) target = $region76
        $region75: #{tpu_custom_call.1} parent=71 // pred_region
          %s3793 = smul.u32 2, %s29
          %s3795 = ssub.s32 2048, 2048
          %3796 = vsyncadd %s3786, %s3795
          %s3797 = smul.addr %s3793, 8
          %s3798 = smul.addr %s3797, 128
          %s3799 = scalar_lea.hbm %s13, %s3798
          %s3800 = sshll.u32 %s3789, 4
          %s3801 = int_to_ptr.vmem [resolvable:$true] %s3800
          %3806 = dma.vmem_to_hbm [thread:$0]  %s3801, 2048, %s3799, %s3786, 128, 128, 8
        $region76: #{tpu_custom_call.1} parent=71 // pred_fallthru
          _
      $region72: #{tpu_custom_call.1} parent=5 // pred_fallthru
        _
      %p3807 = scmp.le.s32.totalorder 2, %s24
      // Predicated region
      $region77: #{tpu_custom_call.1} parent=5 // pred_check
        %p3808 = pneg %p3807
      $region78: #{tpu_custom_call.1} parent=5 // pred_check_branch
        %3810 = sbr.rel (%p3808) target = $region80
      $region79: #{tpu_custom_call.1} parent=5 // pred_region
        %s3811 = ssub.s32 %s24, 2
        // Predicated region
        $region81: #{tpu_custom_call.1} parent=79 // pred_check
          %p3812 = pneg %p346
        $region82: #{tpu_custom_call.1} parent=79 // pred_check_branch
          %3814 = sbr.rel (%p3812) target = $region84
        $region83: #{tpu_custom_call.1} parent=79 // pred_region
          %s3815 = sand.u32 %s331, 1
          %s3816 = scalar_lea.sflag [#allocation5], %s3815
          %s3817 = sand.u32 %s331, 1
          %s3818 = smul.addr %s3817, 128
          %s3819 = scalar_lea.vmem [#allocation4], %s3818
          %3820 = dma.done %s3816, 2048
        $region84: #{tpu_custom_call.1} parent=79 // pred_fallthru
          _
      $region80: #{tpu_custom_call.1} parent=5 // pred_fallthru
        _
    $region6: #{tpu_custom_call.1} parent=1 // loop_footer
      %s28 = sadd.s32 1, %s24
    $region7: #{tpu_custom_call.1} parent=1 // loop_footer_branch
      %23 = sbr.rel target = $region3
    $region8: #{tpu_custom_call.1} parent=1 // loop_exit
      _
    %3821 = vsyncpa [#allocation5], 1
    %s3822 = scalar_lea.sflag [#allocation5], 1
    %3823 = vsyncpa %s3822, 1

</llo_original>
